<compile_context>
chip_gen: v7x
topology: tpu7x:2x2x1
jax: 0.10.0
libtpu: 0.0.40
codegen_flags: <defaults>
</compile_context>

<pallas_src>
import functools

import jax
import jax.numpy as jnp
import numpy as np
from jax import lax
from jax.experimental import pallas as pl
from jax.experimental.pallas import tpu as pltpu


def _bn_relu_gconv_kernel(x_ref, w_ref, g_ref, b_ref, o_ref, apad_ref,
                          *, H, W, KH, KW, pad, eps):
    # x_ref   : (S, Cp, M)        f32  -- S channel slabs, spatial (M=H*W) on lanes
    # w_ref   : (S, KH*KW, Cp, Cp) bf16 -- block-diagonal (Cout, Cin) per-tap weights
    # g_ref   : (S, Cp, 1)        f32  -- gamma
    # b_ref   : (S, Cp, 1)        f32  -- beta
    # o_ref   : (S, Cp, M)        f32
    # apad_ref: (3, Cp, pad+M+pad) bf16 -- {center, dx=-1 masked, dx=+1 masked}
    S, Cp, M = x_ref.shape

    # Zero the scratch once per grid step (provides the zero lane-halos; the
    # centre region is fully rewritten per slab).  Tiny (~175 KB of vst).
    apad_ref[...] = jnp.zeros(apad_ref.shape, apad_ref.dtype)

    # Column-boundary lane masks, hoisted out of the slab / tap loops.
    # `a` is laid out by flat input index m = y*W + x, so col == x.
    col = lax.broadcasted_iota(jnp.int32, (1, M), 1) % W
    keep_for_dx_m1 = col != (W - 1)   # dx = -1 taps must never read column W-1
    keep_for_dx_p1 = col != 0         # dx = +1 taps must never read column 0

    inv_m = jnp.float32(1.0 / M)

    def slab_body(s, carry):
        x = x_ref[s]                                        # (Cp, M) f32

        # ---- BatchNorm training-mode batch stats (full reduction set, N=1) ----
        mean = jnp.sum(x, axis=1, keepdims=True) * inv_m    # (Cp, 1)
        ex2 = jnp.sum(x * x, axis=1, keepdims=True) * inv_m
        var = jnp.maximum(ex2 - mean * mean, 0.0)           # biased variance
        scale = g_ref[s] * lax.rsqrt(var + eps)
        bias = b_ref[s] - mean * scale

        # ---- BN + ReLU, single cast to bf16 for the MXU ----
        a = jnp.maximum(x * scale + bias, 0.0).astype(apad_ref.dtype)
        zero = jnp.zeros_like(a)
        apad_ref[0, :, pad:pad + M] = a
        apad_ref[1, :, pad:pad + M] = jnp.where(keep_for_dx_m1, a, zero)
        apad_ref[2, :, pad:pad + M] = jnp.where(keep_for_dx_p1, a, zero)

        # ---- 3x3 grouped conv: 9 shifted lane-slices x block-diag matmuls ----
        acc = jnp.zeros((Cp, M), jnp.float32)
        for kh in range(KH):
            for kw in range(KW):
                dy, dx = kh - (KH // 2), kw - (KW // 2)
                off = dy * W + dx
                v = 0 if dx == 0 else (1 if dx < 0 else 2)
                patch = apad_ref[v, :, pad + off:pad + off + M]   # (Cp, M) bf16
                acc = acc + jnp.dot(w_ref[s, kh * KW + kw], patch,
                                    preferred_element_type=jnp.float32)
        o_ref[s] = acc
        return carry

    lax.fori_loop(0, S, slab_body, 0)


def pack_blockdiag_weights(w_oihw, *, groups, lanes=128):
    """One-time, host-side (numpy) packing of the grouped-conv weights into
    per-slab, per-tap block-diagonal (Cout, Cin) = (lanes, lanes) bf16 matrices.
    Runs at module-setup time, NOT in the per-call hot path."""
    w = np.asarray(w_oihw, dtype=np.float32)          # (C, Cg, KH, KW)
    C, Cg, KH, KW = w.shape
    assert lanes % Cg == 0
    gps = lanes // Cg                                  # groups packed per slab
    assert groups % gps == 0
    n_slab = groups // gps
    Cp = gps * Cg
    packed = np.zeros((n_slab, KH * KW, Cp, Cp), np.float32)
    for b in range(n_slab):
        for p in range(gps):
            g = b * gps + p
            blk = w[g * Cg:(g + 1) * Cg]               # (co_l, ci_l, kh, kw)
            for kh in range(KH):
                for kw in range(KW):
                    packed[b, kh * KW + kw,
                           p * Cg:(p + 1) * Cg,
                           p * Cg:(p + 1) * Cg] = blk[:, :, kh, kw]
    return jnp.asarray(packed, dtype=jnp.bfloat16)


@functools.partial(jax.jit, static_argnames=("eps", "grid_steps"))
def bn_relu_groupconv(x_nchw, gamma, beta, w_packed, *, eps=1e-5, grid_steps=2):
    """BatchNorm2d (training-mode stats) -> ReLU -> grouped 3x3 conv (pad=1)."""
    N, C, H, W = x_nchw.shape
    assert N == 1, "kernel exploits N=1 (free NCHW reshape; full BN stats per slab)"
    n_slab, KK, Cp, Cp2 = w_packed.shape
    assert Cp == Cp2 and Cp % 128 == 0
    assert C == n_slab * Cp
    KH = KW = int(round(KK ** 0.5))
    assert KH * KW == KK
    M = H * W
    assert n_slab % grid_steps == 0
    S = n_slab // grid_steps            # channel slabs per grid step
    PAD = 16
    assert W + 1 <= PAD

    # Free reshapes (no transpose, no HBM relayout pass).
    x_slab = x_nchw.reshape(n_slab, Cp, M).astype(jnp.float32)
    g_slab = gamma.reshape(n_slab, Cp, 1).astype(jnp.float32)
    b_slab = beta.reshape(n_slab, Cp, 1).astype(jnp.float32)

    kernel = functools.partial(_bn_relu_gconv_kernel,
                               H=H, W=W, KH=KH, KW=KW, pad=PAD, eps=eps)

    out = pl.pallas_call(
        kernel,
        out_shape=jax.ShapeDtypeStruct((n_slab, Cp, M), jnp.float32),
        grid_spec=pltpu.PrefetchScalarGridSpec(
            num_scalar_prefetch=0,
            grid=(grid_steps,),
            in_specs=[
                pl.BlockSpec((S, Cp, M), lambda i: (i, 0, 0)),           # x slabs
                pl.BlockSpec((S, KK, Cp, Cp), lambda i: (i, 0, 0, 0)),   # weights
                pl.BlockSpec((S, Cp, 1), lambda i: (i, 0, 0)),           # gamma
                pl.BlockSpec((S, Cp, 1), lambda i: (i, 0, 0)),           # beta
            ],
            out_specs=pl.BlockSpec((S, Cp, M), lambda i: (i, 0, 0)),
            scratch_shapes=[
                pltpu.VMEM((3, Cp, PAD + M + PAD), jnp.bfloat16),
            ],
        ),
        compiler_params=pltpu.CompilerParams(
            dimension_semantics=("parallel",),
        ),
    )(x_slab, w_packed, g_slab, b_slab)

    # Free reshape back to NCHW.
    return out.reshape(N, C, H, W)


def reference_forward(x_nchw, gamma, beta, w_oihw, *, groups=32, eps=1e-5):
    mean = jnp.mean(x_nchw, axis=(0, 2, 3), keepdims=True)
    var = jnp.mean((x_nchw - mean) ** 2, axis=(0, 2, 3), keepdims=True)
    xn = (x_nchw - mean) / jnp.sqrt(var + eps)
    xn = xn * gamma[None, :, None, None] + beta[None, :, None, None]
    xr = jnp.maximum(xn, 0.0)
    return lax.conv_general_dilated(
        xr, w_oihw,
        window_strides=(1, 1),
        padding=((1, 1), (1, 1)),
        dimension_numbers=("NCHW", "OIHW", "NCHW"),
        feature_group_count=groups,
    )


if __name__ == "__main__":
    # shapes implied by the module: x261 = [1, 1024, 14, 14], 32 groups
    N, C, H, W = 1, 1024, 14, 14
    G = 32
    Cg = C // G

    key = jax.random.PRNGKey(0)
    kx, kg, kb, kw = jax.random.split(key, 4)
    x = jax.random.normal(kx, (N, C, H, W), dtype=jnp.float32)
    gamma = 1.0 + 0.1 * jax.random.normal(kg, (C,), dtype=jnp.float32)
    beta = 0.1 * jax.random.normal(kb, (C,), dtype=jnp.float32)
    w = 0.05 * jax.random.normal(kw, (C, Cg, 3, 3), dtype=jnp.float32)  # OIHW

    # One-time weight packing (module-init analogue; NOT in the hot path).
    w_packed = pack_blockdiag_weights(w, groups=G)

    out = jax.block_until_ready(
        bn_relu_groupconv(x, gamma, beta, w_packed, eps=1e-5))
    ref = jax.block_until_ready(
        reference_forward(x, gamma, beta, w, groups=G, eps=1e-5))

    assert out.shape == (N, C, H, W), out.shape
    # bf16 MXU operands (with f32 accumulation) -> tolerance relaxed vs pure f32
    np.testing.assert_allclose(np.asarray(out), np.asarray(ref),
                               rtol=2e-2, atol=2e-2)
    print("KERNEL_OK")
</pallas_src>

<mosaic_0001>
module attributes {stable_mosaic.version = 11 : i64} {
  func.func @_bn_relu_gconv_kernel(%arg0: i32, %arg1: memref<4x128x196xf32, #tpu.memory_space<vmem>>, %arg2: memref<4x9x128x128xbf16, #tpu.memory_space<vmem>>, %arg3: memref<4x128x1xf32, #tpu.memory_space<vmem>>, %arg4: memref<4x128x1xf32, #tpu.memory_space<vmem>>, %arg5: memref<4x128x196xf32, #tpu.memory_space<vmem>>, %arg6: memref<3x128x228xbf16, #tpu.memory_space<vmem>>) attributes {dimension_semantics = [#tpu.dimension_semantics<parallel>], iteration_bounds = array<i64: 2>, scalar_prefetch = 0 : i64, scratch_operands = 1 : i64, tpu.core_type = #tpu.core_type<tc>, window_params = [{transform_indices = @transform_0, window_bounds = array<i64: 4, 128, 196>}, {transform_indices = @transform_1, window_bounds = array<i64: 4, 9, 128, 128>}, {transform_indices = @transform_2, window_bounds = array<i64: 4, 128, 1>}, {transform_indices = @transform_3, window_bounds = array<i64: 4, 128, 1>}, {transform_indices = @transform_4, window_bounds = array<i64: 4, 128, 196>}]} {
    %cst = arith.constant 0.000000e+00 : bf16
    %0 = vector.broadcast %cst : bf16 to vector<3x128x228xbf16>
    %c0 = arith.constant 0 : index
    %c0_0 = arith.constant 0 : index
    %c0_1 = arith.constant 0 : index
    %1 = vector.load %arg6[%c0, %c0_0, %c0_1] : memref<3x128x228xbf16, #tpu.memory_space<vmem>>, vector<3x128x228xbf16>
    tpu.vector_store %arg6[%c0, %c0_0, %c0_1], %0 {strides = array<i32>} : memref<3x128x228xbf16, #tpu.memory_space<vmem>>, vector<3x128x228xbf16>,
    %2 = tpu.iota {dimensions = array<i32: 1>} : vector<1x196xi32>
    %c14_i32 = arith.constant 14 : i32
    %c0_i32 = arith.constant 0 : i32
    %3 = arith.cmpi eq, %c14_i32, %c0_i32 : i32
    %c1_i32 = arith.constant 1 : i32
    %4 = arith.select %3, %c1_i32, %c14_i32 : i32
    %5 = vector.broadcast %4 : i32 to vector<1x196xi32>
    %6 = arith.remsi %2, %5 : vector<1x196xi32>
    %c0_i32_2 = arith.constant 0 : i32
    %7 = vector.broadcast %c0_i32_2 : i32 to vector<1x196xi32>
    %8 = arith.cmpi ne, %6, %7 : vector<1x196xi32>
    %c0_i32_3 = arith.constant 0 : i32
    %9 = vector.broadcast %c0_i32_3 : i32 to vector<1x196xi32>
    %10 = arith.cmpi slt, %6, %9 : vector<1x196xi32>
    %c0_i32_4 = arith.constant 0 : i32
    %11 = arith.cmpi slt, %4, %c0_i32_4 : i32
    %12 = vector.broadcast %11 : i1 to vector<1x196xi1>
    %13 = vector.broadcast %12 : vector<1x196xi1> to vector<1x196xi1>
    %14 = arith.xori %10, %13 : vector<1x196xi1>
    %15 = arith.andi %14, %8 : vector<1x196xi1>
    %16 = vector.broadcast %4 : i32 to vector<1x196xi32>
    %17 = arith.addi %6, %16 : vector<1x196xi32>
    %18 = arith.select %15, %17, %6 : vector<1x196xi1>, vector<1x196xi32>
    %c13_i32 = arith.constant 13 : i32
    %19 = vector.broadcast %c13_i32 : i32 to vector<1x196xi32>
    %20 = arith.cmpi ne, %18, %19 : vector<1x196xi32>
    %c0_i32_5 = arith.constant 0 : i32
    %21 = vector.broadcast %c0_i32_5 : i32 to vector<1x196xi32>
    %22 = arith.cmpi ne, %18, %21 : vector<1x196xi32>
    %cst_6 = arith.constant 0.00510204071 : f32
    %c0_i32_7 = arith.constant 0 : i32
    %c4_i32 = arith.constant 4 : i32
    %23 = arith.addi %c0_i32_7, %c4_i32 : i32
    %c1_i32_8 = arith.constant 1 : i32
    scf.for %arg7 = %c0_i32_7 to %23 step %c1_i32_8  : i32 {
      %24 = arith.index_cast %arg7 : i32 to index
      %c0_10 = arith.constant 0 : index
      %c0_11 = arith.constant 0 : index
      %25 = vector.load %arg1[%24, %c0_10, %c0_11] : memref<4x128x196xf32, #tpu.memory_space<vmem>>, vector<1x128x196xf32>
      %26 = vector.shape_cast %25 : vector<1x128x196xf32> to vector<128x196xf32>
      %cst_12 = arith.constant dense<0.000000e+00> : vector<128xf32>
      %27 = vector.multi_reduction <add>, %26, %cst_12 [1] : vector<128x196xf32> to vector<128xf32>
      %28 = vector.shape_cast %27 : vector<128xf32> to vector<128x1xf32>
      %29 = vector.broadcast %cst_6 : f32 to vector<128x1xf32>
      %30 = arith.mulf %28, %29 : vector<128x1xf32>
      %31 = arith.mulf %26, %26 : vector<128x196xf32>
      %cst_13 = arith.constant dense<0.000000e+00> : vector<128xf32>
      %32 = vector.multi_reduction <add>, %31, %cst_13 [1] : vector<128x196xf32> to vector<128xf32>
      %33 = vector.shape_cast %32 : vector<128xf32> to vector<128x1xf32>
      %34 = vector.broadcast %cst_6 : f32 to vector<128x1xf32>
      %35 = arith.mulf %33, %34 : vector<128x1xf32>
      %36 = arith.mulf %30, %30 : vector<128x1xf32>
      %37 = arith.subf %35, %36 : vector<128x1xf32>
      %cst_14 = arith.constant 0.000000e+00 : f32
      %38 = vector.broadcast %cst_14 : f32 to vector<128x1xf32>
      %39 = arith.maximumf %37, %38 : vector<128x1xf32>
      %40 = arith.index_cast %arg7 : i32 to index
      %c0_15 = arith.constant 0 : index
      %c0_16 = arith.constant 0 : index
      %41 = vector.load %arg3[%40, %c0_15, %c0_16] : memref<4x128x1xf32, #tpu.memory_space<vmem>>, vector<1x128x1xf32>
      %42 = vector.shape_cast %41 : vector<1x128x1xf32> to vector<128x1xf32>
      %cst_17 = arith.constant 9.99999974E-6 : f32
      %43 = vector.broadcast %cst_17 : f32 to vector<128x1xf32>
      %44 = arith.addf %39, %43 : vector<128x1xf32>
      %45 = math.rsqrt %44 : vector<128x1xf32>
      %46 = arith.mulf %42, %45 : vector<128x1xf32>
      %47 = arith.index_cast %arg7 : i32 to index
      %c0_18 = arith.constant 0 : index
      %c0_19 = arith.constant 0 : index
      %48 = vector.load %arg4[%47, %c0_18, %c0_19] : memref<4x128x1xf32, #tpu.memory_space<vmem>>, vector<1x128x1xf32>
      %49 = vector.shape_cast %48 : vector<1x128x1xf32> to vector<128x1xf32>
      %50 = arith.mulf %30, %46 : vector<128x1xf32>
      %51 = arith.subf %49, %50 : vector<128x1xf32>
      %52 = vector.broadcast %46 : vector<128x1xf32> to vector<128x196xf32>
      %53 = arith.mulf %26, %52 : vector<128x196xf32>
      %54 = vector.broadcast %51 : vector<128x1xf32> to vector<128x196xf32>
      %55 = arith.addf %53, %54 : vector<128x196xf32>
      %cst_20 = arith.constant 0.000000e+00 : f32
      %56 = vector.broadcast %cst_20 : f32 to vector<128x196xf32>
      %57 = arith.maximumf %55, %56 : vector<128x196xf32>
      %58 = arith.truncf %57 : vector<128x196xf32> to vector<128x196xbf16>
      %cst_21 = arith.constant 0.000000e+00 : bf16
      %59 = vector.broadcast %cst_21 : bf16 to vector<128x196xbf16>
      %c0_22 = arith.constant 0 : index
      %c0_23 = arith.constant 0 : index
      %c16 = arith.constant 16 : index
      %60 = vector.load %arg6[%c0_22, %c0_23, %c16] : memref<3x128x228xbf16, #tpu.memory_space<vmem>>, vector<1x128x196xbf16>
      %61 = vector.shape_cast %60 : vector<1x128x196xbf16> to vector<128x196xbf16>
      %62 = vector.shape_cast %58 : vector<128x196xbf16> to vector<1x128x196xbf16>
      tpu.vector_store %arg6[%c0_22, %c0_23, %c16], %62 {strides = array<i32>} : memref<3x128x228xbf16, #tpu.memory_space<vmem>>, vector<1x128x196xbf16>,
      %63 = vector.shape_cast %20 : vector<1x196xi1> to vector<1x196xi1>
      %64 = vector.broadcast %63 : vector<1x196xi1> to vector<128x196xi1>
      %65 = arith.select %64, %58, %59 : vector<128x196xi1>, vector<128x196xbf16>
      %c1 = arith.constant 1 : index
      %c0_24 = arith.constant 0 : index
      %c16_25 = arith.constant 16 : index
      %66 = vector.load %arg6[%c1, %c0_24, %c16_25] : memref<3x128x228xbf16, #tpu.memory_space<vmem>>, vector<1x128x196xbf16>
      %67 = vector.shape_cast %66 : vector<1x128x196xbf16> to vector<128x196xbf16>
      %68 = vector.shape_cast %65 : vector<128x196xbf16> to vector<1x128x196xbf16>
      tpu.vector_store %arg6[%c1, %c0_24, %c16_25], %68 {strides = array<i32>} : memref<3x128x228xbf16, #tpu.memory_space<vmem>>, vector<1x128x196xbf16>,
      %69 = vector.shape_cast %22 : vector<1x196xi1> to vector<1x196xi1>
      %70 = vector.broadcast %69 : vector<1x196xi1> to vector<128x196xi1>
      %71 = arith.select %70, %58, %59 : vector<128x196xi1>, vector<128x196xbf16>
      %c2 = arith.constant 2 : index
      %c0_26 = arith.constant 0 : index
      %c16_27 = arith.constant 16 : index
      %72 = vector.load %arg6[%c2, %c0_26, %c16_27] : memref<3x128x228xbf16, #tpu.memory_space<vmem>>, vector<1x128x196xbf16>
      %73 = vector.shape_cast %72 : vector<1x128x196xbf16> to vector<128x196xbf16>
      %74 = vector.shape_cast %71 : vector<128x196xbf16> to vector<1x128x196xbf16>
      tpu.vector_store %arg6[%c2, %c0_26, %c16_27], %74 {strides = array<i32>} : memref<3x128x228xbf16, #tpu.memory_space<vmem>>, vector<1x128x196xbf16>,
      %cst_28 = arith.constant 0.000000e+00 : f32
      %75 = vector.broadcast %cst_28 : f32 to vector<128x196xf32>
      %c1_29 = arith.constant 1 : index
      %c0_30 = arith.constant 0 : index
      %c1_31 = arith.constant 1 : index
      %76 = vector.load %arg6[%c1_29, %c0_30, %c1_31] : memref<3x128x228xbf16, #tpu.memory_space<vmem>>, vector<1x128x196xbf16>
      %77 = vector.shape_cast %76 : vector<1x128x196xbf16> to vector<128x196xbf16>
      %78 = arith.index_cast %arg7 : i32 to index
      %c0_32 = arith.constant 0 : index
      %c0_33 = arith.constant 0 : index
      %c0_34 = arith.constant 0 : index
      %79 = vector.load %arg2[%78, %c0_32, %c0_33, %c0_34] : memref<4x9x128x128xbf16, #tpu.memory_space<vmem>>, vector<1x1x128x128xbf16>
      %80 = vector.shape_cast %79 : vector<1x1x128x128xbf16> to vector<128x128xbf16>
      %cst_35 = arith.constant dense<0.000000e+00> : vector<128x196xf32>
      %81 = tpu.matmul %80, %77, %cst_35 {dimension_numbers = #tpu.dot_dimension_numbers<[1], [0], [0], [1], [0, 0, 1, 1], [], []>} : vector<128x128xbf16>, vector<128x196xbf16>, vector<128x196xf32> -> vector<128x196xf32>
      %82 = arith.addf %75, %81 : vector<128x196xf32>
      %c0_36 = arith.constant 0 : index
      %c0_37 = arith.constant 0 : index
      %c2_38 = arith.constant 2 : index
      %83 = vector.load %arg6[%c0_36, %c0_37, %c2_38] : memref<3x128x228xbf16, #tpu.memory_space<vmem>>, vector<1x128x196xbf16>
      %84 = vector.shape_cast %83 : vector<1x128x196xbf16> to vector<128x196xbf16>
      %85 = arith.index_cast %arg7 : i32 to index
      %c1_39 = arith.constant 1 : index
      %c0_40 = arith.constant 0 : index
      %c0_41 = arith.constant 0 : index
      %86 = vector.load %arg2[%85, %c1_39, %c0_40, %c0_41] : memref<4x9x128x128xbf16, #tpu.memory_space<vmem>>, vector<1x1x128x128xbf16>
      %87 = vector.shape_cast %86 : vector<1x1x128x128xbf16> to vector<128x128xbf16>
      %cst_42 = arith.constant dense<0.000000e+00> : vector<128x196xf32>
      %88 = tpu.matmul %87, %84, %cst_42 {dimension_numbers = #tpu.dot_dimension_numbers<[1], [0], [0], [1], [0, 0, 1, 1], [], []>} : vector<128x128xbf16>, vector<128x196xbf16>, vector<128x196xf32> -> vector<128x196xf32>
      %89 = arith.addf %82, %88 : vector<128x196xf32>
      %c2_43 = arith.constant 2 : index
      %c0_44 = arith.constant 0 : index
      %c3 = arith.constant 3 : index
      %90 = vector.load %arg6[%c2_43, %c0_44, %c3] : memref<3x128x228xbf16, #tpu.memory_space<vmem>>, vector<1x128x196xbf16>
      %91 = vector.shape_cast %90 : vector<1x128x196xbf16> to vector<128x196xbf16>
      %92 = arith.index_cast %arg7 : i32 to index
      %c2_45 = arith.constant 2 : index
      %c0_46 = arith.constant 0 : index
      %c0_47 = arith.constant 0 : index
      %93 = vector.load %arg2[%92, %c2_45, %c0_46, %c0_47] : memref<4x9x128x128xbf16, #tpu.memory_space<vmem>>, vector<1x1x128x128xbf16>
      %94 = vector.shape_cast %93 : vector<1x1x128x128xbf16> to vector<128x128xbf16>
      %cst_48 = arith.constant dense<0.000000e+00> : vector<128x196xf32>
      %95 = tpu.matmul %94, %91, %cst_48 {dimension_numbers = #tpu.dot_dimension_numbers<[1], [0], [0], [1], [0, 0, 1, 1], [], []>} : vector<128x128xbf16>, vector<128x196xbf16>, vector<128x196xf32> -> vector<128x196xf32>
      %96 = arith.addf %89, %95 : vector<128x196xf32>
      %c1_49 = arith.constant 1 : index
      %c0_50 = arith.constant 0 : index
      %c15 = arith.constant 15 : index
      %97 = vector.load %arg6[%c1_49, %c0_50, %c15] : memref<3x128x228xbf16, #tpu.memory_space<vmem>>, vector<1x128x196xbf16>
      %98 = vector.shape_cast %97 : vector<1x128x196xbf16> to vector<128x196xbf16>
      %99 = arith.index_cast %arg7 : i32 to index
      %c3_51 = arith.constant 3 : index
      %c0_52 = arith.constant 0 : index
      %c0_53 = arith.constant 0 : index
      %100 = vector.load %arg2[%99, %c3_51, %c0_52, %c0_53] : memref<4x9x128x128xbf16, #tpu.memory_space<vmem>>, vector<1x1x128x128xbf16>
      %101 = vector.shape_cast %100 : vector<1x1x128x128xbf16> to vector<128x128xbf16>
      %cst_54 = arith.constant dense<0.000000e+00> : vector<128x196xf32>
      %102 = tpu.matmul %101, %98, %cst_54 {dimension_numbers = #tpu.dot_dimension_numbers<[1], [0], [0], [1], [0, 0, 1, 1], [], []>} : vector<128x128xbf16>, vector<128x196xbf16>, vector<128x196xf32> -> vector<128x196xf32>
      %103 = arith.addf %96, %102 : vector<128x196xf32>
      %c0_55 = arith.constant 0 : index
      %c0_56 = arith.constant 0 : index
      %c16_57 = arith.constant 16 : index
      %104 = vector.load %arg6[%c0_55, %c0_56, %c16_57] : memref<3x128x228xbf16, #tpu.memory_space<vmem>>, vector<1x128x196xbf16>
      %105 = vector.shape_cast %104 : vector<1x128x196xbf16> to vector<128x196xbf16>
      %106 = arith.index_cast %arg7 : i32 to index
      %c4 = arith.constant 4 : index
      %c0_58 = arith.constant 0 : index
      %c0_59 = arith.constant 0 : index
      %107 = vector.load %arg2[%106, %c4, %c0_58, %c0_59] : memref<4x9x128x128xbf16, #tpu.memory_space<vmem>>, vector<1x1x128x128xbf16>
      %108 = vector.shape_cast %107 : vector<1x1x128x128xbf16> to vector<128x128xbf16>
      %cst_60 = arith.constant dense<0.000000e+00> : vector<128x196xf32>
      %109 = tpu.matmul %108, %105, %cst_60 {dimension_numbers = #tpu.dot_dimension_numbers<[1], [0], [0], [1], [0, 0, 1, 1], [], []>} : vector<128x128xbf16>, vector<128x196xbf16>, vector<128x196xf32> -> vector<128x196xf32>
      %110 = arith.addf %103, %109 : vector<128x196xf32>
      %c2_61 = arith.constant 2 : index
      %c0_62 = arith.constant 0 : index
      %c17 = arith.constant 17 : index
      %111 = vector.load %arg6[%c2_61, %c0_62, %c17] : memref<3x128x228xbf16, #tpu.memory_space<vmem>>, vector<1x128x196xbf16>
      %112 = vector.shape_cast %111 : vector<1x128x196xbf16> to vector<128x196xbf16>
      %113 = arith.index_cast %arg7 : i32 to index
      %c5 = arith.constant 5 : index
      %c0_63 = arith.constant 0 : index
      %c0_64 = arith.constant 0 : index
      %114 = vector.load %arg2[%113, %c5, %c0_63, %c0_64] : memref<4x9x128x128xbf16, #tpu.memory_space<vmem>>, vector<1x1x128x128xbf16>
      %115 = vector.shape_cast %114 : vector<1x1x128x128xbf16> to vector<128x128xbf16>
      %cst_65 = arith.constant dense<0.000000e+00> : vector<128x196xf32>
      %116 = tpu.matmul %115, %112, %cst_65 {dimension_numbers = #tpu.dot_dimension_numbers<[1], [0], [0], [1], [0, 0, 1, 1], [], []>} : vector<128x128xbf16>, vector<128x196xbf16>, vector<128x196xf32> -> vector<128x196xf32>
      %117 = arith.addf %110, %116 : vector<128x196xf32>
      %c1_66 = arith.constant 1 : index
      %c0_67 = arith.constant 0 : index
      %c29 = arith.constant 29 : index
      %118 = vector.load %arg6[%c1_66, %c0_67, %c29] : memref<3x128x228xbf16, #tpu.memory_space<vmem>>, vector<1x128x196xbf16>
      %119 = vector.shape_cast %118 : vector<1x128x196xbf16> to vector<128x196xbf16>
      %120 = arith.index_cast %arg7 : i32 to index
      %c6 = arith.constant 6 : index
      %c0_68 = arith.constant 0 : index
      %c0_69 = arith.constant 0 : index
      %121 = vector.load %arg2[%120, %c6, %c0_68, %c0_69] : memref<4x9x128x128xbf16, #tpu.memory_space<vmem>>, vector<1x1x128x128xbf16>
      %122 = vector.shape_cast %121 : vector<1x1x128x128xbf16> to vector<128x128xbf16>
      %cst_70 = arith.constant dense<0.000000e+00> : vector<128x196xf32>
      %123 = tpu.matmul %122, %119, %cst_70 {dimension_numbers = #tpu.dot_dimension_numbers<[1], [0], [0], [1], [0, 0, 1, 1], [], []>} : vector<128x128xbf16>, vector<128x196xbf16>, vector<128x196xf32> -> vector<128x196xf32>
      %124 = arith.addf %117, %123 : vector<128x196xf32>
      %c0_71 = arith.constant 0 : index
      %c0_72 = arith.constant 0 : index
      %c30 = arith.constant 30 : index
      %125 = vector.load %arg6[%c0_71, %c0_72, %c30] : memref<3x128x228xbf16, #tpu.memory_space<vmem>>, vector<1x128x196xbf16>
      %126 = vector.shape_cast %125 : vector<1x128x196xbf16> to vector<128x196xbf16>
      %127 = arith.index_cast %arg7 : i32 to index
      %c7 = arith.constant 7 : index
      %c0_73 = arith.constant 0 : index
      %c0_74 = arith.constant 0 : index
      %128 = vector.load %arg2[%127, %c7, %c0_73, %c0_74] : memref<4x9x128x128xbf16, #tpu.memory_space<vmem>>, vector<1x1x128x128xbf16>
      %129 = vector.shape_cast %128 : vector<1x1x128x128xbf16> to vector<128x128xbf16>
      %cst_75 = arith.constant dense<0.000000e+00> : vector<128x196xf32>
      %130 = tpu.matmul %129, %126, %cst_75 {dimension_numbers = #tpu.dot_dimension_numbers<[1], [0], [0], [1], [0, 0, 1, 1], [], []>} : vector<128x128xbf16>, vector<128x196xbf16>, vector<128x196xf32> -> vector<128x196xf32>
      %131 = arith.addf %124, %130 : vector<128x196xf32>
      %c2_76 = arith.constant 2 : index
      %c0_77 = arith.constant 0 : index
      %c31 = arith.constant 31 : index
      %132 = vector.load %arg6[%c2_76, %c0_77, %c31] : memref<3x128x228xbf16, #tpu.memory_space<vmem>>, vector<1x128x196xbf16>
      %133 = vector.shape_cast %132 : vector<1x128x196xbf16> to vector<128x196xbf16>
      %134 = arith.index_cast %arg7 : i32 to index
      %c8 = arith.constant 8 : index
      %c0_78 = arith.constant 0 : index
      %c0_79 = arith.constant 0 : index
      %135 = vector.load %arg2[%134, %c8, %c0_78, %c0_79] : memref<4x9x128x128xbf16, #tpu.memory_space<vmem>>, vector<1x1x128x128xbf16>
      %136 = vector.shape_cast %135 : vector<1x1x128x128xbf16> to vector<128x128xbf16>
      %cst_80 = arith.constant dense<0.000000e+00> : vector<128x196xf32>
      %137 = tpu.matmul %136, %133, %cst_80 {dimension_numbers = #tpu.dot_dimension_numbers<[1], [0], [0], [1], [0, 0, 1, 1], [], []>} : vector<128x128xbf16>, vector<128x196xbf16>, vector<128x196xf32> -> vector<128x196xf32>
      %138 = arith.addf %131, %137 : vector<128x196xf32>
      %139 = arith.index_cast %arg7 : i32 to index
      %c0_81 = arith.constant 0 : index
      %c0_82 = arith.constant 0 : index
      %140 = vector.load %arg5[%139, %c0_81, %c0_82] : memref<4x128x196xf32, #tpu.memory_space<vmem>>, vector<1x128x196xf32>
      %141 = vector.shape_cast %140 : vector<1x128x196xf32> to vector<128x196xf32>
      %142 = vector.shape_cast %138 : vector<128x196xf32> to vector<1x128x196xf32>
      tpu.vector_store %arg5[%139, %c0_81, %c0_82], %142 {strides = array<i32>} : memref<4x128x196xf32, #tpu.memory_space<vmem>>, vector<1x128x196xf32>,
    }
    %c4_i32_9 = arith.constant 4 : i32
    return
  }
  func.func @transform_0(%arg0: i32) -> (i32, i32, i32) {
    %c0_i32 = arith.constant 0 : i32
    %c0_i32_0 = arith.constant 0 : i32
    %c0_i32_1 = arith.constant 0 : i32
    return %arg0, %c0_i32, %c0_i32_0 : i32, i32, i32
  }
  func.func @transform_1(%arg0: i32) -> (i32, i32, i32, i32) {
    %c0_i32 = arith.constant 0 : i32
    %c0_i32_0 = arith.constant 0 : i32
    %c0_i32_1 = arith.constant 0 : i32
    %c0_i32_2 = arith.constant 0 : i32
    return %arg0, %c0_i32, %c0_i32_0, %c0_i32_1 : i32, i32, i32, i32
  }
  func.func @transform_2(%arg0: i32) -> (i32, i32, i32) {
    %c0_i32 = arith.constant 0 : i32
    %c0_i32_0 = arith.constant 0 : i32
    %c0_i32_1 = arith.constant 0 : i32
    return %arg0, %c0_i32, %c0_i32_0 : i32, i32, i32
  }
  func.func @transform_3(%arg0: i32) -> (i32, i32, i32) {
    %c0_i32 = arith.constant 0 : i32
    %c0_i32_0 = arith.constant 0 : i32
    %c0_i32_1 = arith.constant 0 : i32
    return %arg0, %c0_i32, %c0_i32_0 : i32, i32, i32
  }
  func.func @transform_4(%arg0: i32) -> (i32, i32, i32) {
    %c0_i32 = arith.constant 0 : i32
    %c0_i32_0 = arith.constant 0 : i32
    %c0_i32_1 = arith.constant 0 : i32
    return %arg0, %c0_i32, %c0_i32_0 : i32, i32, i32
  }
}

</mosaic_0001>

<llo_original>
// kernel: bn_relu_groupconv.1
$region0: #{bn_relu_groupconv.1}
  #allocation0 [shape = 'u32[]', space=smem, size = 0x4, offset = 0x4, fixed_abs, tag = 'smem constant byte address 0x4 - core index']
  #allocation1 [shape = 'u32[144,128]{1,0:T(1,128)}', space=vmem, size = 0x12000, scoped, tag = 'internal scratch']
  #allocation2 [shape = 'bf16[3,128,228]{2,1,0:T(16,128)(2,1)}', space=vmem, size = 0x30000, scoped, tag = 'scratch operand']
  %s0 = inlined_call_operand.vmem [shape: f32[8,128,196], index: 0, kind: input, shape index: {}]
  %s1 = inlined_call_operand.vmem [shape: bf16[8,9,128,128], index: 1, kind: input, shape index: {}]
  %s2 = inlined_call_operand.vmem [shape: f32[8,128,1], index: 2, kind: input, shape index: {}]
  %s3 = inlined_call_operand.vmem [shape: f32[8,128,1], index: 3, kind: input, shape index: {}]
  %s4 = inlined_call_operand.vmem [shape: f32[8,128,196], index: 4, kind: output, shape index: {}]
  %s5 = sld [smem:[#allocation0]]
  $region56: #{bn_relu_groupconv.1} parent=0
    _
  %s7 = ssub.s32 1, %s5
  %s8 = scalar_select 0, %s7, %s5
  loop: start=0, step=1, limit=4
  $region2: #{bn_relu_groupconv.1} parent=0 // loop_pre_header
    _
  $region3: #{bn_relu_groupconv.1} parent=0 // loop_header
    %s10 = sphi 0, %s14
    %p11 = scmp.ge.s32.totalorder %s10, 4
    %s20 = sphi 0, %s22
    %s23 = sphi 0, %s20
    %s24 = sphi 0, %s23
    %s40 = sphi 0, %s24
    %s46 = sphi 0, %s48
    %s49 = sphi 0, %s46
    %s50 = sphi 0, %s49
    %s66 = sphi 0, %s50
    %s72 = sphi 0, %s74
    %s75 = sphi 0, %s72
    %s76 = sphi 0, %s75
    %s92 = sphi 0, %s76
    %s98 = sphi 0, %s100
    %s101 = sphi 0, %s98
    %s102 = sphi 0, %s101
    %s118 = sphi 0, %s102
    %s124 = sphi 0, %s126
    %s127 = sphi 0, %s124
    %s128 = sphi 0, %s127
    %s144 = sphi 0, %s128
  $region4: #{bn_relu_groupconv.1} parent=0 // loop_header_branch
    %13 = sbr.rel (%p11) target = $region8
  $region5: #{bn_relu_groupconv.1} parent=0 // loop_body
    %s15 = ssub.s32 %s10, 1
    %s16 = ssub.s32 %s10, 2
    %s17 = sadd.s32 %s10, 1
    %s18 = ssub.s32 %s10, %s17
    %p19 = scmp.eq.s32.totalorder %s18, 0
    %s21 = sadd.s32 %s20, 1
    %s22 = scalar_select %p19, %s20, %s21
    %p25 = pneg %p19
    %p26 = scmp.eq.s32.totalorder %s10, 1
    %p27 = por %p25, %p26
    %p28 = scmp.ne.s32.totalorder %s20, %s23
    %p29 = scmp.eq.s32.totalorder %s10, 0
    %p30 = por %p28, %p29
    %p31 = scmp.ne.s32.totalorder %s20, %s23
    %p32 = scmp.eq.s32.totalorder %s15, 1
    %p33 = por %p31, %p32
    %p34 = scmp.ne.s32.totalorder %s23, %s24
    %p35 = scmp.eq.s32.totalorder %s15, 0
    %p36 = por %p34, %p35
    %p37 = scmp.ne.s32.totalorder %s23, %s24
    %p38 = scmp.eq.s32.totalorder %s16, 1
    %p39 = por %p37, %p38
    %p41 = scmp.ne.s32.totalorder %s24, %s40
    %p42 = scmp.eq.s32.totalorder %s16, 0
    %p43 = por %p41, %p42
    %s44 = ssub.s32 %s10, %s17
    %p45 = scmp.eq.s32.totalorder %s44, 0
    %s47 = sadd.s32 %s46, 1
    %s48 = scalar_select %p45, %s46, %s47
    %p51 = pneg %p45
    %p52 = scmp.eq.s32.totalorder %s10, 1
    %p53 = por %p51, %p52
    %p54 = scmp.ne.s32.totalorder %s46, %s49
    %p55 = scmp.eq.s32.totalorder %s10, 0
    %p56 = por %p54, %p55
    %p57 = scmp.ne.s32.totalorder %s46, %s49
    %p58 = scmp.eq.s32.totalorder %s15, 1
    %p59 = por %p57, %p58
    %p60 = scmp.ne.s32.totalorder %s49, %s50
    %p61 = scmp.eq.s32.totalorder %s15, 0
    %p62 = por %p60, %p61
    %p63 = scmp.ne.s32.totalorder %s49, %s50
    %p64 = scmp.eq.s32.totalorder %s16, 1
    %p65 = por %p63, %p64
    %p67 = scmp.ne.s32.totalorder %s50, %s66
    %p68 = scmp.eq.s32.totalorder %s16, 0
    %p69 = por %p67, %p68
    %s70 = ssub.s32 %s10, %s17
    %p71 = scmp.eq.s32.totalorder %s70, 0
    %s73 = sadd.s32 %s72, 1
    %s74 = scalar_select %p71, %s72, %s73
    %p77 = pneg %p71
    %p78 = scmp.eq.s32.totalorder %s10, 1
    %p79 = por %p77, %p78
    %p80 = scmp.ne.s32.totalorder %s72, %s75
    %p81 = scmp.eq.s32.totalorder %s10, 0
    %p82 = por %p80, %p81
    %p83 = scmp.ne.s32.totalorder %s72, %s75
    %p84 = scmp.eq.s32.totalorder %s15, 1
    %p85 = por %p83, %p84
    %p86 = scmp.ne.s32.totalorder %s75, %s76
    %p87 = scmp.eq.s32.totalorder %s15, 0
    %p88 = por %p86, %p87
    %p89 = scmp.ne.s32.totalorder %s75, %s76
    %p90 = scmp.eq.s32.totalorder %s16, 1
    %p91 = por %p89, %p90
    %p93 = scmp.ne.s32.totalorder %s76, %s92
    %p94 = scmp.eq.s32.totalorder %s16, 0
    %p95 = por %p93, %p94
    %s96 = ssub.s32 %s10, %s17
    %p97 = scmp.eq.s32.totalorder %s96, 0
    %s99 = sadd.s32 %s98, 1
    %s100 = scalar_select %p97, %s98, %s99
    %p103 = pneg %p97
    %p104 = scmp.eq.s32.totalorder %s10, 1
    %p105 = por %p103, %p104
    %p106 = scmp.ne.s32.totalorder %s98, %s101
    %p107 = scmp.eq.s32.totalorder %s10, 0
    %p108 = por %p106, %p107
    %p109 = scmp.ne.s32.totalorder %s98, %s101
    %p110 = scmp.eq.s32.totalorder %s15, 1
    %p111 = por %p109, %p110
    %p112 = scmp.ne.s32.totalorder %s101, %s102
    %p113 = scmp.eq.s32.totalorder %s15, 0
    %p114 = por %p112, %p113
    %p115 = scmp.ne.s32.totalorder %s101, %s102
    %p116 = scmp.eq.s32.totalorder %s16, 1
    %p117 = por %p115, %p116
    %p119 = scmp.ne.s32.totalorder %s102, %s118
    %p120 = scmp.eq.s32.totalorder %s16, 0
    %p121 = por %p119, %p120
    %s122 = ssub.s32 %s10, %s17
    %p123 = scmp.eq.s32.totalorder %s122, 0
    %s125 = sadd.s32 %s124, 1
    %s126 = scalar_select %p123, %s124, %s125
    %p129 = pneg %p123
    %p130 = scmp.eq.s32.totalorder %s10, 1
    %p131 = por %p129, %p130
    %p132 = scmp.ne.s32.totalorder %s124, %s127
    %p133 = scmp.eq.s32.totalorder %s10, 0
    %p134 = por %p132, %p133
    %p135 = scmp.ne.s32.totalorder %s124, %s127
    %p136 = scmp.eq.s32.totalorder %s15, 1
    %p137 = por %p135, %p136
    %p138 = scmp.ne.s32.totalorder %s127, %s128
    %p139 = scmp.eq.s32.totalorder %s15, 0
    %p140 = por %p138, %p139
    %p141 = scmp.ne.s32.totalorder %s127, %s128
    %p142 = scmp.eq.s32.totalorder %s16, 1
    %p143 = por %p141, %p142
    %p145 = scmp.ne.s32.totalorder %s128, %s144
    %p146 = scmp.eq.s32.totalorder %s16, 0
    %p147 = por %p145, %p146
    %p148 = scmp.le.s32.totalorder 1, %s10
    %p149 = scmp.lt.s32.totalorder %s10, 3
    %p150 = pnand %p148, %p149
    %p151 = pneg %p150
    // Predicated region
    $region9: #{bn_relu_groupconv.1} parent=5 // pred_check
      _
    $region10: #{bn_relu_groupconv.1} parent=5 // pred_check_branch
      %153 = sbr.rel (%p150) target = $region12
    $region11: #{bn_relu_groupconv.1} parent=5 // pred_region
      %s154 = ssub.s32 %s10, 1
    $region12: #{bn_relu_groupconv.1} parent=5 // pred_fallthru
      _
    %p155 = scmp.lt.s32.totalorder %s10, 2
    // Predicated region
    $region13: #{bn_relu_groupconv.1} parent=5 // pred_check
      %p156 = pneg %p155
    $region14: #{bn_relu_groupconv.1} parent=5 // pred_check_branch
      %158 = sbr.rel (%p156) target = $region16
    $region15: #{bn_relu_groupconv.1} parent=5 // pred_region
      // Predicated region
      $region17: #{bn_relu_groupconv.1} parent=15 // pred_check
        %p159 = pneg %p30
      $region18: #{bn_relu_groupconv.1} parent=15 // pred_check_branch
        %161 = sbr.rel (%p159) target = $region20
      $region19: #{bn_relu_groupconv.1} parent=15 // pred_region
        %s162 = smul.u32 4, %s10
        %p163 = scmp.lt.s32.totalorder %s162, 7
        %s164 = scalar_select %p163, %s162, 7
        %s165 = smul.addr %s164, 32
        %s166 = smul.addr %s165, 8
        %s167 = scalar_lea.vmem %s0, %s166
        %s168 = smul.u32 4, %s10
      $region20: #{bn_relu_groupconv.1} parent=15 // pred_fallthru
        _
      // Predicated region
      $region21: #{bn_relu_groupconv.1} parent=15 // pred_check
        %p169 = pneg %p56
      $region22: #{bn_relu_groupconv.1} parent=15 // pred_check_branch
        %171 = sbr.rel (%p169) target = $region24
      $region23: #{bn_relu_groupconv.1} parent=15 // pred_region
        %s172 = smul.u32 4, %s10
        %p173 = scmp.lt.s32.totalorder %s172, 7
        %s174 = scalar_select %p173, %s172, 7
        %s175 = smul.addr %s174, 144
        %s176 = smul.addr %s175, 4
        %s177 = scalar_lea.vmem %s1, %s176
        %s178 = smul.u32 4, %s10
      $region24: #{bn_relu_groupconv.1} parent=15 // pred_fallthru
        _
      // Predicated region
      $region25: #{bn_relu_groupconv.1} parent=15 // pred_check
        %p179 = pneg %p82
      $region26: #{bn_relu_groupconv.1} parent=15 // pred_check_branch
        %181 = sbr.rel (%p179) target = $region28
      $region27: #{bn_relu_groupconv.1} parent=15 // pred_region
        %s182 = smul.u32 4, %s10
        %p183 = scmp.lt.s32.totalorder %s182, 7
        %s184 = scalar_select %p183, %s182, 7
        %s185 = smul.addr %s184, 16
        %s186 = smul.addr %s185, 8
        %s187 = scalar_lea.vmem %s2, %s186
        %s188 = smul.u32 4, %s10
      $region28: #{bn_relu_groupconv.1} parent=15 // pred_fallthru
        _
      // Predicated region
      $region29: #{bn_relu_groupconv.1} parent=15 // pred_check
        %p189 = pneg %p108
      $region30: #{bn_relu_groupconv.1} parent=15 // pred_check_branch
        %191 = sbr.rel (%p189) target = $region32
      $region31: #{bn_relu_groupconv.1} parent=15 // pred_region
        %s192 = smul.u32 4, %s10
        %p193 = scmp.lt.s32.totalorder %s192, 7
        %s194 = scalar_select %p193, %s192, 7
        %s195 = smul.addr %s194, 16
        %s196 = smul.addr %s195, 8
        %s197 = scalar_lea.vmem %s3, %s196
        %s198 = smul.u32 4, %s10
      $region32: #{bn_relu_groupconv.1} parent=15 // pred_fallthru
        _
    $region16: #{bn_relu_groupconv.1} parent=5 // pred_fallthru
      _
    %p199 = scmp.le.s32.totalorder 1, %s10
    %p200 = scmp.lt.s32.totalorder %s10, 3
    %p201 = pnand %p199, %p200
    %p202 = pneg %p201
    // Predicated region
    $region33: #{bn_relu_groupconv.1} parent=5 // pred_check
      _
    $region34: #{bn_relu_groupconv.1} parent=5 // pred_check_branch
      %204 = sbr.rel (%p201) target = $region36
    $region35: #{bn_relu_groupconv.1} parent=5 // pred_region
      %s205 = ssub.s32 %s10, 1
      %s206 = smul.u32 4, %s15
      %p207 = scmp.lt.s32.totalorder %s206, 7
      %s208 = scalar_select %p207, %s206, 7
      %s209 = smul.addr %s208, 32
      %s210 = smul.addr %s209, 8
      %s211 = scalar_lea.vmem %s0, %s210
      %p212 = pneg %p36
      %p213 = pneg %p33
      %s214 = smul.u32 4, %s15
      %p215 = scmp.lt.s32.totalorder %s214, 7
      %s216 = scalar_select %p215, %s214, 7
      %s217 = smul.addr %s216, 144
      %s218 = smul.addr %s217, 4
      %s219 = scalar_lea.vmem %s1, %s218
      %p220 = pneg %p62
      %p221 = pneg %p59
      %s222 = smul.u32 4, %s15
      %p223 = scmp.lt.s32.totalorder %s222, 7
      %s224 = scalar_select %p223, %s222, 7
      %s225 = smul.addr %s224, 16
      %s226 = smul.addr %s225, 8
      %s227 = scalar_lea.vmem %s2, %s226
      %p228 = pneg %p88
      %p229 = pneg %p85
      %s230 = smul.u32 4, %s15
      %p231 = scmp.lt.s32.totalorder %s230, 7
      %s232 = scalar_select %p231, %s230, 7
      %s233 = smul.addr %s232, 16
      %s234 = smul.addr %s233, 8
      %s235 = scalar_lea.vmem %s3, %s234
      %p236 = pneg %p114
      %p237 = pneg %p111
      %p238 = pneg %p140
      %p239 = pneg %p137
      %s240 = smul.u32 4, %s15
      %p241 = scmp.lt.s32.totalorder %s240, 7
      %s242 = scalar_select %p241, %s240, 7
      %s243 = smul.addr %s242, 32
      %s244 = smul.addr %s243, 8
      %s245 = scalar_lea.vmem %s4, %s244
      %s246 = smul.u32 4, %s15
      %p247 = scmp.lt.s32.totalorder %s246, 7
      %s248 = scalar_select %p247, %s246, 7
      %s249 = smul.addr %s248, 32
      %s250 = smul.addr %s249, 8
      %s251 = scalar_lea.vmem %s0, %s250
      %s252 = smul.u32 4, %s15
      %s253 = smul.u32 4, %s15
      %p254 = scmp.lt.s32.totalorder %s253, 7
      %s255 = scalar_select %p254, %s253, 7
      %s256 = smul.addr %s255, 144
      %s257 = smul.addr %s256, 4
      %s258 = scalar_lea.vmem %s1, %s257
      %s259 = smul.u32 4, %s15
      %s260 = smul.u32 4, %s15
      %p261 = scmp.lt.s32.totalorder %s260, 7
      %s262 = scalar_select %p261, %s260, 7
      %s263 = smul.addr %s262, 16
      %s264 = smul.addr %s263, 8
      %s265 = scalar_lea.vmem %s2, %s264
      %s266 = smul.u32 4, %s15
      %s267 = smul.u32 4, %s15
      %p268 = scmp.lt.s32.totalorder %s267, 7
      %s269 = scalar_select %p268, %s267, 7
      %s270 = smul.addr %s269, 16
      %s271 = smul.addr %s270, 8
      %s272 = scalar_lea.vmem %s3, %s271
      %s273 = smul.u32 4, %s15
      %s274 = smul.u32 4, %s15
      %p275 = scmp.lt.s32.totalorder %s274, 7
      %s276 = scalar_select %p275, %s274, 7
      %s277 = smul.addr %s276, 32
      %s278 = smul.addr %s277, 8
      %s279 = scalar_lea.vmem %s4, %s278
      %s280 = smul.u32 4, %s15
      %284 = vst [vmem:[#allocation2] sm:$0xff] 0
      %vm285 = vcmask 818176
      %286 = vst.msk [vmem:[#allocation2 + $0x8] sm:$0xff] %vm285, 0
      %287 = vst [vmem:[#allocation2 + $0x10] sm:$0xff] 0
      %288 = vst.msk [vmem:[#allocation2 + $0x18] sm:$0xff] %vm285, 0
      %289 = vst [vmem:[#allocation2 + $0x20] sm:$0xff] 0
      %290 = vst.msk [vmem:[#allocation2 + $0x28] sm:$0xff] %vm285, 0
      %291 = vst [vmem:[#allocation2 + $0x30] sm:$0xff] 0
      %292 = vst.msk [vmem:[#allocation2 + $0x38] sm:$0xff] %vm285, 0
      %293 = vst [vmem:[#allocation2 + $0x40] sm:$0xff] 0
      %294 = vst.msk [vmem:[#allocation2 + $0x48] sm:$0xff] %vm285, 0
      %295 = vst [vmem:[#allocation2 + $0x50] sm:$0xff] 0
      %296 = vst.msk [vmem:[#allocation2 + $0x58] sm:$0xff] %vm285, 0
      %297 = vst [vmem:[#allocation2 + $0x60] sm:$0xff] 0
      %298 = vst.msk [vmem:[#allocation2 + $0x68] sm:$0xff] %vm285, 0
      %299 = vst [vmem:[#allocation2 + $0x70] sm:$0xff] 0
      %300 = vst.msk [vmem:[#allocation2 + $0x78] sm:$0xff] %vm285, 0
      %301 = vst [vmem:[#allocation2 + $0x80] sm:$0xff] 0
      %302 = vst.msk [vmem:[#allocation2 + $0x88] sm:$0xff] %vm285, 0
      %303 = vst [vmem:[#allocation2 + $0x90] sm:$0xff] 0
      %304 = vst.msk [vmem:[#allocation2 + $0x98] sm:$0xff] %vm285, 0
      %305 = vst [vmem:[#allocation2 + $0xa0] sm:$0xff] 0
      %306 = vst.msk [vmem:[#allocation2 + $0xa8] sm:$0xff] %vm285, 0
      %307 = vst [vmem:[#allocation2 + $0xb0] sm:$0xff] 0
      %308 = vst.msk [vmem:[#allocation2 + $0xb8] sm:$0xff] %vm285, 0
      %309 = vst [vmem:[#allocation2 + $0xc0] sm:$0xff] 0
      %310 = vst.msk [vmem:[#allocation2 + $0xc8] sm:$0xff] %vm285, 0
      %311 = vst [vmem:[#allocation2 + $0xd0] sm:$0xff] 0
      %312 = vst.msk [vmem:[#allocation2 + $0xd8] sm:$0xff] %vm285, 0
      %313 = vst [vmem:[#allocation2 + $0xe0] sm:$0xff] 0
      %314 = vst.msk [vmem:[#allocation2 + $0xe8] sm:$0xff] %vm285, 0
      %315 = vst [vmem:[#allocation2 + $0xf0] sm:$0xff] 0
      %316 = vst.msk [vmem:[#allocation2 + $0xf8] sm:$0xff] %vm285, 0
      %317 = vst [vmem:[#allocation2 + $0x100] sm:$0xff] 0
      %318 = vst.msk [vmem:[#allocation2 + $0x108] sm:$0xff] %vm285, 0
      %319 = vst [vmem:[#allocation2 + $0x110] sm:$0xff] 0
      %320 = vst.msk [vmem:[#allocation2 + $0x118] sm:$0xff] %vm285, 0
      %321 = vst [vmem:[#allocation2 + $0x120] sm:$0xff] 0
      %322 = vst.msk [vmem:[#allocation2 + $0x128] sm:$0xff] %vm285, 0
      %323 = vst [vmem:[#allocation2 + $0x130] sm:$0xff] 0
      %324 = vst.msk [vmem:[#allocation2 + $0x138] sm:$0xff] %vm285, 0
      %325 = vst [vmem:[#allocation2 + $0x140] sm:$0xff] 0
      %326 = vst.msk [vmem:[#allocation2 + $0x148] sm:$0xff] %vm285, 0
      %327 = vst [vmem:[#allocation2 + $0x150] sm:$0xff] 0
      %328 = vst.msk [vmem:[#allocation2 + $0x158] sm:$0xff] %vm285, 0
      %329 = vst [vmem:[#allocation2 + $0x160] sm:$0xff] 0
      %330 = vst.msk [vmem:[#allocation2 + $0x168] sm:$0xff] %vm285, 0
      %331 = vst [vmem:[#allocation2 + $0x170] sm:$0xff] 0
      %332 = vst.msk [vmem:[#allocation2 + $0x178] sm:$0xff] %vm285, 0
      %v333 = vlaneseq
      %v334 = vand.u32 %v333, 127
      %v335 = vadd.s32 %v334, 128
      %vm336 = vcmp.lt.s32.totalorder %v334, 0
      %v337 = vsub.s32 0, %v334
      %v338 = vsel %vm336, %v337, %v334
      %v339 = vmul.u32.u64.compose %v338, 2454267026
      %v340 = vextract.low.u32 %v339
      %v341 = vextract.high.u32 %v339
      %vm342 = vc.u32 %v340, 2454267026
      %v343 = vsel %vm342, 1, 0
      %v344 = vadd.s32 %v341, %v343
      %v345 = vshrl.u32 %v344, 3
      %v346 = vmul.u32 %v345, 14
      %v347 = vsub.s32 %v338, %v346
      %v348 = vsub.s32 0, %v347
      %v349 = vsel %vm336, %v348, %v347
      %vm350 = vcmp.lt.s32.totalorder %v335, 0
      %v351 = vsub.s32 0, %v335
      %v352 = vsel %vm350, %v351, %v335
      %v353 = vmul.u32.u64.compose %v352, 2454267026
      %v354 = vextract.low.u32 %v353
      %v355 = vextract.high.u32 %v353
      %vm356 = vc.u32 %v354, 2454267026
      %v357 = vsel %vm356, 1, 0
      %v358 = vadd.s32 %v355, %v357
      %v359 = vshrl.u32 %v358, 3
      %v360 = vmul.u32 %v359, 14
      %v361 = vsub.s32 %v352, %v360
      %v362 = vsub.s32 0, %v361
      %v363 = vsel %vm350, %v362, %v361
      %vm364 = vcmp.ne.s32.totalorder %v349, 0
      %vm365 = vcmp.ne.s32.totalorder %v363, 0
      %vm366 = vcmp.lt.s32.totalorder %v349, 0
      %vm367 = vcmp.lt.s32.totalorder %v363, 0
      %vm368 = vmand %vm366, %vm364
      %vm369 = vmand %vm367, %vm365
      %v370 = vadd.s32 %v349, 14
      %v371 = vadd.s32 %v363, 14
      %v372 = vsel %vm368, %v370, %v349
      %v373 = vsel %vm369, %v371, %v363
      %vm374 = vcmp.ne.s32.totalorder %v372, 13
      %vm375 = vcmp.ne.s32.totalorder %v373, 13
      %vm376 = vcmp.ne.s32.totalorder %v372, 0
      %vm377 = vcmp.ne.s32.totalorder %v373, 0
      loop: start=0, step=1, limit=4
      $region37: #{bn_relu_groupconv.1} parent=35 // loop_pre_header
        _
      $region38: #{bn_relu_groupconv.1} parent=35 // loop_header
        %s379 = sphi 0, %s383
        %p380 = scmp.ge.s32.totalorder %s379, 4
      $region39: #{bn_relu_groupconv.1} parent=35 // loop_header_branch
        %382 = sbr.rel (%p380) target = $region43
      $region40: #{bn_relu_groupconv.1} parent=35 // loop_body
        %s384 = smul.u32 %s379, 32
        %s385 = smul.addr %s384, 8
        %s386 = scalar_lea.vmem %s251, %s385
        %v387 = vld [vmem:[%s386] sm:$0xff]
        %v388 = vld [vmem:[%s386 + $0x8] sm:$0xff]
        %v389 = vld [vmem:[%s386 + $0x10] sm:$0xff]
        %v390 = vld [vmem:[%s386 + $0x18] sm:$0xff]
        %v391 = vld [vmem:[%s386 + $0x20] sm:$0xff]
        %v392 = vld [vmem:[%s386 + $0x28] sm:$0xff]
        %v393 = vld [vmem:[%s386 + $0x30] sm:$0xff]
        %v394 = vld [vmem:[%s386 + $0x38] sm:$0xff]
        %v395 = vld [vmem:[%s386 + $0x40] sm:$0xff]
        %v396 = vld [vmem:[%s386 + $0x48] sm:$0xff]
        %v397 = vld [vmem:[%s386 + $0x50] sm:$0xff]
        %v398 = vld [vmem:[%s386 + $0x58] sm:$0xff]
        %v399 = vld [vmem:[%s386 + $0x60] sm:$0xff]
        %v400 = vld [vmem:[%s386 + $0x68] sm:$0xff]
        %v401 = vld [vmem:[%s386 + $0x70] sm:$0xff]
        %v402 = vld [vmem:[%s386 + $0x78] sm:$0xff]
        %v403 = vld [vmem:[%s386 + $0x80] sm:$0xff]
        %v404 = vld [vmem:[%s386 + $0x88] sm:$0xff]
        %v405 = vld [vmem:[%s386 + $0x90] sm:$0xff]
        %v406 = vld [vmem:[%s386 + $0x98] sm:$0xff]
        %v407 = vld [vmem:[%s386 + $0xa0] sm:$0xff]
        %v408 = vld [vmem:[%s386 + $0xa8] sm:$0xff]
        %v409 = vld [vmem:[%s386 + $0xb0] sm:$0xff]
        %v410 = vld [vmem:[%s386 + $0xb8] sm:$0xff]
        %v411 = vld [vmem:[%s386 + $0xc0] sm:$0xff]
        %v412 = vld [vmem:[%s386 + $0xc8] sm:$0xff]
        %v413 = vld [vmem:[%s386 + $0xd0] sm:$0xff]
        %v414 = vld [vmem:[%s386 + $0xd8] sm:$0xff]
        %v415 = vld [vmem:[%s386 + $0xe0] sm:$0xff]
        %v416 = vld [vmem:[%s386 + $0xe8] sm:$0xff]
        %v417 = vld [vmem:[%s386 + $0xf0] sm:$0xff]
        %v418 = vld [vmem:[%s386 + $0xf8] sm:$0xff]
        %vm419 = vcmask 556032
        %v420 = vsel %vm419, %v388, 0.0
        %v421 = vadd.f32 %v387, %v420
        %422 = vadd.xlane.f32.xlu0 %v421
        %v423 = vpop.xlane.xlu0 %422
        %v424 = vsel %vm419, %v390, 0.0
        %v425 = vadd.f32 %v389, %v424
        %426 = vadd.xlane.f32.xlu0 %v425
        %v427 = vpop.xlane.xlu0 %426
        %v428 = vsel %vm419, %v392, 0.0
        %v429 = vadd.f32 %v391, %v428
        %430 = vadd.xlane.f32.xlu0 %v429
        %v431 = vpop.xlane.xlu0 %430
        %v432 = vsel %vm419, %v394, 0.0
        %v433 = vadd.f32 %v393, %v432
        %434 = vadd.xlane.f32.xlu0 %v433
        %v435 = vpop.xlane.xlu0 %434
        %v436 = vsel %vm419, %v396, 0.0
        %v437 = vadd.f32 %v395, %v436
        %438 = vadd.xlane.f32.xlu0 %v437
        %v439 = vpop.xlane.xlu0 %438
        %v440 = vsel %vm419, %v398, 0.0
        %v441 = vadd.f32 %v397, %v440
        %442 = vadd.xlane.f32.xlu0 %v441
        %v443 = vpop.xlane.xlu0 %442
        %v444 = vsel %vm419, %v400, 0.0
        %v445 = vadd.f32 %v399, %v444
        %446 = vadd.xlane.f32.xlu0 %v445
        %v447 = vpop.xlane.xlu0 %446
        %v448 = vsel %vm419, %v402, 0.0
        %v449 = vadd.f32 %v401, %v448
        %450 = vadd.xlane.f32.xlu0 %v449
        %v451 = vpop.xlane.xlu0 %450
        %v452 = vsel %vm419, %v404, 0.0
        %v453 = vadd.f32 %v403, %v452
        %454 = vadd.xlane.f32.xlu0 %v453
        %v455 = vpop.xlane.xlu0 %454
        %v456 = vsel %vm419, %v406, 0.0
        %v457 = vadd.f32 %v405, %v456
        %458 = vadd.xlane.f32.xlu0 %v457
        %v459 = vpop.xlane.xlu0 %458
        %v460 = vsel %vm419, %v408, 0.0
        %v461 = vadd.f32 %v407, %v460
        %462 = vadd.xlane.f32.xlu0 %v461
        %v463 = vpop.xlane.xlu0 %462
        %v464 = vsel %vm419, %v410, 0.0
        %v465 = vadd.f32 %v409, %v464
        %466 = vadd.xlane.f32.xlu0 %v465
        %v467 = vpop.xlane.xlu0 %466
        %v468 = vsel %vm419, %v412, 0.0
        %v469 = vadd.f32 %v411, %v468
        %470 = vadd.xlane.f32.xlu0 %v469
        %v471 = vpop.xlane.xlu0 %470
        %v472 = vsel %vm419, %v414, 0.0
        %v473 = vadd.f32 %v413, %v472
        %474 = vadd.xlane.f32.xlu0 %v473
        %v475 = vpop.xlane.xlu0 %474
        %v476 = vsel %vm419, %v416, 0.0
        %v477 = vadd.f32 %v415, %v476
        %478 = vadd.xlane.f32.xlu0 %v477
        %v479 = vpop.xlane.xlu0 %478
        %v480 = vsel %vm419, %v418, 0.0
        %v481 = vadd.f32 %v417, %v480
        %482 = vadd.xlane.f32.xlu0 %v481
        %v483 = vpop.xlane.xlu0 %482
        %v484 = vmul.f32 %v423, 0.0051020407
        %v485 = vmul.f32 %v427, 0.0051020407
        %v486 = vmul.f32 %v431, 0.0051020407
        %v487 = vmul.f32 %v435, 0.0051020407
        %v488 = vmul.f32 %v439, 0.0051020407
        %v489 = vmul.f32 %v443, 0.0051020407
        %v490 = vmul.f32 %v447, 0.0051020407
        %v491 = vmul.f32 %v451, 0.0051020407
        %v492 = vmul.f32 %v455, 0.0051020407
        %v493 = vmul.f32 %v459, 0.0051020407
        %v494 = vmul.f32 %v463, 0.0051020407
        %v495 = vmul.f32 %v467, 0.0051020407
        %v496 = vmul.f32 %v471, 0.0051020407
        %v497 = vmul.f32 %v475, 0.0051020407
        %v498 = vmul.f32 %v479, 0.0051020407
        %v499 = vmul.f32 %v483, 0.0051020407
        %v500 = vmul.f32 %v387, %v387
        %v501 = vmul.f32 %v388, %v388
        %v502 = vmul.f32 %v389, %v389
        %v503 = vmul.f32 %v390, %v390
        %v504 = vmul.f32 %v391, %v391
        %v505 = vmul.f32 %v392, %v392
        %v506 = vmul.f32 %v393, %v393
        %v507 = vmul.f32 %v394, %v394
        %v508 = vmul.f32 %v395, %v395
        %v509 = vmul.f32 %v396, %v396
        %v510 = vmul.f32 %v397, %v397
        %v511 = vmul.f32 %v398, %v398
        %v512 = vmul.f32 %v399, %v399
        %v513 = vmul.f32 %v400, %v400
        %v514 = vmul.f32 %v401, %v401
        %v515 = vmul.f32 %v402, %v402
        %v516 = vmul.f32 %v403, %v403
        %v517 = vmul.f32 %v404, %v404
        %v518 = vmul.f32 %v405, %v405
        %v519 = vmul.f32 %v406, %v406
        %v520 = vmul.f32 %v407, %v407
        %v521 = vmul.f32 %v408, %v408
        %v522 = vmul.f32 %v409, %v409
        %v523 = vmul.f32 %v410, %v410
        %v524 = vmul.f32 %v411, %v411
        %v525 = vmul.f32 %v412, %v412
        %v526 = vmul.f32 %v413, %v413
        %v527 = vmul.f32 %v414, %v414
        %v528 = vmul.f32 %v415, %v415
        %v529 = vmul.f32 %v416, %v416
        %v530 = vmul.f32 %v417, %v417
        %v531 = vmul.f32 %v418, %v418
        %v532 = vsel %vm419, %v501, 0.0
        %v533 = vadd.f32 %v500, %v532
        %534 = vadd.xlane.f32.xlu0 %v533
        %v535 = vpop.xlane.xlu0 %534
        %v536 = vsel %vm419, %v503, 0.0
        %v537 = vadd.f32 %v502, %v536
        %538 = vadd.xlane.f32.xlu0 %v537
        %v539 = vpop.xlane.xlu0 %538
        %v540 = vsel %vm419, %v505, 0.0
        %v541 = vadd.f32 %v504, %v540
        %542 = vadd.xlane.f32.xlu0 %v541
        %v543 = vpop.xlane.xlu0 %542
        %v544 = vsel %vm419, %v507, 0.0
        %v545 = vadd.f32 %v506, %v544
        %546 = vadd.xlane.f32.xlu0 %v545
        %v547 = vpop.xlane.xlu0 %546
        %v548 = vsel %vm419, %v509, 0.0
        %v549 = vadd.f32 %v508, %v548
        %550 = vadd.xlane.f32.xlu0 %v549
        %v551 = vpop.xlane.xlu0 %550
        %v552 = vsel %vm419, %v511, 0.0
        %v553 = vadd.f32 %v510, %v552
        %554 = vadd.xlane.f32.xlu0 %v553
        %v555 = vpop.xlane.xlu0 %554
        %v556 = vsel %vm419, %v513, 0.0
        %v557 = vadd.f32 %v512, %v556
        %558 = vadd.xlane.f32.xlu0 %v557
        %v559 = vpop.xlane.xlu0 %558
        %v560 = vsel %vm419, %v515, 0.0
        %v561 = vadd.f32 %v514, %v560
        %562 = vadd.xlane.f32.xlu0 %v561
        %v563 = vpop.xlane.xlu0 %562
        %v564 = vsel %vm419, %v517, 0.0
        %v565 = vadd.f32 %v516, %v564
        %566 = vadd.xlane.f32.xlu0 %v565
        %v567 = vpop.xlane.xlu0 %566
        %v568 = vsel %vm419, %v519, 0.0
        %v569 = vadd.f32 %v518, %v568
        %570 = vadd.xlane.f32.xlu0 %v569
        %v571 = vpop.xlane.xlu0 %570
        %v572 = vsel %vm419, %v521, 0.0
        %v573 = vadd.f32 %v520, %v572
        %574 = vadd.xlane.f32.xlu0 %v573
        %v575 = vpop.xlane.xlu0 %574
        %v576 = vsel %vm419, %v523, 0.0
        %v577 = vadd.f32 %v522, %v576
        %578 = vadd.xlane.f32.xlu0 %v577
        %v579 = vpop.xlane.xlu0 %578
        %v580 = vsel %vm419, %v525, 0.0
        %v581 = vadd.f32 %v524, %v580
        %582 = vadd.xlane.f32.xlu0 %v581
        %v583 = vpop.xlane.xlu0 %582
        %v584 = vsel %vm419, %v527, 0.0
        %v585 = vadd.f32 %v526, %v584
        %586 = vadd.xlane.f32.xlu0 %v585
        %v587 = vpop.xlane.xlu0 %586
        %v588 = vsel %vm419, %v529, 0.0
        %v589 = vadd.f32 %v528, %v588
        %590 = vadd.xlane.f32.xlu0 %v589
        %v591 = vpop.xlane.xlu0 %590
        %v592 = vsel %vm419, %v531, 0.0
        %v593 = vadd.f32 %v530, %v592
        %594 = vadd.xlane.f32.xlu0 %v593
        %v595 = vpop.xlane.xlu0 %594
        %v596 = vmul.f32 %v535, 0.0051020407
        %v597 = vmul.f32 %v539, 0.0051020407
        %v598 = vmul.f32 %v543, 0.0051020407
        %v599 = vmul.f32 %v547, 0.0051020407
        %v600 = vmul.f32 %v551, 0.0051020407
        %v601 = vmul.f32 %v555, 0.0051020407
        %v602 = vmul.f32 %v559, 0.0051020407
        %v603 = vmul.f32 %v563, 0.0051020407
        %v604 = vmul.f32 %v567, 0.0051020407
        %v605 = vmul.f32 %v571, 0.0051020407
        %v606 = vmul.f32 %v575, 0.0051020407
        %v607 = vmul.f32 %v579, 0.0051020407
        %v608 = vmul.f32 %v583, 0.0051020407
        %v609 = vmul.f32 %v587, 0.0051020407
        %v610 = vmul.f32 %v591, 0.0051020407
        %v611 = vmul.f32 %v595, 0.0051020407
        %v612 = vmul.f32 %v484, %v484
        %v613 = vmul.f32 %v485, %v485
        %v614 = vmul.f32 %v486, %v486
        %v615 = vmul.f32 %v487, %v487
        %v616 = vmul.f32 %v488, %v488
        %v617 = vmul.f32 %v489, %v489
        %v618 = vmul.f32 %v490, %v490
        %v619 = vmul.f32 %v491, %v491
        %v620 = vmul.f32 %v492, %v492
        %v621 = vmul.f32 %v493, %v493
        %v622 = vmul.f32 %v494, %v494
        %v623 = vmul.f32 %v495, %v495
        %v624 = vmul.f32 %v496, %v496
        %v625 = vmul.f32 %v497, %v497
        %v626 = vmul.f32 %v498, %v498
        %v627 = vmul.f32 %v499, %v499
        %v628 = vsub.f32 %v596, %v612
        %v629 = vsub.f32 %v597, %v613
        %v630 = vsub.f32 %v598, %v614
        %v631 = vsub.f32 %v599, %v615
        %v632 = vsub.f32 %v600, %v616
        %v633 = vsub.f32 %v601, %v617
        %v634 = vsub.f32 %v602, %v618
        %v635 = vsub.f32 %v603, %v619
        %v636 = vsub.f32 %v604, %v620
        %v637 = vsub.f32 %v605, %v621
        %v638 = vsub.f32 %v606, %v622
        %v639 = vsub.f32 %v607, %v623
        %v640 = vsub.f32 %v608, %v624
        %v641 = vsub.f32 %v609, %v625
        %v642 = vsub.f32 %v610, %v626
        %v643 = vsub.f32 %v611, %v627
        %v644 = vmax.f32 %v628, 0.0
        %v645 = vmax.f32 %v629, 0.0
        %v646 = vmax.f32 %v630, 0.0
        %v647 = vmax.f32 %v631, 0.0
        %v648 = vmax.f32 %v632, 0.0
        %v649 = vmax.f32 %v633, 0.0
        %v650 = vmax.f32 %v634, 0.0
        %v651 = vmax.f32 %v635, 0.0
        %v652 = vmax.f32 %v636, 0.0
        %v653 = vmax.f32 %v637, 0.0
        %v654 = vmax.f32 %v638, 0.0
        %v655 = vmax.f32 %v639, 0.0
        %v656 = vmax.f32 %v640, 0.0
        %v657 = vmax.f32 %v641, 0.0
        %v658 = vmax.f32 %v642, 0.0
        %v659 = vmax.f32 %v643, 0.0
        %s660 = smul.u32 %s379, 128
        %s661 = scalar_lea.vmem %s265, %s660
        %v662 = vld [vmem:[%s661] sm:$0xff]
        %v663 = vld [vmem:[%s661 + $0x8] sm:$0xff]
        %v664 = vld [vmem:[%s661 + $0x10] sm:$0xff]
        %v665 = vld [vmem:[%s661 + $0x18] sm:$0xff]
        %v666 = vld [vmem:[%s661 + $0x20] sm:$0xff]
        %v667 = vld [vmem:[%s661 + $0x28] sm:$0xff]
        %v668 = vld [vmem:[%s661 + $0x30] sm:$0xff]
        %v669 = vld [vmem:[%s661 + $0x38] sm:$0xff]
        %v670 = vld [vmem:[%s661 + $0x40] sm:$0xff]
        %v671 = vld [vmem:[%s661 + $0x48] sm:$0xff]
        %v672 = vld [vmem:[%s661 + $0x50] sm:$0xff]
        %v673 = vld [vmem:[%s661 + $0x58] sm:$0xff]
        %v674 = vld [vmem:[%s661 + $0x60] sm:$0xff]
        %v675 = vld [vmem:[%s661 + $0x68] sm:$0xff]
        %v676 = vld [vmem:[%s661 + $0x70] sm:$0xff]
        %v677 = vld [vmem:[%s661 + $0x78] sm:$0xff]
        %v678 = vadd.f32 %v644, 1e-05
        %v679 = vadd.f32 %v645, 1e-05
        %v680 = vadd.f32 %v646, 1e-05
        %v681 = vadd.f32 %v647, 1e-05
        %v682 = vadd.f32 %v648, 1e-05
        %v683 = vadd.f32 %v649, 1e-05
        %v684 = vadd.f32 %v650, 1e-05
        %v685 = vadd.f32 %v651, 1e-05
        %v686 = vadd.f32 %v652, 1e-05
        %v687 = vadd.f32 %v653, 1e-05
        %v688 = vadd.f32 %v654, 1e-05
        %v689 = vadd.f32 %v655, 1e-05
        %v690 = vadd.f32 %v656, 1e-05
        %v691 = vadd.f32 %v657, 1e-05
        %v692 = vadd.f32 %v658, 1e-05
        %v693 = vadd.f32 %v659, 1e-05
        %v694 = vrsqrt.pop %v678
        %v695 = vrsqrt.pop %v679
        %v696 = vrsqrt.pop %v680
        %v697 = vrsqrt.pop %v681
        %v698 = vrsqrt.pop %v682
        %v699 = vrsqrt.pop %v683
        %v700 = vrsqrt.pop %v684
        %v701 = vrsqrt.pop %v685
        %v702 = vrsqrt.pop %v686
        %v703 = vrsqrt.pop %v687
        %v704 = vrsqrt.pop %v688
        %v705 = vrsqrt.pop %v689
        %v706 = vrsqrt.pop %v690
        %v707 = vrsqrt.pop %v691
        %v708 = vrsqrt.pop %v692
        %v709 = vrsqrt.pop %v693
        %v710 = vmul.f32 %v662, %v694
        %v711 = vmul.f32 %v663, %v695
        %v712 = vmul.f32 %v664, %v696
        %v713 = vmul.f32 %v665, %v697
        %v714 = vmul.f32 %v666, %v698
        %v715 = vmul.f32 %v667, %v699
        %v716 = vmul.f32 %v668, %v700
        %v717 = vmul.f32 %v669, %v701
        %v718 = vmul.f32 %v670, %v702
        %v719 = vmul.f32 %v671, %v703
        %v720 = vmul.f32 %v672, %v704
        %v721 = vmul.f32 %v673, %v705
        %v722 = vmul.f32 %v674, %v706
        %v723 = vmul.f32 %v675, %v707
        %v724 = vmul.f32 %v676, %v708
        %v725 = vmul.f32 %v677, %v709
        %s726 = scalar_lea.vmem %s272, %s660
        %v727 = vld [vmem:[%s726] sm:$0xff]
        %v728 = vld [vmem:[%s726 + $0x8] sm:$0xff]
        %v729 = vld [vmem:[%s726 + $0x10] sm:$0xff]
        %v730 = vld [vmem:[%s726 + $0x18] sm:$0xff]
        %v731 = vld [vmem:[%s726 + $0x20] sm:$0xff]
        %v732 = vld [vmem:[%s726 + $0x28] sm:$0xff]
        %v733 = vld [vmem:[%s726 + $0x30] sm:$0xff]
        %v734 = vld [vmem:[%s726 + $0x38] sm:$0xff]
        %v735 = vld [vmem:[%s726 + $0x40] sm:$0xff]
        %v736 = vld [vmem:[%s726 + $0x48] sm:$0xff]
        %v737 = vld [vmem:[%s726 + $0x50] sm:$0xff]
        %v738 = vld [vmem:[%s726 + $0x58] sm:$0xff]
        %v739 = vld [vmem:[%s726 + $0x60] sm:$0xff]
        %v740 = vld [vmem:[%s726 + $0x68] sm:$0xff]
        %v741 = vld [vmem:[%s726 + $0x70] sm:$0xff]
        %v742 = vld [vmem:[%s726 + $0x78] sm:$0xff]
        %v743 = vmul.f32 %v484, %v710
        %v744 = vmul.f32 %v485, %v711
        %v745 = vmul.f32 %v486, %v712
        %v746 = vmul.f32 %v487, %v713
        %v747 = vmul.f32 %v488, %v714
        %v748 = vmul.f32 %v489, %v715
        %v749 = vmul.f32 %v490, %v716
        %v750 = vmul.f32 %v491, %v717
        %v751 = vmul.f32 %v492, %v718
        %v752 = vmul.f32 %v493, %v719
        %v753 = vmul.f32 %v494, %v720
        %v754 = vmul.f32 %v495, %v721
        %v755 = vmul.f32 %v496, %v722
        %v756 = vmul.f32 %v497, %v723
        %v757 = vmul.f32 %v498, %v724
        %v758 = vmul.f32 %v499, %v725
        %v759 = vsub.f32 %v727, %v743
        %v760 = vsub.f32 %v728, %v744
        %v761 = vsub.f32 %v729, %v745
        %v762 = vsub.f32 %v730, %v746
        %v763 = vsub.f32 %v731, %v747
        %v764 = vsub.f32 %v732, %v748
        %v765 = vsub.f32 %v733, %v749
        %v766 = vsub.f32 %v734, %v750
        %v767 = vsub.f32 %v735, %v751
        %v768 = vsub.f32 %v736, %v752
        %v769 = vsub.f32 %v737, %v753
        %v770 = vsub.f32 %v738, %v754
        %v771 = vsub.f32 %v739, %v755
        %v772 = vsub.f32 %v740, %v756
        %v773 = vsub.f32 %v741, %v757
        %v774 = vsub.f32 %v742, %v758
        %776 = vset.pattern.permute.xlu0 0
        %777 = vperm.xlu0 %776, %v710
        %v778 = vpop.permute.xlu0 %777
        %781 = vset.pattern.permute.xlu0 0
        %782 = vperm.xlu0 %781, %v711
        %v783 = vpop.permute.xlu0 %782
        %786 = vset.pattern.permute.xlu0 0
        %787 = vperm.xlu0 %786, %v712
        %v788 = vpop.permute.xlu0 %787
        %791 = vset.pattern.permute.xlu0 0
        %792 = vperm.xlu0 %791, %v713
        %v793 = vpop.permute.xlu0 %792
        %796 = vset.pattern.permute.xlu0 0
        %797 = vperm.xlu0 %796, %v714
        %v798 = vpop.permute.xlu0 %797
        %801 = vset.pattern.permute.xlu0 0
        %802 = vperm.xlu0 %801, %v715
        %v803 = vpop.permute.xlu0 %802
        %806 = vset.pattern.permute.xlu0 0
        %807 = vperm.xlu0 %806, %v716
        %v808 = vpop.permute.xlu0 %807
        %811 = vset.pattern.permute.xlu0 0
        %812 = vperm.xlu0 %811, %v717
        %v813 = vpop.permute.xlu0 %812
        %816 = vset.pattern.permute.xlu0 0
        %817 = vperm.xlu0 %816, %v718
        %v818 = vpop.permute.xlu0 %817
        %821 = vset.pattern.permute.xlu0 0
        %822 = vperm.xlu0 %821, %v719
        %v823 = vpop.permute.xlu0 %822
        %826 = vset.pattern.permute.xlu0 0
        %827 = vperm.xlu0 %826, %v720
        %v828 = vpop.permute.xlu0 %827
        %831 = vset.pattern.permute.xlu0 0
        %832 = vperm.xlu0 %831, %v721
        %v833 = vpop.permute.xlu0 %832
        %836 = vset.pattern.permute.xlu0 0
        %837 = vperm.xlu0 %836, %v722
        %v838 = vpop.permute.xlu0 %837
        %841 = vset.pattern.permute.xlu0 0
        %842 = vperm.xlu0 %841, %v723
        %v843 = vpop.permute.xlu0 %842
        %846 = vset.pattern.permute.xlu0 0
        %847 = vperm.xlu0 %846, %v724
        %v848 = vpop.permute.xlu0 %847
        %851 = vset.pattern.permute.xlu0 0
        %852 = vperm.xlu0 %851, %v725
        %v853 = vpop.permute.xlu0 %852
        %v855 = vmul.f32 %v387, %v778
        %v856 = vmul.f32 %v388, %v778
        %v857 = vmul.f32 %v389, %v783
        %v858 = vmul.f32 %v390, %v783
        %v859 = vmul.f32 %v391, %v788
        %v860 = vmul.f32 %v392, %v788
        %v861 = vmul.f32 %v393, %v793
        %v862 = vmul.f32 %v394, %v793
        %v863 = vmul.f32 %v395, %v798
        %v864 = vmul.f32 %v396, %v798
        %v865 = vmul.f32 %v397, %v803
        %v866 = vmul.f32 %v398, %v803
        %v867 = vmul.f32 %v399, %v808
        %v868 = vmul.f32 %v400, %v808
        %v869 = vmul.f32 %v401, %v813
        %v870 = vmul.f32 %v402, %v813
        %v871 = vmul.f32 %v403, %v818
        %v872 = vmul.f32 %v404, %v818
        %v873 = vmul.f32 %v405, %v823
        %v874 = vmul.f32 %v406, %v823
        %v875 = vmul.f32 %v407, %v828
        %v876 = vmul.f32 %v408, %v828
        %v877 = vmul.f32 %v409, %v833
        %v878 = vmul.f32 %v410, %v833
        %v879 = vmul.f32 %v411, %v838
        %v880 = vmul.f32 %v412, %v838
        %v881 = vmul.f32 %v413, %v843
        %v882 = vmul.f32 %v414, %v843
        %v883 = vmul.f32 %v415, %v848
        %v884 = vmul.f32 %v416, %v848
        %v885 = vmul.f32 %v417, %v853
        %v886 = vmul.f32 %v418, %v853
        %888 = vset.pattern.permute.xlu0 0
        %889 = vperm.xlu0 %888, %v759
        %v890 = vpop.permute.xlu0 %889
        %893 = vset.pattern.permute.xlu0 0
        %894 = vperm.xlu0 %893, %v760
        %v895 = vpop.permute.xlu0 %894
        %898 = vset.pattern.permute.xlu0 0
        %899 = vperm.xlu0 %898, %v761
        %v900 = vpop.permute.xlu0 %899
        %903 = vset.pattern.permute.xlu0 0
        %904 = vperm.xlu0 %903, %v762
        %v905 = vpop.permute.xlu0 %904
        %908 = vset.pattern.permute.xlu0 0
        %909 = vperm.xlu0 %908, %v763
        %v910 = vpop.permute.xlu0 %909
        %913 = vset.pattern.permute.xlu0 0
        %914 = vperm.xlu0 %913, %v764
        %v915 = vpop.permute.xlu0 %914
        %918 = vset.pattern.permute.xlu0 0
        %919 = vperm.xlu0 %918, %v765
        %v920 = vpop.permute.xlu0 %919
        %923 = vset.pattern.permute.xlu0 0
        %924 = vperm.xlu0 %923, %v766
        %v925 = vpop.permute.xlu0 %924
        %928 = vset.pattern.permute.xlu0 0
        %929 = vperm.xlu0 %928, %v767
        %v930 = vpop.permute.xlu0 %929
        %933 = vset.pattern.permute.xlu0 0
        %934 = vperm.xlu0 %933, %v768
        %v935 = vpop.permute.xlu0 %934
        %938 = vset.pattern.permute.xlu0 0
        %939 = vperm.xlu0 %938, %v769
        %v940 = vpop.permute.xlu0 %939
        %943 = vset.pattern.permute.xlu0 0
        %944 = vperm.xlu0 %943, %v770
        %v945 = vpop.permute.xlu0 %944
        %948 = vset.pattern.permute.xlu0 0
        %949 = vperm.xlu0 %948, %v771
        %v950 = vpop.permute.xlu0 %949
        %953 = vset.pattern.permute.xlu0 0
        %954 = vperm.xlu0 %953, %v772
        %v955 = vpop.permute.xlu0 %954
        %958 = vset.pattern.permute.xlu0 0
        %959 = vperm.xlu0 %958, %v773
        %v960 = vpop.permute.xlu0 %959
        %963 = vset.pattern.permute.xlu0 0
        %964 = vperm.xlu0 %963, %v774
        %v965 = vpop.permute.xlu0 %964
        %v967 = vadd.f32 %v855, %v890
        %v968 = vadd.f32 %v856, %v890
        %v969 = vadd.f32 %v857, %v895
        %v970 = vadd.f32 %v858, %v895
        %v971 = vadd.f32 %v859, %v900
        %v972 = vadd.f32 %v860, %v900
        %v973 = vadd.f32 %v861, %v905
        %v974 = vadd.f32 %v862, %v905
        %v975 = vadd.f32 %v863, %v910
        %v976 = vadd.f32 %v864, %v910
        %v977 = vadd.f32 %v865, %v915
        %v978 = vadd.f32 %v866, %v915
        %v979 = vadd.f32 %v867, %v920
        %v980 = vadd.f32 %v868, %v920
        %v981 = vadd.f32 %v869, %v925
        %v982 = vadd.f32 %v870, %v925
        %v983 = vadd.f32 %v871, %v930
        %v984 = vadd.f32 %v872, %v930
        %v985 = vadd.f32 %v873, %v935
        %v986 = vadd.f32 %v874, %v935
        %v987 = vadd.f32 %v875, %v940
        %v988 = vadd.f32 %v876, %v940
        %v989 = vadd.f32 %v877, %v945
        %v990 = vadd.f32 %v878, %v945
        %v991 = vadd.f32 %v879, %v950
        %v992 = vadd.f32 %v880, %v950
        %v993 = vadd.f32 %v881, %v955
        %v994 = vadd.f32 %v882, %v955
        %v995 = vadd.f32 %v883, %v960
        %v996 = vadd.f32 %v884, %v960
        %v997 = vadd.f32 %v885, %v965
        %v998 = vadd.f32 %v886, %v965
        %v999 = vmax.f32 %v967, 0.0
        %v1000 = vmax.f32 %v968, 0.0
        %v1001 = vmax.f32 %v969, 0.0
        %v1002 = vmax.f32 %v970, 0.0
        %v1003 = vmax.f32 %v971, 0.0
        %v1004 = vmax.f32 %v972, 0.0
        %v1005 = vmax.f32 %v973, 0.0
        %v1006 = vmax.f32 %v974, 0.0
        %v1007 = vmax.f32 %v975, 0.0
        %v1008 = vmax.f32 %v976, 0.0
        %v1009 = vmax.f32 %v977, 0.0
        %v1010 = vmax.f32 %v978, 0.0
        %v1011 = vmax.f32 %v979, 0.0
        %v1012 = vmax.f32 %v980, 0.0
        %v1013 = vmax.f32 %v981, 0.0
        %v1014 = vmax.f32 %v982, 0.0
        %v1015 = vmax.f32 %v983, 0.0
        %v1016 = vmax.f32 %v984, 0.0
        %v1017 = vmax.f32 %v985, 0.0
        %v1018 = vmax.f32 %v986, 0.0
        %v1019 = vmax.f32 %v987, 0.0
        %v1020 = vmax.f32 %v988, 0.0
        %v1021 = vmax.f32 %v989, 0.0
        %v1022 = vmax.f32 %v990, 0.0
        %v1023 = vmax.f32 %v991, 0.0
        %v1024 = vmax.f32 %v992, 0.0
        %v1025 = vmax.f32 %v993, 0.0
        %v1026 = vmax.f32 %v994, 0.0
        %v1027 = vmax.f32 %v995, 0.0
        %v1028 = vmax.f32 %v996, 0.0
        %v1029 = vmax.f32 %v997, 0.0
        %v1030 = vmax.f32 %v998, 0.0
        %v1031 = vpack.c.bf16 %v1001, %v999
        %v1032 = vpack.c.bf16 %v1002, %v1000
        %v1033 = vpack.c.bf16 %v1005, %v1003
        %v1034 = vpack.c.bf16 %v1006, %v1004
        %v1035 = vpack.c.bf16 %v1009, %v1007
        %v1036 = vpack.c.bf16 %v1010, %v1008
        %v1037 = vpack.c.bf16 %v1013, %v1011
        %v1038 = vpack.c.bf16 %v1014, %v1012
        %v1039 = vpack.c.bf16 %v1017, %v1015
        %v1040 = vpack.c.bf16 %v1018, %v1016
        %v1041 = vpack.c.bf16 %v1021, %v1019
        %v1042 = vpack.c.bf16 %v1022, %v1020
        %v1043 = vpack.c.bf16 %v1025, %v1023
        %v1044 = vpack.c.bf16 %v1026, %v1024
        %v1045 = vpack.c.bf16 %v1029, %v1027
        %v1046 = vpack.c.bf16 %v1030, %v1028
        %1063 = vrot.lane.b32.xlu0 %v1031, 16
        %v1064 = vpop.permute.xlu0 %1063
        %1065 = vrot.lane.b32.xlu0 %v1032, 16
        %v1066 = vpop.permute.xlu0 %1065
        %1067 = vrot.lane.b32.xlu0 %v1033, 16
        %v1068 = vpop.permute.xlu0 %1067
        %1069 = vrot.lane.b32.xlu0 %v1034, 16
        %v1070 = vpop.permute.xlu0 %1069
        %1071 = vrot.lane.b32.xlu0 %v1035, 16
        %v1072 = vpop.permute.xlu0 %1071
        %1073 = vrot.lane.b32.xlu0 %v1036, 16
        %v1074 = vpop.permute.xlu0 %1073
        %1075 = vrot.lane.b32.xlu0 %v1037, 16
        %v1076 = vpop.permute.xlu0 %1075
        %1077 = vrot.lane.b32.xlu0 %v1038, 16
        %v1078 = vpop.permute.xlu0 %1077
        %1079 = vrot.lane.b32.xlu0 %v1039, 16
        %v1080 = vpop.permute.xlu0 %1079
        %1081 = vrot.lane.b32.xlu0 %v1040, 16
        %v1082 = vpop.permute.xlu0 %1081
        %1083 = vrot.lane.b32.xlu0 %v1041, 16
        %v1084 = vpop.permute.xlu0 %1083
        %1085 = vrot.lane.b32.xlu0 %v1042, 16
        %v1086 = vpop.permute.xlu0 %1085
        %1087 = vrot.lane.b32.xlu0 %v1043, 16
        %v1088 = vpop.permute.xlu0 %1087
        %1089 = vrot.lane.b32.xlu0 %v1044, 16
        %v1090 = vpop.permute.xlu0 %1089
        %1091 = vrot.lane.b32.xlu0 %v1045, 16
        %v1092 = vpop.permute.xlu0 %1091
        %1093 = vrot.lane.b32.xlu0 %v1046, 16
        %v1094 = vpop.permute.xlu0 %1093
        %vm1095 = vcmask 130048
        %v1096 = vsel %vm1095, %v1064, %v1066
        %v1097 = vsel %vm1095, %v1068, %v1070
        %v1098 = vsel %vm1095, %v1072, %v1074
        %v1099 = vsel %vm1095, %v1076, %v1078
        %v1100 = vsel %vm1095, %v1080, %v1082
        %v1101 = vsel %vm1095, %v1084, %v1086
        %v1102 = vsel %vm1095, %v1088, %v1090
        %v1103 = vsel %vm1095, %v1092, %v1094
        %vm1120 = vcmask 1047680
        %1121 = vst.msk [vmem:[#allocation2] sm:$0xff] %vm1120, %v1064
        %vm1122 = vcmask 687104
        %1123 = vst.msk [vmem:[#allocation2 + $0x8] sm:$0xff] %vm1122, %v1096
        %1124 = vst.msk [vmem:[#allocation2 + $0x10] sm:$0xff] %vm1120, %v1068
        %1125 = vst.msk [vmem:[#allocation2 + $0x18] sm:$0xff] %vm1122, %v1097
        %1126 = vst.msk [vmem:[#allocation2 + $0x20] sm:$0xff] %vm1120, %v1072
        %1127 = vst.msk [vmem:[#allocation2 + $0x28] sm:$0xff] %vm1122, %v1098
        %1128 = vst.msk [vmem:[#allocation2 + $0x30] sm:$0xff] %vm1120, %v1076
        %1129 = vst.msk [vmem:[#allocation2 + $0x38] sm:$0xff] %vm1122, %v1099
        %1130 = vst.msk [vmem:[#allocation2 + $0x40] sm:$0xff] %vm1120, %v1080
        %1131 = vst.msk [vmem:[#allocation2 + $0x48] sm:$0xff] %vm1122, %v1100
        %1132 = vst.msk [vmem:[#allocation2 + $0x50] sm:$0xff] %vm1120, %v1084
        %1133 = vst.msk [vmem:[#allocation2 + $0x58] sm:$0xff] %vm1122, %v1101
        %1134 = vst.msk [vmem:[#allocation2 + $0x60] sm:$0xff] %vm1120, %v1088
        %1135 = vst.msk [vmem:[#allocation2 + $0x68] sm:$0xff] %vm1122, %v1102
        %1136 = vst.msk [vmem:[#allocation2 + $0x70] sm:$0xff] %vm1120, %v1092
        %1137 = vst.msk [vmem:[#allocation2 + $0x78] sm:$0xff] %vm1122, %v1103
        %v1138 = vsel %vm374, 1, 0
        %v1139 = vsel %vm375, 1, 0
        %vm1140 = vcmp.eq.s32.totalorder %v1138, 1
        %vm1141 = vcmp.eq.s32.totalorder %v1139, 1
        %vm1142 = vmpackc.low %vm1141, %vm1140
        %v1143 = vsel %vm1142, 65537, 0
        %v1144 = vlaneseq
        %v1145 = vshrl.u32 %v1144, 7
        %v1146 = vsub.s32 0, %v1145
        %v1147 = vrot.slane %v1143, %v1146
        %v1148 = vlaneseq
        %v1149 = vshrl.u32 %v1148, 7
        %v1150 = vsub.s32 4, %v1149
        %v1151 = vrot.slane %v1143, %v1150
        %vm1152 = vcmp.ne.s16.totalorder %v1147, 0
        %vm1153 = vcmp.ne.s16.totalorder %v1151, 0
        %v1154 = vsel %vm1152, %v1031, 0
        %v1155 = vsel %vm1153, %v1032, 0
        %v1156 = vsel %vm1152, %v1033, 0
        %v1157 = vsel %vm1153, %v1034, 0
        %v1158 = vsel %vm1152, %v1035, 0
        %v1159 = vsel %vm1153, %v1036, 0
        %v1160 = vsel %vm1152, %v1037, 0
        %v1161 = vsel %vm1153, %v1038, 0
        %v1162 = vsel %vm1152, %v1039, 0
        %v1163 = vsel %vm1153, %v1040, 0
        %v1164 = vsel %vm1152, %v1041, 0
        %v1165 = vsel %vm1153, %v1042, 0
        %v1166 = vsel %vm1152, %v1043, 0
        %v1167 = vsel %vm1153, %v1044, 0
        %v1168 = vsel %vm1152, %v1045, 0
        %v1169 = vsel %vm1153, %v1046, 0
        %1186 = vrot.lane.b32.xlu0 %v1154, 16
        %v1187 = vpop.permute.xlu0 %1186
        %1188 = vrot.lane.b32.xlu0 %v1155, 16
        %v1189 = vpop.permute.xlu0 %1188
        %1190 = vrot.lane.b32.xlu0 %v1156, 16
        %v1191 = vpop.permute.xlu0 %1190
        %1192 = vrot.lane.b32.xlu0 %v1157, 16
        %v1193 = vpop.permute.xlu0 %1192
        %1194 = vrot.lane.b32.xlu0 %v1158, 16
        %v1195 = vpop.permute.xlu0 %1194
        %1196 = vrot.lane.b32.xlu0 %v1159, 16
        %v1197 = vpop.permute.xlu0 %1196
        %1198 = vrot.lane.b32.xlu0 %v1160, 16
        %v1199 = vpop.permute.xlu0 %1198
        %1200 = vrot.lane.b32.xlu0 %v1161, 16
        %v1201 = vpop.permute.xlu0 %1200
        %1202 = vrot.lane.b32.xlu0 %v1162, 16
        %v1203 = vpop.permute.xlu0 %1202
        %1204 = vrot.lane.b32.xlu0 %v1163, 16
        %v1205 = vpop.permute.xlu0 %1204
        %1206 = vrot.lane.b32.xlu0 %v1164, 16
        %v1207 = vpop.permute.xlu0 %1206
        %1208 = vrot.lane.b32.xlu0 %v1165, 16
        %v1209 = vpop.permute.xlu0 %1208
        %1210 = vrot.lane.b32.xlu0 %v1166, 16
        %v1211 = vpop.permute.xlu0 %1210
        %1212 = vrot.lane.b32.xlu0 %v1167, 16
        %v1213 = vpop.permute.xlu0 %1212
        %1214 = vrot.lane.b32.xlu0 %v1168, 16
        %v1215 = vpop.permute.xlu0 %1214
        %1216 = vrot.lane.b32.xlu0 %v1169, 16
        %v1217 = vpop.permute.xlu0 %1216
        %v1218 = vsel %vm1095, %v1187, %v1189
        %v1219 = vsel %vm1095, %v1191, %v1193
        %v1220 = vsel %vm1095, %v1195, %v1197
        %v1221 = vsel %vm1095, %v1199, %v1201
        %v1222 = vsel %vm1095, %v1203, %v1205
        %v1223 = vsel %vm1095, %v1207, %v1209
        %v1224 = vsel %vm1095, %v1211, %v1213
        %v1225 = vsel %vm1095, %v1215, %v1217
        %s1242 = scalar_lea.vmem [#allocation2], 128
        %1243 = vst.msk [vmem:[%s1242] sm:$0xff] %vm1120, %v1187
        %1244 = vst.msk [vmem:[%s1242 + $0x8] sm:$0xff] %vm1122, %v1218
        %1245 = vst.msk [vmem:[%s1242 + $0x10] sm:$0xff] %vm1120, %v1191
        %1246 = vst.msk [vmem:[%s1242 + $0x18] sm:$0xff] %vm1122, %v1219
        %1247 = vst.msk [vmem:[%s1242 + $0x20] sm:$0xff] %vm1120, %v1195
        %1248 = vst.msk [vmem:[%s1242 + $0x28] sm:$0xff] %vm1122, %v1220
        %1249 = vst.msk [vmem:[%s1242 + $0x30] sm:$0xff] %vm1120, %v1199
        %1250 = vst.msk [vmem:[%s1242 + $0x38] sm:$0xff] %vm1122, %v1221
        %1251 = vst.msk [vmem:[%s1242 + $0x40] sm:$0xff] %vm1120, %v1203
        %1252 = vst.msk [vmem:[%s1242 + $0x48] sm:$0xff] %vm1122, %v1222
        %1253 = vst.msk [vmem:[%s1242 + $0x50] sm:$0xff] %vm1120, %v1207
        %1254 = vst.msk [vmem:[%s1242 + $0x58] sm:$0xff] %vm1122, %v1223
        %1255 = vst.msk [vmem:[%s1242 + $0x60] sm:$0xff] %vm1120, %v1211
        %1256 = vst.msk [vmem:[%s1242 + $0x68] sm:$0xff] %vm1122, %v1224
        %1257 = vst.msk [vmem:[%s1242 + $0x70] sm:$0xff] %vm1120, %v1215
        %1258 = vst.msk [vmem:[%s1242 + $0x78] sm:$0xff] %vm1122, %v1225
        %v1259 = vsel %vm376, 1, 0
        %v1260 = vsel %vm377, 1, 0
        %vm1261 = vcmp.eq.s32.totalorder %v1259, 1
        %vm1262 = vcmp.eq.s32.totalorder %v1260, 1
        %vm1263 = vmpackc.low %vm1262, %vm1261
        %v1264 = vsel %vm1263, 65537, 0
        %v1265 = vlaneseq
        %v1266 = vshrl.u32 %v1265, 7
        %v1267 = vsub.s32 0, %v1266
        %v1268 = vrot.slane %v1264, %v1267
        %v1269 = vlaneseq
        %v1270 = vshrl.u32 %v1269, 7
        %v1271 = vsub.s32 4, %v1270
        %v1272 = vrot.slane %v1264, %v1271
        %vm1273 = vcmp.ne.s16.totalorder %v1268, 0
        %vm1274 = vcmp.ne.s16.totalorder %v1272, 0
        %v1275 = vsel %vm1273, %v1031, 0
        %v1276 = vsel %vm1274, %v1032, 0
        %v1277 = vsel %vm1273, %v1033, 0
        %v1278 = vsel %vm1274, %v1034, 0
        %v1279 = vsel %vm1273, %v1035, 0
        %v1280 = vsel %vm1274, %v1036, 0
        %v1281 = vsel %vm1273, %v1037, 0
        %v1282 = vsel %vm1274, %v1038, 0
        %v1283 = vsel %vm1273, %v1039, 0
        %v1284 = vsel %vm1274, %v1040, 0
        %v1285 = vsel %vm1273, %v1041, 0
        %v1286 = vsel %vm1274, %v1042, 0
        %v1287 = vsel %vm1273, %v1043, 0
        %v1288 = vsel %vm1274, %v1044, 0
        %v1289 = vsel %vm1273, %v1045, 0
        %v1290 = vsel %vm1274, %v1046, 0
        %1307 = vrot.lane.b32.xlu0 %v1275, 16
        %v1308 = vpop.permute.xlu0 %1307
        %1309 = vrot.lane.b32.xlu0 %v1276, 16
        %v1310 = vpop.permute.xlu0 %1309
        %1311 = vrot.lane.b32.xlu0 %v1277, 16
        %v1312 = vpop.permute.xlu0 %1311
        %1313 = vrot.lane.b32.xlu0 %v1278, 16
        %v1314 = vpop.permute.xlu0 %1313
        %1315 = vrot.lane.b32.xlu0 %v1279, 16
        %v1316 = vpop.permute.xlu0 %1315
        %1317 = vrot.lane.b32.xlu0 %v1280, 16
        %v1318 = vpop.permute.xlu0 %1317
        %1319 = vrot.lane.b32.xlu0 %v1281, 16
        %v1320 = vpop.permute.xlu0 %1319
        %1321 = vrot.lane.b32.xlu0 %v1282, 16
        %v1322 = vpop.permute.xlu0 %1321
        %1323 = vrot.lane.b32.xlu0 %v1283, 16
        %v1324 = vpop.permute.xlu0 %1323
        %1325 = vrot.lane.b32.xlu0 %v1284, 16
        %v1326 = vpop.permute.xlu0 %1325
        %1327 = vrot.lane.b32.xlu0 %v1285, 16
        %v1328 = vpop.permute.xlu0 %1327
        %1329 = vrot.lane.b32.xlu0 %v1286, 16
        %v1330 = vpop.permute.xlu0 %1329
        %1331 = vrot.lane.b32.xlu0 %v1287, 16
        %v1332 = vpop.permute.xlu0 %1331
        %1333 = vrot.lane.b32.xlu0 %v1288, 16
        %v1334 = vpop.permute.xlu0 %1333
        %1335 = vrot.lane.b32.xlu0 %v1289, 16
        %v1336 = vpop.permute.xlu0 %1335
        %1337 = vrot.lane.b32.xlu0 %v1290, 16
        %v1338 = vpop.permute.xlu0 %1337
        %v1339 = vsel %vm1095, %v1308, %v1310
        %v1340 = vsel %vm1095, %v1312, %v1314
        %v1341 = vsel %vm1095, %v1316, %v1318
        %v1342 = vsel %vm1095, %v1320, %v1322
        %v1343 = vsel %vm1095, %v1324, %v1326
        %v1344 = vsel %vm1095, %v1328, %v1330
        %v1345 = vsel %vm1095, %v1332, %v1334
        %v1346 = vsel %vm1095, %v1336, %v1338
        %s1363 = scalar_lea.vmem [#allocation2], 256
        %1364 = vst.msk [vmem:[%s1363] sm:$0xff] %vm1120, %v1308
        %1365 = vst.msk [vmem:[%s1363 + $0x8] sm:$0xff] %vm1122, %v1339
        %1366 = vst.msk [vmem:[%s1363 + $0x10] sm:$0xff] %vm1120, %v1312
        %1367 = vst.msk [vmem:[%s1363 + $0x18] sm:$0xff] %vm1122, %v1340
        %1368 = vst.msk [vmem:[%s1363 + $0x20] sm:$0xff] %vm1120, %v1316
        %1369 = vst.msk [vmem:[%s1363 + $0x28] sm:$0xff] %vm1122, %v1341
        %1370 = vst.msk [vmem:[%s1363 + $0x30] sm:$0xff] %vm1120, %v1320
        %1371 = vst.msk [vmem:[%s1363 + $0x38] sm:$0xff] %vm1122, %v1342
        %1372 = vst.msk [vmem:[%s1363 + $0x40] sm:$0xff] %vm1120, %v1324
        %1373 = vst.msk [vmem:[%s1363 + $0x48] sm:$0xff] %vm1122, %v1343
        %1374 = vst.msk [vmem:[%s1363 + $0x50] sm:$0xff] %vm1120, %v1328
        %1375 = vst.msk [vmem:[%s1363 + $0x58] sm:$0xff] %vm1122, %v1344
        %1376 = vst.msk [vmem:[%s1363 + $0x60] sm:$0xff] %vm1120, %v1332
        %1377 = vst.msk [vmem:[%s1363 + $0x68] sm:$0xff] %vm1122, %v1345
        %1378 = vst.msk [vmem:[%s1363 + $0x70] sm:$0xff] %vm1120, %v1336
        %1379 = vst.msk [vmem:[%s1363 + $0x78] sm:$0xff] %vm1122, %v1346
        %v1380 = vld [vmem:[%s1242] sm:$0xff]
        %v1381 = vld [vmem:[%s1242 + $0x8] sm:$0xff]
        %v1382 = vld [vmem:[%s1242 + $0x10] sm:$0xff]
        %v1383 = vld [vmem:[%s1242 + $0x18] sm:$0xff]
        %v1384 = vld [vmem:[%s1242 + $0x20] sm:$0xff]
        %v1385 = vld [vmem:[%s1242 + $0x28] sm:$0xff]
        %v1386 = vld [vmem:[%s1242 + $0x30] sm:$0xff]
        %v1387 = vld [vmem:[%s1242 + $0x38] sm:$0xff]
        %v1388 = vld [vmem:[%s1242 + $0x40] sm:$0xff]
        %v1389 = vld [vmem:[%s1242 + $0x48] sm:$0xff]
        %v1390 = vld [vmem:[%s1242 + $0x50] sm:$0xff]
        %v1391 = vld [vmem:[%s1242 + $0x58] sm:$0xff]
        %v1392 = vld [vmem:[%s1242 + $0x60] sm:$0xff]
        %v1393 = vld [vmem:[%s1242 + $0x68] sm:$0xff]
        %v1394 = vld [vmem:[%s1242 + $0x70] sm:$0xff]
        %v1395 = vld [vmem:[%s1242 + $0x78] sm:$0xff]
        %s1396 = smul.u32 %s379, 144
        %s1397 = smul.addr %s1396, 4
        %s1398 = scalar_lea.vmem %s258, %s1397
        %v1399 = vld [vmem:[%s1398] sm:$0xf]
        %v1400 = vld [vmem:[%s1398 + $0x4] sm:$0xf]
        %v1401 = vld [vmem:[%s1398 + $0x8] sm:$0xf]
        %v1402 = vld [vmem:[%s1398 + $0xc] sm:$0xf]
        %v1403 = vld [vmem:[%s1398 + $0x10] sm:$0xf]
        %v1404 = vld [vmem:[%s1398 + $0x14] sm:$0xf]
        %v1405 = vld [vmem:[%s1398 + $0x18] sm:$0xf]
        %v1406 = vld [vmem:[%s1398 + $0x1c] sm:$0xf]
        %v1407 = vld [vmem:[%s1398 + $0x20] sm:$0xf]
        %v1408 = vld [vmem:[%s1398 + $0x24] sm:$0xf]
        %v1409 = vld [vmem:[%s1398 + $0x28] sm:$0xf]
        %v1410 = vld [vmem:[%s1398 + $0x2c] sm:$0xf]
        %v1411 = vld [vmem:[%s1398 + $0x30] sm:$0xf]
        %v1412 = vld [vmem:[%s1398 + $0x34] sm:$0xf]
        %v1413 = vld [vmem:[%s1398 + $0x38] sm:$0xf]
        %v1414 = vld [vmem:[%s1398 + $0x3c] sm:$0xf]
        %v1415 = vld [vmem:[#allocation2] sm:$0xff]
        %v1416 = vld [vmem:[#allocation2 + $0x8] sm:$0xff]
        %v1417 = vld [vmem:[#allocation2 + $0x10] sm:$0xff]
        %v1418 = vld [vmem:[#allocation2 + $0x18] sm:$0xff]
        %v1419 = vld [vmem:[#allocation2 + $0x20] sm:$0xff]
        %v1420 = vld [vmem:[#allocation2 + $0x28] sm:$0xff]
        %v1421 = vld [vmem:[#allocation2 + $0x30] sm:$0xff]
        %v1422 = vld [vmem:[#allocation2 + $0x38] sm:$0xff]
        %v1423 = vld [vmem:[#allocation2 + $0x40] sm:$0xff]
        %v1424 = vld [vmem:[#allocation2 + $0x48] sm:$0xff]
        %v1425 = vld [vmem:[#allocation2 + $0x50] sm:$0xff]
        %v1426 = vld [vmem:[#allocation2 + $0x58] sm:$0xff]
        %v1427 = vld [vmem:[#allocation2 + $0x60] sm:$0xff]
        %v1428 = vld [vmem:[#allocation2 + $0x68] sm:$0xff]
        %v1429 = vld [vmem:[#allocation2 + $0x70] sm:$0xff]
        %v1430 = vld [vmem:[#allocation2 + $0x78] sm:$0xff]
        %s1431 = sadd.s32 16, %s1396
        %s1432 = smul.addr %s1431, 4
        %s1433 = scalar_lea.vmem %s258, %s1432
        %v1434 = vld [vmem:[%s1433] sm:$0xf]
        %v1435 = vld [vmem:[%s1433 + $0x4] sm:$0xf]
        %v1436 = vld [vmem:[%s1433 + $0x8] sm:$0xf]
        %v1437 = vld [vmem:[%s1433 + $0xc] sm:$0xf]
        %v1438 = vld [vmem:[%s1433 + $0x10] sm:$0xf]
        %v1439 = vld [vmem:[%s1433 + $0x14] sm:$0xf]
        %v1440 = vld [vmem:[%s1433 + $0x18] sm:$0xf]
        %v1441 = vld [vmem:[%s1433 + $0x1c] sm:$0xf]
        %v1442 = vld [vmem:[%s1433 + $0x20] sm:$0xf]
        %v1443 = vld [vmem:[%s1433 + $0x24] sm:$0xf]
        %v1444 = vld [vmem:[%s1433 + $0x28] sm:$0xf]
        %v1445 = vld [vmem:[%s1433 + $0x2c] sm:$0xf]
        %v1446 = vld [vmem:[%s1433 + $0x30] sm:$0xf]
        %v1447 = vld [vmem:[%s1433 + $0x34] sm:$0xf]
        %v1448 = vld [vmem:[%s1433 + $0x38] sm:$0xf]
        %v1449 = vld [vmem:[%s1433 + $0x3c] sm:$0xf]
        %v1466 = vunpack.c.l.b16 %v1434
        %v1467 = vunpack.c.l.b16 %v1435
        %v1468 = vunpack.c.l.b16 %v1436
        %v1469 = vunpack.c.l.b16 %v1437
        %v1470 = vunpack.c.l.b16 %v1438
        %v1471 = vunpack.c.l.b16 %v1439
        %v1472 = vunpack.c.l.b16 %v1440
        %v1473 = vunpack.c.l.b16 %v1441
        %v1474 = vunpack.c.l.b16 %v1442
        %v1475 = vunpack.c.l.b16 %v1443
        %v1476 = vunpack.c.l.b16 %v1444
        %v1477 = vunpack.c.l.b16 %v1445
        %v1478 = vunpack.c.l.b16 %v1446
        %v1479 = vunpack.c.l.b16 %v1447
        %v1480 = vunpack.c.l.b16 %v1448
        %v1481 = vunpack.c.l.b16 %v1449
        %v1482 = vpack.c.b16 %v1467, %v1466
        %v1483 = vpack.c.b16 %v1469, %v1468
        %v1484 = vpack.c.b16 %v1471, %v1470
        %v1485 = vpack.c.b16 %v1473, %v1472
        %v1486 = vpack.c.b16 %v1475, %v1474
        %v1487 = vpack.c.b16 %v1477, %v1476
        %v1488 = vpack.c.b16 %v1479, %v1478
        %v1489 = vpack.c.b16 %v1481, %v1480
        %1514 = vrot.lane.b32.xlu0 %v1415, 126
        %v1515 = vpop.permute.xlu0 %1514
        %1516 = vrot.lane.b32.xlu0 %v1416, 126
        %v1517 = vpop.permute.xlu0 %1516
        %1518 = vrot.lane.b32.xlu0 %v1417, 126
        %v1519 = vpop.permute.xlu0 %1518
        %1520 = vrot.lane.b32.xlu0 %v1418, 126
        %v1521 = vpop.permute.xlu0 %1520
        %1522 = vrot.lane.b32.xlu0 %v1419, 126
        %v1523 = vpop.permute.xlu0 %1522
        %1524 = vrot.lane.b32.xlu0 %v1420, 126
        %v1525 = vpop.permute.xlu0 %1524
        %1526 = vrot.lane.b32.xlu0 %v1421, 126
        %v1527 = vpop.permute.xlu0 %1526
        %1528 = vrot.lane.b32.xlu0 %v1422, 126
        %v1529 = vpop.permute.xlu0 %1528
        %1530 = vrot.lane.b32.xlu0 %v1423, 126
        %v1531 = vpop.permute.xlu0 %1530
        %1532 = vrot.lane.b32.xlu0 %v1424, 126
        %v1533 = vpop.permute.xlu0 %1532
        %1534 = vrot.lane.b32.xlu0 %v1425, 126
        %v1535 = vpop.permute.xlu0 %1534
        %1536 = vrot.lane.b32.xlu0 %v1426, 126
        %v1537 = vpop.permute.xlu0 %1536
        %1538 = vrot.lane.b32.xlu0 %v1427, 126
        %v1539 = vpop.permute.xlu0 %1538
        %1540 = vrot.lane.b32.xlu0 %v1428, 126
        %v1541 = vpop.permute.xlu0 %1540
        %1542 = vrot.lane.b32.xlu0 %v1429, 126
        %v1543 = vpop.permute.xlu0 %1542
        %1544 = vrot.lane.b32.xlu0 %v1430, 126
        %v1545 = vpop.permute.xlu0 %1544
        %vm1546 = vcmask 1031168
        %v1547 = vsel %vm1546, %v1515, %v1517
        %v1548 = vsel %vm1546, %v1519, %v1521
        %v1549 = vsel %vm1546, %v1523, %v1525
        %v1550 = vsel %vm1546, %v1527, %v1529
        %v1551 = vsel %vm1546, %v1531, %v1533
        %v1552 = vsel %vm1546, %v1535, %v1537
        %v1553 = vsel %vm1546, %v1539, %v1541
        %v1554 = vsel %vm1546, %v1543, %v1545
        %1571 = vmatprep.subr.bf16.mxu0 %v1517
        %1572 = vmatpush1.bf16.msra.mxu0 %v1547
        %1573 = vmatprep.subr.bf16.mxu0 %v1521
        %1574 = vmatpush1.bf16.msra.mxu0 %v1548
        %1575 = vmatprep.subr.bf16.mxu0 %v1525
        %1576 = vmatpush1.bf16.msra.mxu0 %v1549
        %1577 = vmatprep.subr.bf16.mxu0 %v1529
        %1578 = vmatpush1.bf16.msra.mxu0 %v1550
        %1579 = vmatprep.subr.bf16.mxu0 %v1533
        %1580 = vmatpush1.bf16.msra.mxu0 %v1551
        %1581 = vmatprep.subr.bf16.mxu0 %v1537
        %1582 = vmatpush1.bf16.msra.mxu0 %v1552
        %1583 = vmatprep.subr.bf16.mxu0 %v1541
        %1584 = vmatpush1.bf16.msra.mxu0 %v1553
        %1585 = vmatprep.subr.bf16.mxu0 %v1545
        %1586 = vmatpush1.bf16.msra.mxu0 %v1554
        %1587 = vmatprep.subr.bf16.mxu0 0
        %1588 = vmatpush1.bf16.msra.mxu0 0
        %1589 = vmatprep.subr.bf16.mxu0 0
        %1590 = vmatpush1.bf16.msra.mxu0 0
        %1591 = vmatprep.subr.bf16.mxu0 0
        %1592 = vmatpush1.bf16.msra.mxu0 0
        %1593 = vmatprep.subr.bf16.mxu0 0
        %1594 = vmatpush1.bf16.msra.mxu0 0
        %1595 = vmatprep.subr.bf16.mxu0 0
        %1596 = vmatpush1.bf16.msra.mxu0 0
        %1597 = vmatprep.subr.bf16.mxu0 0
        %1598 = vmatpush1.bf16.msra.mxu0 0
        %1599 = vmatprep.subr.bf16.mxu0 0
        %1600 = vmatpush1.bf16.msra.mxu0 0
        %1601 = vmatprep.subr.bf16.mxu0 0
        %1602 = vmatpush1.bf16.msra.mxu0 0
        %1603 = vmatprep.mubr.bf16.mxu0 0
        %1604 = vmatmul.mubr.bf16.gmra.mrb[0].mxu0 %v1482
        %v1605 = vpop.f32.mrb[0].mxu0
        %v1606 = vadd.f32 0.0, %v1605
        %v1607 = vpop.f32.mrb[0].mxu0
        %v1608 = vadd.f32 0.0, %v1607
        %v1609 = vpop.f32.mrb[0].mxu0
        %v1610 = vadd.f32 0.0, %v1609
        %v1611 = vpop.f32.mrb[0].mxu0
        %v1612 = vadd.f32 0.0, %v1611
        %1613 = vmatprep.mubr.bf16.mxu0 0
        %1614 = vmatmul.mubr.bf16.gmra.mrb[0].mxu0 %v1483
        %v1615 = vpop.f32.mrb[0].mxu0
        %v1616 = vadd.f32 0.0, %v1615
        %v1617 = vpop.f32.mrb[0].mxu0
        %v1618 = vadd.f32 0.0, %v1617
        %v1619 = vpop.f32.mrb[0].mxu0
        %v1620 = vadd.f32 0.0, %v1619
        %v1621 = vpop.f32.mrb[0].mxu0
        %v1622 = vadd.f32 0.0, %v1621
        %1623 = vmatprep.mubr.bf16.mxu0 0
        %1624 = vmatmul.mubr.bf16.gmra.mrb[0].mxu0 %v1484
        %v1625 = vpop.f32.mrb[0].mxu0
        %v1626 = vadd.f32 0.0, %v1625
        %v1627 = vpop.f32.mrb[0].mxu0
        %v1628 = vadd.f32 0.0, %v1627
        %v1629 = vpop.f32.mrb[0].mxu0
        %v1630 = vadd.f32 0.0, %v1629
        %v1631 = vpop.f32.mrb[0].mxu0
        %v1632 = vadd.f32 0.0, %v1631
        %1633 = vmatprep.mubr.bf16.mxu0 0
        %1634 = vmatmul.mubr.bf16.gmra.mrb[0].mxu0 %v1485
        %v1635 = vpop.f32.mrb[0].mxu0
        %v1636 = vadd.f32 0.0, %v1635
        %v1637 = vpop.f32.mrb[0].mxu0
        %v1638 = vadd.f32 0.0, %v1637
        %v1639 = vpop.f32.mrb[0].mxu0
        %v1640 = vadd.f32 0.0, %v1639
        %v1641 = vpop.f32.mrb[0].mxu0
        %v1642 = vadd.f32 0.0, %v1641
        %1643 = vmatprep.mubr.bf16.mxu0 0
        %1644 = vmatmul.mubr.bf16.gmra.mrb[0].mxu0 %v1486
        %v1645 = vpop.f32.mrb[0].mxu0
        %v1646 = vadd.f32 0.0, %v1645
        %v1647 = vpop.f32.mrb[0].mxu0
        %v1648 = vadd.f32 0.0, %v1647
        %v1649 = vpop.f32.mrb[0].mxu0
        %v1650 = vadd.f32 0.0, %v1649
        %v1651 = vpop.f32.mrb[0].mxu0
        %v1652 = vadd.f32 0.0, %v1651
        %1653 = vmatprep.mubr.bf16.mxu0 0
        %1654 = vmatmul.mubr.bf16.gmra.mrb[0].mxu0 %v1487
        %v1655 = vpop.f32.mrb[0].mxu0
        %v1656 = vadd.f32 0.0, %v1655
        %v1657 = vpop.f32.mrb[0].mxu0
        %v1658 = vadd.f32 0.0, %v1657
        %v1659 = vpop.f32.mrb[0].mxu0
        %v1660 = vadd.f32 0.0, %v1659
        %v1661 = vpop.f32.mrb[0].mxu0
        %v1662 = vadd.f32 0.0, %v1661
        %1663 = vmatprep.mubr.bf16.mxu0 0
        %1664 = vmatmul.mubr.bf16.gmra.mrb[0].mxu0 %v1488
        %v1665 = vpop.f32.mrb[0].mxu0
        %v1666 = vadd.f32 0.0, %v1665
        %v1667 = vpop.f32.mrb[0].mxu0
        %v1668 = vadd.f32 0.0, %v1667
        %v1669 = vpop.f32.mrb[0].mxu0
        %v1670 = vadd.f32 0.0, %v1669
        %v1671 = vpop.f32.mrb[0].mxu0
        %v1672 = vadd.f32 0.0, %v1671
        %1673 = vmatprep.mubr.bf16.mxu0 0
        %1674 = vmatmul.mubr.bf16.gmra.mrb[0].mxu0 %v1489
        %v1675 = vpop.f32.mrb[0].mxu0
        %v1676 = vadd.f32 0.0, %v1675
        %v1677 = vpop.f32.mrb[0].mxu0
        %v1678 = vadd.f32 0.0, %v1677
        %v1679 = vpop.f32.mrb[0].mxu0
        %v1680 = vadd.f32 0.0, %v1679
        %v1681 = vpop.f32.mrb[0].mxu0
        %v1682 = vadd.f32 0.0, %v1681
        %1683 = vdwg.mxu0
        %v1700 = vunpack.c.l.b16 %v1399
        %v1701 = vunpack.c.l.b16 %v1400
        %v1702 = vunpack.c.l.b16 %v1401
        %v1703 = vunpack.c.l.b16 %v1402
        %v1704 = vunpack.c.l.b16 %v1403
        %v1705 = vunpack.c.l.b16 %v1404
        %v1706 = vunpack.c.l.b16 %v1405
        %v1707 = vunpack.c.l.b16 %v1406
        %v1708 = vunpack.c.l.b16 %v1407
        %v1709 = vunpack.c.l.b16 %v1408
        %v1710 = vunpack.c.l.b16 %v1409
        %v1711 = vunpack.c.l.b16 %v1410
        %v1712 = vunpack.c.l.b16 %v1411
        %v1713 = vunpack.c.l.b16 %v1412
        %v1714 = vunpack.c.l.b16 %v1413
        %v1715 = vunpack.c.l.b16 %v1414
        %v1716 = vpack.c.b16 %v1701, %v1700
        %v1717 = vpack.c.b16 %v1703, %v1702
        %v1718 = vpack.c.b16 %v1705, %v1704
        %v1719 = vpack.c.b16 %v1707, %v1706
        %v1720 = vpack.c.b16 %v1709, %v1708
        %v1721 = vpack.c.b16 %v1711, %v1710
        %v1722 = vpack.c.b16 %v1713, %v1712
        %v1723 = vpack.c.b16 %v1715, %v1714
        %1748 = vrot.lane.b32.xlu0 %v1380, 127
        %v1749 = vpop.permute.xlu0 %1748
        %1750 = vrot.lane.b32.xlu0 %v1381, 127
        %v1751 = vpop.permute.xlu0 %1750
        %1752 = vrot.lane.b32.xlu0 %v1382, 127
        %v1753 = vpop.permute.xlu0 %1752
        %1754 = vrot.lane.b32.xlu0 %v1383, 127
        %v1755 = vpop.permute.xlu0 %1754
        %1756 = vrot.lane.b32.xlu0 %v1384, 127
        %v1757 = vpop.permute.xlu0 %1756
        %1758 = vrot.lane.b32.xlu0 %v1385, 127
        %v1759 = vpop.permute.xlu0 %1758
        %1760 = vrot.lane.b32.xlu0 %v1386, 127
        %v1761 = vpop.permute.xlu0 %1760
        %1762 = vrot.lane.b32.xlu0 %v1387, 127
        %v1763 = vpop.permute.xlu0 %1762
        %1764 = vrot.lane.b32.xlu0 %v1388, 127
        %v1765 = vpop.permute.xlu0 %1764
        %1766 = vrot.lane.b32.xlu0 %v1389, 127
        %v1767 = vpop.permute.xlu0 %1766
        %1768 = vrot.lane.b32.xlu0 %v1390, 127
        %v1769 = vpop.permute.xlu0 %1768
        %1770 = vrot.lane.b32.xlu0 %v1391, 127
        %v1771 = vpop.permute.xlu0 %1770
        %1772 = vrot.lane.b32.xlu0 %v1392, 127
        %v1773 = vpop.permute.xlu0 %1772
        %1774 = vrot.lane.b32.xlu0 %v1393, 127
        %v1775 = vpop.permute.xlu0 %1774
        %1776 = vrot.lane.b32.xlu0 %v1394, 127
        %v1777 = vpop.permute.xlu0 %1776
        %1778 = vrot.lane.b32.xlu0 %v1395, 127
        %v1779 = vpop.permute.xlu0 %1778
        %vm1780 = vcmask 1039360
        %v1781 = vsel %vm1780, %v1749, %v1751
        %v1782 = vsel %vm1780, %v1753, %v1755
        %v1783 = vsel %vm1780, %v1757, %v1759
        %v1784 = vsel %vm1780, %v1761, %v1763
        %v1785 = vsel %vm1780, %v1765, %v1767
        %v1786 = vsel %vm1780, %v1769, %v1771
        %v1787 = vsel %vm1780, %v1773, %v1775
        %v1788 = vsel %vm1780, %v1777, %v1779
        %1805 = vmatprep.subr.bf16.mxu0 %v1751
        %1806 = vmatpush1.bf16.msra.mxu0 %v1781
        %1807 = vmatprep.subr.bf16.mxu0 %v1755
        %1808 = vmatpush1.bf16.msra.mxu0 %v1782
        %1809 = vmatprep.subr.bf16.mxu0 %v1759
        %1810 = vmatpush1.bf16.msra.mxu0 %v1783
        %1811 = vmatprep.subr.bf16.mxu0 %v1763
        %1812 = vmatpush1.bf16.msra.mxu0 %v1784
        %1813 = vmatprep.subr.bf16.mxu0 %v1767
        %1814 = vmatpush1.bf16.msra.mxu0 %v1785
        %1815 = vmatprep.subr.bf16.mxu0 %v1771
        %1816 = vmatpush1.bf16.msra.mxu0 %v1786
        %1817 = vmatprep.subr.bf16.mxu0 %v1775
        %1818 = vmatpush1.bf16.msra.mxu0 %v1787
        %1819 = vmatprep.subr.bf16.mxu0 %v1779
        %1820 = vmatpush1.bf16.msra.mxu0 %v1788
        %1821 = vmatprep.subr.bf16.mxu0 0
        %1822 = vmatpush1.bf16.msra.mxu0 0
        %1823 = vmatprep.subr.bf16.mxu0 0
        %1824 = vmatpush1.bf16.msra.mxu0 0
        %1825 = vmatprep.subr.bf16.mxu0 0
        %1826 = vmatpush1.bf16.msra.mxu0 0
        %1827 = vmatprep.subr.bf16.mxu0 0
        %1828 = vmatpush1.bf16.msra.mxu0 0
        %1829 = vmatprep.subr.bf16.mxu0 0
        %1830 = vmatpush1.bf16.msra.mxu0 0
        %1831 = vmatprep.subr.bf16.mxu0 0
        %1832 = vmatpush1.bf16.msra.mxu0 0
        %1833 = vmatprep.subr.bf16.mxu0 0
        %1834 = vmatpush1.bf16.msra.mxu0 0
        %1835 = vmatprep.subr.bf16.mxu0 0
        %1836 = vmatpush1.bf16.msra.mxu0 0
        %1837 = vmatprep.mubr.bf16.mxu0 0
        %1838 = vmatmul.mubr.bf16.gmra.mrb[0].mxu0 %v1716
        %v1839 = vpop.f32.mrb[0].mxu0
        %v1840 = vadd.f32 %v1606, %v1839
        %v1841 = vpop.f32.mrb[0].mxu0
        %v1842 = vadd.f32 %v1608, %v1841
        %v1843 = vpop.f32.mrb[0].mxu0
        %v1844 = vadd.f32 %v1610, %v1843
        %v1845 = vpop.f32.mrb[0].mxu0
        %v1846 = vadd.f32 %v1612, %v1845
        %1847 = vmatprep.mubr.bf16.mxu0 0
        %1848 = vmatmul.mubr.bf16.gmra.mrb[0].mxu0 %v1717
        %v1849 = vpop.f32.mrb[0].mxu0
        %v1850 = vadd.f32 %v1616, %v1849
        %v1851 = vpop.f32.mrb[0].mxu0
        %v1852 = vadd.f32 %v1618, %v1851
        %v1853 = vpop.f32.mrb[0].mxu0
        %v1854 = vadd.f32 %v1620, %v1853
        %v1855 = vpop.f32.mrb[0].mxu0
        %v1856 = vadd.f32 %v1622, %v1855
        %1857 = vmatprep.mubr.bf16.mxu0 0
        %1858 = vmatmul.mubr.bf16.gmra.mrb[0].mxu0 %v1718
        %v1859 = vpop.f32.mrb[0].mxu0
        %v1860 = vadd.f32 %v1626, %v1859
        %v1861 = vpop.f32.mrb[0].mxu0
        %v1862 = vadd.f32 %v1628, %v1861
        %v1863 = vpop.f32.mrb[0].mxu0
        %v1864 = vadd.f32 %v1630, %v1863
        %v1865 = vpop.f32.mrb[0].mxu0
        %v1866 = vadd.f32 %v1632, %v1865
        %1867 = vmatprep.mubr.bf16.mxu0 0
        %1868 = vmatmul.mubr.bf16.gmra.mrb[0].mxu0 %v1719
        %v1869 = vpop.f32.mrb[0].mxu0
        %v1870 = vadd.f32 %v1636, %v1869
        %v1871 = vpop.f32.mrb[0].mxu0
        %v1872 = vadd.f32 %v1638, %v1871
        %v1873 = vpop.f32.mrb[0].mxu0
        %v1874 = vadd.f32 %v1640, %v1873
        %v1875 = vpop.f32.mrb[0].mxu0
        %v1876 = vadd.f32 %v1642, %v1875
        %1877 = vmatprep.mubr.bf16.mxu0 0
        %1878 = vmatmul.mubr.bf16.gmra.mrb[0].mxu0 %v1720
        %v1879 = vpop.f32.mrb[0].mxu0
        %v1880 = vadd.f32 %v1646, %v1879
        %v1881 = vpop.f32.mrb[0].mxu0
        %v1882 = vadd.f32 %v1648, %v1881
        %v1883 = vpop.f32.mrb[0].mxu0
        %v1884 = vadd.f32 %v1650, %v1883
        %v1885 = vpop.f32.mrb[0].mxu0
        %v1886 = vadd.f32 %v1652, %v1885
        %1887 = vmatprep.mubr.bf16.mxu0 0
        %1888 = vmatmul.mubr.bf16.gmra.mrb[0].mxu0 %v1721
        %v1889 = vpop.f32.mrb[0].mxu0
        %v1890 = vadd.f32 %v1656, %v1889
        %v1891 = vpop.f32.mrb[0].mxu0
        %v1892 = vadd.f32 %v1658, %v1891
        %v1893 = vpop.f32.mrb[0].mxu0
        %v1894 = vadd.f32 %v1660, %v1893
        %v1895 = vpop.f32.mrb[0].mxu0
        %v1896 = vadd.f32 %v1662, %v1895
        %1897 = vmatprep.mubr.bf16.mxu0 0
        %1898 = vmatmul.mubr.bf16.gmra.mrb[0].mxu0 %v1722
        %v1899 = vpop.f32.mrb[0].mxu0
        %v1900 = vadd.f32 %v1666, %v1899
        %v1901 = vpop.f32.mrb[0].mxu0
        %v1902 = vadd.f32 %v1668, %v1901
        %v1903 = vpop.f32.mrb[0].mxu0
        %v1904 = vadd.f32 %v1670, %v1903
        %v1905 = vpop.f32.mrb[0].mxu0
        %v1906 = vadd.f32 %v1672, %v1905
        %1907 = vmatprep.mubr.bf16.mxu0 0
        %1908 = vmatmul.mubr.bf16.gmra.mrb[0].mxu0 %v1723
        %v1909 = vpop.f32.mrb[0].mxu0
        %v1910 = vadd.f32 %v1676, %v1909
        %v1911 = vpop.f32.mrb[0].mxu0
        %v1912 = vadd.f32 %v1678, %v1911
        %v1913 = vpop.f32.mrb[0].mxu0
        %v1914 = vadd.f32 %v1680, %v1913
        %v1915 = vpop.f32.mrb[0].mxu0
        %v1916 = vadd.f32 %v1682, %v1915
        %1917 = vdwg.mxu0
        %v1918 = vld [vmem:[%s1363] sm:$0xff]
        %v1919 = vld [vmem:[%s1363 + $0x8] sm:$0xff]
        %v1920 = vld [vmem:[%s1363 + $0x10] sm:$0xff]
        %v1921 = vld [vmem:[%s1363 + $0x18] sm:$0xff]
        %v1922 = vld [vmem:[%s1363 + $0x20] sm:$0xff]
        %v1923 = vld [vmem:[%s1363 + $0x28] sm:$0xff]
        %v1924 = vld [vmem:[%s1363 + $0x30] sm:$0xff]
        %v1925 = vld [vmem:[%s1363 + $0x38] sm:$0xff]
        %v1926 = vld [vmem:[%s1363 + $0x40] sm:$0xff]
        %v1927 = vld [vmem:[%s1363 + $0x48] sm:$0xff]
        %v1928 = vld [vmem:[%s1363 + $0x50] sm:$0xff]
        %v1929 = vld [vmem:[%s1363 + $0x58] sm:$0xff]
        %v1930 = vld [vmem:[%s1363 + $0x60] sm:$0xff]
        %v1931 = vld [vmem:[%s1363 + $0x68] sm:$0xff]
        %v1932 = vld [vmem:[%s1363 + $0x70] sm:$0xff]
        %v1933 = vld [vmem:[%s1363 + $0x78] sm:$0xff]
        %s1934 = sadd.s32 32, %s1396
        %s1935 = smul.addr %s1934, 4
        %s1936 = scalar_lea.vmem %s258, %s1935
        %v1937 = vld [vmem:[%s1936] sm:$0xf]
        %v1938 = vld [vmem:[%s1936 + $0x4] sm:$0xf]
        %v1939 = vld [vmem:[%s1936 + $0x8] sm:$0xf]
        %v1940 = vld [vmem:[%s1936 + $0xc] sm:$0xf]
        %v1941 = vld [vmem:[%s1936 + $0x10] sm:$0xf]
        %v1942 = vld [vmem:[%s1936 + $0x14] sm:$0xf]
        %v1943 = vld [vmem:[%s1936 + $0x18] sm:$0xf]
        %v1944 = vld [vmem:[%s1936 + $0x1c] sm:$0xf]
        %v1945 = vld [vmem:[%s1936 + $0x20] sm:$0xf]
        %v1946 = vld [vmem:[%s1936 + $0x24] sm:$0xf]
        %v1947 = vld [vmem:[%s1936 + $0x28] sm:$0xf]
        %v1948 = vld [vmem:[%s1936 + $0x2c] sm:$0xf]
        %v1949 = vld [vmem:[%s1936 + $0x30] sm:$0xf]
        %v1950 = vld [vmem:[%s1936 + $0x34] sm:$0xf]
        %v1951 = vld [vmem:[%s1936 + $0x38] sm:$0xf]
        %v1952 = vld [vmem:[%s1936 + $0x3c] sm:$0xf]
        %v1969 = vunpack.c.l.b16 %v1937
        %v1970 = vunpack.c.l.b16 %v1938
        %v1971 = vunpack.c.l.b16 %v1939
        %v1972 = vunpack.c.l.b16 %v1940
        %v1973 = vunpack.c.l.b16 %v1941
        %v1974 = vunpack.c.l.b16 %v1942
        %v1975 = vunpack.c.l.b16 %v1943
        %v1976 = vunpack.c.l.b16 %v1944
        %v1977 = vunpack.c.l.b16 %v1945
        %v1978 = vunpack.c.l.b16 %v1946
        %v1979 = vunpack.c.l.b16 %v1947
        %v1980 = vunpack.c.l.b16 %v1948
        %v1981 = vunpack.c.l.b16 %v1949
        %v1982 = vunpack.c.l.b16 %v1950
        %v1983 = vunpack.c.l.b16 %v1951
        %v1984 = vunpack.c.l.b16 %v1952
        %v1985 = vpack.c.b16 %v1970, %v1969
        %v1986 = vpack.c.b16 %v1972, %v1971
        %v1987 = vpack.c.b16 %v1974, %v1973
        %v1988 = vpack.c.b16 %v1976, %v1975
        %v1989 = vpack.c.b16 %v1978, %v1977
        %v1990 = vpack.c.b16 %v1980, %v1979
        %v1991 = vpack.c.b16 %v1982, %v1981
        %v1992 = vpack.c.b16 %v1984, %v1983
        %2017 = vrot.lane.b32.xlu0 %v1918, 125
        %v2018 = vpop.permute.xlu0 %2017
        %2019 = vrot.lane.b32.xlu0 %v1919, 125
        %v2020 = vpop.permute.xlu0 %2019
        %2021 = vrot.lane.b32.xlu0 %v1920, 125
        %v2022 = vpop.permute.xlu0 %2021
        %2023 = vrot.lane.b32.xlu0 %v1921, 125
        %v2024 = vpop.permute.xlu0 %2023
        %2025 = vrot.lane.b32.xlu0 %v1922, 125
        %v2026 = vpop.permute.xlu0 %2025
        %2027 = vrot.lane.b32.xlu0 %v1923, 125
        %v2028 = vpop.permute.xlu0 %2027
        %2029 = vrot.lane.b32.xlu0 %v1924, 125
        %v2030 = vpop.permute.xlu0 %2029
        %2031 = vrot.lane.b32.xlu0 %v1925, 125
        %v2032 = vpop.permute.xlu0 %2031
        %2033 = vrot.lane.b32.xlu0 %v1926, 125
        %v2034 = vpop.permute.xlu0 %2033
        %2035 = vrot.lane.b32.xlu0 %v1927, 125
        %v2036 = vpop.permute.xlu0 %2035
        %2037 = vrot.lane.b32.xlu0 %v1928, 125
        %v2038 = vpop.permute.xlu0 %2037
        %2039 = vrot.lane.b32.xlu0 %v1929, 125
        %v2040 = vpop.permute.xlu0 %2039
        %2041 = vrot.lane.b32.xlu0 %v1930, 125
        %v2042 = vpop.permute.xlu0 %2041
        %2043 = vrot.lane.b32.xlu0 %v1931, 125
        %v2044 = vpop.permute.xlu0 %2043
        %2045 = vrot.lane.b32.xlu0 %v1932, 125
        %v2046 = vpop.permute.xlu0 %2045
        %2047 = vrot.lane.b32.xlu0 %v1933, 125
        %v2048 = vpop.permute.xlu0 %2047
        %vm2049 = vcmask 1022976
        %v2050 = vsel %vm2049, %v2018, %v2020
        %v2051 = vsel %vm2049, %v2022, %v2024
        %v2052 = vsel %vm2049, %v2026, %v2028
        %v2053 = vsel %vm2049, %v2030, %v2032
        %v2054 = vsel %vm2049, %v2034, %v2036
        %v2055 = vsel %vm2049, %v2038, %v2040
        %v2056 = vsel %vm2049, %v2042, %v2044
        %v2057 = vsel %vm2049, %v2046, %v2048
        %2074 = vmatprep.subr.bf16.mxu0 %v2020
        %2075 = vmatpush1.bf16.msra.mxu0 %v2050
        %2076 = vmatprep.subr.bf16.mxu0 %v2024
        %2077 = vmatpush1.bf16.msra.mxu0 %v2051
        %2078 = vmatprep.subr.bf16.mxu0 %v2028
        %2079 = vmatpush1.bf16.msra.mxu0 %v2052
        %2080 = vmatprep.subr.bf16.mxu0 %v2032
        %2081 = vmatpush1.bf16.msra.mxu0 %v2053
        %2082 = vmatprep.subr.bf16.mxu0 %v2036
        %2083 = vmatpush1.bf16.msra.mxu0 %v2054
        %2084 = vmatprep.subr.bf16.mxu0 %v2040
        %2085 = vmatpush1.bf16.msra.mxu0 %v2055
        %2086 = vmatprep.subr.bf16.mxu0 %v2044
        %2087 = vmatpush1.bf16.msra.mxu0 %v2056
        %2088 = vmatprep.subr.bf16.mxu0 %v2048
        %2089 = vmatpush1.bf16.msra.mxu0 %v2057
        %2090 = vmatprep.subr.bf16.mxu0 0
        %2091 = vmatpush1.bf16.msra.mxu0 0
        %2092 = vmatprep.subr.bf16.mxu0 0
        %2093 = vmatpush1.bf16.msra.mxu0 0
        %2094 = vmatprep.subr.bf16.mxu0 0
        %2095 = vmatpush1.bf16.msra.mxu0 0
        %2096 = vmatprep.subr.bf16.mxu0 0
        %2097 = vmatpush1.bf16.msra.mxu0 0
        %2098 = vmatprep.subr.bf16.mxu0 0
        %2099 = vmatpush1.bf16.msra.mxu0 0
        %2100 = vmatprep.subr.bf16.mxu0 0
        %2101 = vmatpush1.bf16.msra.mxu0 0
        %2102 = vmatprep.subr.bf16.mxu0 0
        %2103 = vmatpush1.bf16.msra.mxu0 0
        %2104 = vmatprep.subr.bf16.mxu0 0
        %2105 = vmatpush1.bf16.msra.mxu0 0
        %2106 = vmatprep.mubr.bf16.mxu0 0
        %2107 = vmatmul.mubr.bf16.gmra.mrb[0].mxu0 %v1985
        %v2108 = vpop.f32.mrb[0].mxu0
        %v2109 = vadd.f32 0.0, %v2108
        %v2110 = vpop.f32.mrb[0].mxu0
        %v2111 = vadd.f32 0.0, %v2110
        %v2112 = vpop.f32.mrb[0].mxu0
        %v2113 = vadd.f32 0.0, %v2112
        %v2114 = vpop.f32.mrb[0].mxu0
        %v2115 = vadd.f32 0.0, %v2114
        %2116 = vmatprep.mubr.bf16.mxu0 0
        %2117 = vmatmul.mubr.bf16.gmra.mrb[0].mxu0 %v1986
        %v2118 = vpop.f32.mrb[0].mxu0
        %v2119 = vadd.f32 0.0, %v2118
        %v2120 = vpop.f32.mrb[0].mxu0
        %v2121 = vadd.f32 0.0, %v2120
        %v2122 = vpop.f32.mrb[0].mxu0
        %v2123 = vadd.f32 0.0, %v2122
        %v2124 = vpop.f32.mrb[0].mxu0
        %v2125 = vadd.f32 0.0, %v2124
        %2126 = vmatprep.mubr.bf16.mxu0 0
        %2127 = vmatmul.mubr.bf16.gmra.mrb[0].mxu0 %v1987
        %v2128 = vpop.f32.mrb[0].mxu0
        %v2129 = vadd.f32 0.0, %v2128
        %v2130 = vpop.f32.mrb[0].mxu0
        %v2131 = vadd.f32 0.0, %v2130
        %v2132 = vpop.f32.mrb[0].mxu0
        %v2133 = vadd.f32 0.0, %v2132
        %v2134 = vpop.f32.mrb[0].mxu0
        %v2135 = vadd.f32 0.0, %v2134
        %2136 = vmatprep.mubr.bf16.mxu0 0
        %2137 = vmatmul.mubr.bf16.gmra.mrb[0].mxu0 %v1988
        %v2138 = vpop.f32.mrb[0].mxu0
        %v2139 = vadd.f32 0.0, %v2138
        %v2140 = vpop.f32.mrb[0].mxu0
        %v2141 = vadd.f32 0.0, %v2140
        %v2142 = vpop.f32.mrb[0].mxu0
        %v2143 = vadd.f32 0.0, %v2142
        %v2144 = vpop.f32.mrb[0].mxu0
        %v2145 = vadd.f32 0.0, %v2144
        %2146 = vmatprep.mubr.bf16.mxu0 0
        %2147 = vmatmul.mubr.bf16.gmra.mrb[0].mxu0 %v1989
        %v2148 = vpop.f32.mrb[0].mxu0
        %v2149 = vadd.f32 0.0, %v2148
        %v2150 = vpop.f32.mrb[0].mxu0
        %v2151 = vadd.f32 0.0, %v2150
        %v2152 = vpop.f32.mrb[0].mxu0
        %v2153 = vadd.f32 0.0, %v2152
        %v2154 = vpop.f32.mrb[0].mxu0
        %v2155 = vadd.f32 0.0, %v2154
        %2156 = vmatprep.mubr.bf16.mxu0 0
        %2157 = vmatmul.mubr.bf16.gmra.mrb[0].mxu0 %v1990
        %v2158 = vpop.f32.mrb[0].mxu0
        %v2159 = vadd.f32 0.0, %v2158
        %v2160 = vpop.f32.mrb[0].mxu0
        %v2161 = vadd.f32 0.0, %v2160
        %v2162 = vpop.f32.mrb[0].mxu0
        %v2163 = vadd.f32 0.0, %v2162
        %v2164 = vpop.f32.mrb[0].mxu0
        %v2165 = vadd.f32 0.0, %v2164
        %2166 = vmatprep.mubr.bf16.mxu0 0
        %2167 = vmatmul.mubr.bf16.gmra.mrb[0].mxu0 %v1991
        %v2168 = vpop.f32.mrb[0].mxu0
        %v2169 = vadd.f32 0.0, %v2168
        %v2170 = vpop.f32.mrb[0].mxu0
        %v2171 = vadd.f32 0.0, %v2170
        %v2172 = vpop.f32.mrb[0].mxu0
        %v2173 = vadd.f32 0.0, %v2172
        %v2174 = vpop.f32.mrb[0].mxu0
        %v2175 = vadd.f32 0.0, %v2174
        %2176 = vmatprep.mubr.bf16.mxu0 0
        %2177 = vmatmul.mubr.bf16.gmra.mrb[0].mxu0 %v1992
        %v2178 = vpop.f32.mrb[0].mxu0
        %v2179 = vadd.f32 0.0, %v2178
        %v2180 = vpop.f32.mrb[0].mxu0
        %v2181 = vadd.f32 0.0, %v2180
        %v2182 = vpop.f32.mrb[0].mxu0
        %v2183 = vadd.f32 0.0, %v2182
        %v2184 = vpop.f32.mrb[0].mxu0
        %v2185 = vadd.f32 0.0, %v2184
        %2186 = vdwg.mxu0
        %v2187 = vadd.f32 %v1840, %v2109
        %v2188 = vadd.f32 %v1842, %v2111
        %v2189 = vadd.f32 %v1844, %v2113
        %v2190 = vadd.f32 %v1846, %v2115
        %v2191 = vadd.f32 %v1850, %v2119
        %v2192 = vadd.f32 %v1852, %v2121
        %v2193 = vadd.f32 %v1854, %v2123
        %v2194 = vadd.f32 %v1856, %v2125
        %v2195 = vadd.f32 %v1860, %v2129
        %v2196 = vadd.f32 %v1862, %v2131
        %v2197 = vadd.f32 %v1864, %v2133
        %v2198 = vadd.f32 %v1866, %v2135
        %v2199 = vadd.f32 %v1870, %v2139
        %v2200 = vadd.f32 %v1872, %v2141
        %v2201 = vadd.f32 %v1874, %v2143
        %v2202 = vadd.f32 %v1876, %v2145
        %v2203 = vadd.f32 %v1880, %v2149
        %v2204 = vadd.f32 %v1882, %v2151
        %v2205 = vadd.f32 %v1884, %v2153
        %v2206 = vadd.f32 %v1886, %v2155
        %v2207 = vadd.f32 %v1890, %v2159
        %v2208 = vadd.f32 %v1892, %v2161
        %v2209 = vadd.f32 %v1894, %v2163
        %v2210 = vadd.f32 %v1896, %v2165
        %v2211 = vadd.f32 %v1900, %v2169
        %v2212 = vadd.f32 %v1902, %v2171
        %v2213 = vadd.f32 %v1904, %v2173
        %v2214 = vadd.f32 %v1906, %v2175
        %v2215 = vadd.f32 %v1910, %v2179
        %v2216 = vadd.f32 %v1912, %v2181
        %v2217 = vadd.f32 %v1914, %v2183
        %v2218 = vadd.f32 %v1916, %v2185
        %s2219 = sadd.s32 48, %s1396
        %s2220 = smul.addr %s2219, 4
        %s2221 = scalar_lea.vmem %s258, %s2220
        %v2222 = vld [vmem:[%s2221] sm:$0xf]
        %v2223 = vld [vmem:[%s2221 + $0x4] sm:$0xf]
        %v2224 = vld [vmem:[%s2221 + $0x8] sm:$0xf]
        %v2225 = vld [vmem:[%s2221 + $0xc] sm:$0xf]
        %v2226 = vld [vmem:[%s2221 + $0x10] sm:$0xf]
        %v2227 = vld [vmem:[%s2221 + $0x14] sm:$0xf]
        %v2228 = vld [vmem:[%s2221 + $0x18] sm:$0xf]
        %v2229 = vld [vmem:[%s2221 + $0x1c] sm:$0xf]
        %v2230 = vld [vmem:[%s2221 + $0x20] sm:$0xf]
        %v2231 = vld [vmem:[%s2221 + $0x24] sm:$0xf]
        %v2232 = vld [vmem:[%s2221 + $0x28] sm:$0xf]
        %v2233 = vld [vmem:[%s2221 + $0x2c] sm:$0xf]
        %v2234 = vld [vmem:[%s2221 + $0x30] sm:$0xf]
        %v2235 = vld [vmem:[%s2221 + $0x34] sm:$0xf]
        %v2236 = vld [vmem:[%s2221 + $0x38] sm:$0xf]
        %v2237 = vld [vmem:[%s2221 + $0x3c] sm:$0xf]
        %v2254 = vunpack.c.l.b16 %v2222
        %v2255 = vunpack.c.l.b16 %v2223
        %v2256 = vunpack.c.l.b16 %v2224
        %v2257 = vunpack.c.l.b16 %v2225
        %v2258 = vunpack.c.l.b16 %v2226
        %v2259 = vunpack.c.l.b16 %v2227
        %v2260 = vunpack.c.l.b16 %v2228
        %v2261 = vunpack.c.l.b16 %v2229
        %v2262 = vunpack.c.l.b16 %v2230
        %v2263 = vunpack.c.l.b16 %v2231
        %v2264 = vunpack.c.l.b16 %v2232
        %v2265 = vunpack.c.l.b16 %v2233
        %v2266 = vunpack.c.l.b16 %v2234
        %v2267 = vunpack.c.l.b16 %v2235
        %v2268 = vunpack.c.l.b16 %v2236
        %v2269 = vunpack.c.l.b16 %v2237
        %v2270 = vpack.c.b16 %v2255, %v2254
        %v2271 = vpack.c.b16 %v2257, %v2256
        %v2272 = vpack.c.b16 %v2259, %v2258
        %v2273 = vpack.c.b16 %v2261, %v2260
        %v2274 = vpack.c.b16 %v2263, %v2262
        %v2275 = vpack.c.b16 %v2265, %v2264
        %v2276 = vpack.c.b16 %v2267, %v2266
        %v2277 = vpack.c.b16 %v2269, %v2268
        %2286 = vrot.lane.b32.xlu0 %v1380, 113
        %v2287 = vpop.permute.xlu0 %2286
        %2288 = vrot.lane.b32.xlu0 %v1381, 113
        %v2289 = vpop.permute.xlu0 %2288
        %2290 = vrot.lane.b32.xlu0 %v1382, 113
        %v2291 = vpop.permute.xlu0 %2290
        %2292 = vrot.lane.b32.xlu0 %v1383, 113
        %v2293 = vpop.permute.xlu0 %2292
        %2294 = vrot.lane.b32.xlu0 %v1384, 113
        %v2295 = vpop.permute.xlu0 %2294
        %2296 = vrot.lane.b32.xlu0 %v1385, 113
        %v2297 = vpop.permute.xlu0 %2296
        %2298 = vrot.lane.b32.xlu0 %v1386, 113
        %v2299 = vpop.permute.xlu0 %2298
        %2300 = vrot.lane.b32.xlu0 %v1387, 113
        %v2301 = vpop.permute.xlu0 %2300
        %2302 = vrot.lane.b32.xlu0 %v1388, 113
        %v2303 = vpop.permute.xlu0 %2302
        %2304 = vrot.lane.b32.xlu0 %v1389, 113
        %v2305 = vpop.permute.xlu0 %2304
        %2306 = vrot.lane.b32.xlu0 %v1390, 113
        %v2307 = vpop.permute.xlu0 %2306
        %2308 = vrot.lane.b32.xlu0 %v1391, 113
        %v2309 = vpop.permute.xlu0 %2308
        %2310 = vrot.lane.b32.xlu0 %v1392, 113
        %v2311 = vpop.permute.xlu0 %2310
        %2312 = vrot.lane.b32.xlu0 %v1393, 113
        %v2313 = vpop.permute.xlu0 %2312
        %2314 = vrot.lane.b32.xlu0 %v1394, 113
        %v2315 = vpop.permute.xlu0 %2314
        %2316 = vrot.lane.b32.xlu0 %v1395, 113
        %v2317 = vpop.permute.xlu0 %2316
        %vm2318 = vcmask 924672
        %v2319 = vsel %vm2318, %v2287, %v2289
        %v2320 = vsel %vm2318, %v2291, %v2293
        %v2321 = vsel %vm2318, %v2295, %v2297
        %v2322 = vsel %vm2318, %v2299, %v2301
        %v2323 = vsel %vm2318, %v2303, %v2305
        %v2324 = vsel %vm2318, %v2307, %v2309
        %v2325 = vsel %vm2318, %v2311, %v2313
        %v2326 = vsel %vm2318, %v2315, %v2317
        %2343 = vmatprep.subr.bf16.mxu0 %v2289
        %2344 = vmatpush1.bf16.msra.mxu0 %v2319
        %2345 = vmatprep.subr.bf16.mxu0 %v2293
        %2346 = vmatpush1.bf16.msra.mxu0 %v2320
        %2347 = vmatprep.subr.bf16.mxu0 %v2297
        %2348 = vmatpush1.bf16.msra.mxu0 %v2321
        %2349 = vmatprep.subr.bf16.mxu0 %v2301
        %2350 = vmatpush1.bf16.msra.mxu0 %v2322
        %2351 = vmatprep.subr.bf16.mxu0 %v2305
        %2352 = vmatpush1.bf16.msra.mxu0 %v2323
        %2353 = vmatprep.subr.bf16.mxu0 %v2309
        %2354 = vmatpush1.bf16.msra.mxu0 %v2324
        %2355 = vmatprep.subr.bf16.mxu0 %v2313
        %2356 = vmatpush1.bf16.msra.mxu0 %v2325
        %2357 = vmatprep.subr.bf16.mxu0 %v2317
        %2358 = vmatpush1.bf16.msra.mxu0 %v2326
        %2359 = vmatprep.subr.bf16.mxu0 0
        %2360 = vmatpush1.bf16.msra.mxu0 0
        %2361 = vmatprep.subr.bf16.mxu0 0
        %2362 = vmatpush1.bf16.msra.mxu0 0
        %2363 = vmatprep.subr.bf16.mxu0 0
        %2364 = vmatpush1.bf16.msra.mxu0 0
        %2365 = vmatprep.subr.bf16.mxu0 0
        %2366 = vmatpush1.bf16.msra.mxu0 0
        %2367 = vmatprep.subr.bf16.mxu0 0
        %2368 = vmatpush1.bf16.msra.mxu0 0
        %2369 = vmatprep.subr.bf16.mxu0 0
        %2370 = vmatpush1.bf16.msra.mxu0 0
        %2371 = vmatprep.subr.bf16.mxu0 0
        %2372 = vmatpush1.bf16.msra.mxu0 0
        %2373 = vmatprep.subr.bf16.mxu0 0
        %2374 = vmatpush1.bf16.msra.mxu0 0
        %2375 = vmatprep.mubr.bf16.mxu0 0
        %2376 = vmatmul.mubr.bf16.gmra.mrb[0].mxu0 %v2270
        %v2377 = vpop.f32.mrb[0].mxu0
        %v2378 = vadd.f32 0.0, %v2377
        %v2379 = vpop.f32.mrb[0].mxu0
        %v2380 = vadd.f32 0.0, %v2379
        %v2381 = vpop.f32.mrb[0].mxu0
        %v2382 = vadd.f32 0.0, %v2381
        %v2383 = vpop.f32.mrb[0].mxu0
        %v2384 = vadd.f32 0.0, %v2383
        %2385 = vmatprep.mubr.bf16.mxu0 0
        %2386 = vmatmul.mubr.bf16.gmra.mrb[0].mxu0 %v2271
        %v2387 = vpop.f32.mrb[0].mxu0
        %v2388 = vadd.f32 0.0, %v2387
        %v2389 = vpop.f32.mrb[0].mxu0
        %v2390 = vadd.f32 0.0, %v2389
        %v2391 = vpop.f32.mrb[0].mxu0
        %v2392 = vadd.f32 0.0, %v2391
        %v2393 = vpop.f32.mrb[0].mxu0
        %v2394 = vadd.f32 0.0, %v2393
        %2395 = vmatprep.mubr.bf16.mxu0 0
        %2396 = vmatmul.mubr.bf16.gmra.mrb[0].mxu0 %v2272
        %v2397 = vpop.f32.mrb[0].mxu0
        %v2398 = vadd.f32 0.0, %v2397
        %v2399 = vpop.f32.mrb[0].mxu0
        %v2400 = vadd.f32 0.0, %v2399
        %v2401 = vpop.f32.mrb[0].mxu0
        %v2402 = vadd.f32 0.0, %v2401
        %v2403 = vpop.f32.mrb[0].mxu0
        %v2404 = vadd.f32 0.0, %v2403
        %2405 = vmatprep.mubr.bf16.mxu0 0
        %2406 = vmatmul.mubr.bf16.gmra.mrb[0].mxu0 %v2273
        %v2407 = vpop.f32.mrb[0].mxu0
        %v2408 = vadd.f32 0.0, %v2407
        %v2409 = vpop.f32.mrb[0].mxu0
        %v2410 = vadd.f32 0.0, %v2409
        %v2411 = vpop.f32.mrb[0].mxu0
        %v2412 = vadd.f32 0.0, %v2411
        %v2413 = vpop.f32.mrb[0].mxu0
        %v2414 = vadd.f32 0.0, %v2413
        %2415 = vmatprep.mubr.bf16.mxu0 0
        %2416 = vmatmul.mubr.bf16.gmra.mrb[0].mxu0 %v2274
        %v2417 = vpop.f32.mrb[0].mxu0
        %v2418 = vadd.f32 0.0, %v2417
        %v2419 = vpop.f32.mrb[0].mxu0
        %v2420 = vadd.f32 0.0, %v2419
        %v2421 = vpop.f32.mrb[0].mxu0
        %v2422 = vadd.f32 0.0, %v2421
        %v2423 = vpop.f32.mrb[0].mxu0
        %v2424 = vadd.f32 0.0, %v2423
        %2425 = vmatprep.mubr.bf16.mxu0 0
        %2426 = vmatmul.mubr.bf16.gmra.mrb[0].mxu0 %v2275
        %v2427 = vpop.f32.mrb[0].mxu0
        %v2428 = vadd.f32 0.0, %v2427
        %v2429 = vpop.f32.mrb[0].mxu0
        %v2430 = vadd.f32 0.0, %v2429
        %v2431 = vpop.f32.mrb[0].mxu0
        %v2432 = vadd.f32 0.0, %v2431
        %v2433 = vpop.f32.mrb[0].mxu0
        %v2434 = vadd.f32 0.0, %v2433
        %2435 = vmatprep.mubr.bf16.mxu0 0
        %2436 = vmatmul.mubr.bf16.gmra.mrb[0].mxu0 %v2276
        %v2437 = vpop.f32.mrb[0].mxu0
        %v2438 = vadd.f32 0.0, %v2437
        %v2439 = vpop.f32.mrb[0].mxu0
        %v2440 = vadd.f32 0.0, %v2439
        %v2441 = vpop.f32.mrb[0].mxu0
        %v2442 = vadd.f32 0.0, %v2441
        %v2443 = vpop.f32.mrb[0].mxu0
        %v2444 = vadd.f32 0.0, %v2443
        %2445 = vmatprep.mubr.bf16.mxu0 0
        %2446 = vmatmul.mubr.bf16.gmra.mrb[0].mxu0 %v2277
        %v2447 = vpop.f32.mrb[0].mxu0
        %v2448 = vadd.f32 0.0, %v2447
        %v2449 = vpop.f32.mrb[0].mxu0
        %v2450 = vadd.f32 0.0, %v2449
        %v2451 = vpop.f32.mrb[0].mxu0
        %v2452 = vadd.f32 0.0, %v2451
        %v2453 = vpop.f32.mrb[0].mxu0
        %v2454 = vadd.f32 0.0, %v2453
        %2455 = vdwg.mxu0
        %v2456 = vadd.f32 %v2187, %v2378
        %v2457 = vadd.f32 %v2188, %v2380
        %v2458 = vadd.f32 %v2189, %v2382
        %v2459 = vadd.f32 %v2190, %v2384
        %v2460 = vadd.f32 %v2191, %v2388
        %v2461 = vadd.f32 %v2192, %v2390
        %v2462 = vadd.f32 %v2193, %v2392
        %v2463 = vadd.f32 %v2194, %v2394
        %v2464 = vadd.f32 %v2195, %v2398
        %v2465 = vadd.f32 %v2196, %v2400
        %v2466 = vadd.f32 %v2197, %v2402
        %v2467 = vadd.f32 %v2198, %v2404
        %v2468 = vadd.f32 %v2199, %v2408
        %v2469 = vadd.f32 %v2200, %v2410
        %v2470 = vadd.f32 %v2201, %v2412
        %v2471 = vadd.f32 %v2202, %v2414
        %v2472 = vadd.f32 %v2203, %v2418
        %v2473 = vadd.f32 %v2204, %v2420
        %v2474 = vadd.f32 %v2205, %v2422
        %v2475 = vadd.f32 %v2206, %v2424
        %v2476 = vadd.f32 %v2207, %v2428
        %v2477 = vadd.f32 %v2208, %v2430
        %v2478 = vadd.f32 %v2209, %v2432
        %v2479 = vadd.f32 %v2210, %v2434
        %v2480 = vadd.f32 %v2211, %v2438
        %v2481 = vadd.f32 %v2212, %v2440
        %v2482 = vadd.f32 %v2213, %v2442
        %v2483 = vadd.f32 %v2214, %v2444
        %v2484 = vadd.f32 %v2215, %v2448
        %v2485 = vadd.f32 %v2216, %v2450
        %v2486 = vadd.f32 %v2217, %v2452
        %v2487 = vadd.f32 %v2218, %v2454
        %s2488 = sadd.s32 64, %s1396
        %s2489 = smul.addr %s2488, 4
        %s2490 = scalar_lea.vmem %s258, %s2489
        %v2491 = vld [vmem:[%s2490] sm:$0xf]
        %v2492 = vld [vmem:[%s2490 + $0x4] sm:$0xf]
        %v2493 = vld [vmem:[%s2490 + $0x8] sm:$0xf]
        %v2494 = vld [vmem:[%s2490 + $0xc] sm:$0xf]
        %v2495 = vld [vmem:[%s2490 + $0x10] sm:$0xf]
        %v2496 = vld [vmem:[%s2490 + $0x14] sm:$0xf]
        %v2497 = vld [vmem:[%s2490 + $0x18] sm:$0xf]
        %v2498 = vld [vmem:[%s2490 + $0x1c] sm:$0xf]
        %v2499 = vld [vmem:[%s2490 + $0x20] sm:$0xf]
        %v2500 = vld [vmem:[%s2490 + $0x24] sm:$0xf]
        %v2501 = vld [vmem:[%s2490 + $0x28] sm:$0xf]
        %v2502 = vld [vmem:[%s2490 + $0x2c] sm:$0xf]
        %v2503 = vld [vmem:[%s2490 + $0x30] sm:$0xf]
        %v2504 = vld [vmem:[%s2490 + $0x34] sm:$0xf]
        %v2505 = vld [vmem:[%s2490 + $0x38] sm:$0xf]
        %v2506 = vld [vmem:[%s2490 + $0x3c] sm:$0xf]
        %v2523 = vunpack.c.l.b16 %v2491
        %v2524 = vunpack.c.l.b16 %v2492
        %v2525 = vunpack.c.l.b16 %v2493
        %v2526 = vunpack.c.l.b16 %v2494
        %v2527 = vunpack.c.l.b16 %v2495
        %v2528 = vunpack.c.l.b16 %v2496
        %v2529 = vunpack.c.l.b16 %v2497
        %v2530 = vunpack.c.l.b16 %v2498
        %v2531 = vunpack.c.l.b16 %v2499
        %v2532 = vunpack.c.l.b16 %v2500
        %v2533 = vunpack.c.l.b16 %v2501
        %v2534 = vunpack.c.l.b16 %v2502
        %v2535 = vunpack.c.l.b16 %v2503
        %v2536 = vunpack.c.l.b16 %v2504
        %v2537 = vunpack.c.l.b16 %v2505
        %v2538 = vunpack.c.l.b16 %v2506
        %v2539 = vpack.c.b16 %v2524, %v2523
        %v2540 = vpack.c.b16 %v2526, %v2525
        %v2541 = vpack.c.b16 %v2528, %v2527
        %v2542 = vpack.c.b16 %v2530, %v2529
        %v2543 = vpack.c.b16 %v2532, %v2531
        %v2544 = vpack.c.b16 %v2534, %v2533
        %v2545 = vpack.c.b16 %v2536, %v2535
        %v2546 = vpack.c.b16 %v2538, %v2537
        %2555 = vrot.lane.b32.xlu0 %v1415, 112
        %v2556 = vpop.permute.xlu0 %2555
        %2557 = vrot.lane.b32.xlu0 %v1416, 112
        %v2558 = vpop.permute.xlu0 %2557
        %2559 = vrot.lane.b32.xlu0 %v1417, 112
        %v2560 = vpop.permute.xlu0 %2559
        %2561 = vrot.lane.b32.xlu0 %v1418, 112
        %v2562 = vpop.permute.xlu0 %2561
        %2563 = vrot.lane.b32.xlu0 %v1419, 112
        %v2564 = vpop.permute.xlu0 %2563
        %2565 = vrot.lane.b32.xlu0 %v1420, 112
        %v2566 = vpop.permute.xlu0 %2565
        %2567 = vrot.lane.b32.xlu0 %v1421, 112
        %v2568 = vpop.permute.xlu0 %2567
        %2569 = vrot.lane.b32.xlu0 %v1422, 112
        %v2570 = vpop.permute.xlu0 %2569
        %2571 = vrot.lane.b32.xlu0 %v1423, 112
        %v2572 = vpop.permute.xlu0 %2571
        %2573 = vrot.lane.b32.xlu0 %v1424, 112
        %v2574 = vpop.permute.xlu0 %2573
        %2575 = vrot.lane.b32.xlu0 %v1425, 112
        %v2576 = vpop.permute.xlu0 %2575
        %2577 = vrot.lane.b32.xlu0 %v1426, 112
        %v2578 = vpop.permute.xlu0 %2577
        %2579 = vrot.lane.b32.xlu0 %v1427, 112
        %v2580 = vpop.permute.xlu0 %2579
        %2581 = vrot.lane.b32.xlu0 %v1428, 112
        %v2582 = vpop.permute.xlu0 %2581
        %2583 = vrot.lane.b32.xlu0 %v1429, 112
        %v2584 = vpop.permute.xlu0 %2583
        %2585 = vrot.lane.b32.xlu0 %v1430, 112
        %v2586 = vpop.permute.xlu0 %2585
        %vm2587 = vcmask 916480
        %v2588 = vsel %vm2587, %v2556, %v2558
        %v2589 = vsel %vm2587, %v2560, %v2562
        %v2590 = vsel %vm2587, %v2564, %v2566
        %v2591 = vsel %vm2587, %v2568, %v2570
        %v2592 = vsel %vm2587, %v2572, %v2574
        %v2593 = vsel %vm2587, %v2576, %v2578
        %v2594 = vsel %vm2587, %v2580, %v2582
        %v2595 = vsel %vm2587, %v2584, %v2586
        %2612 = vmatprep.subr.bf16.mxu0 %v2558
        %2613 = vmatpush1.bf16.msra.mxu0 %v2588
        %2614 = vmatprep.subr.bf16.mxu0 %v2562
        %2615 = vmatpush1.bf16.msra.mxu0 %v2589
        %2616 = vmatprep.subr.bf16.mxu0 %v2566
        %2617 = vmatpush1.bf16.msra.mxu0 %v2590
        %2618 = vmatprep.subr.bf16.mxu0 %v2570
        %2619 = vmatpush1.bf16.msra.mxu0 %v2591
        %2620 = vmatprep.subr.bf16.mxu0 %v2574
        %2621 = vmatpush1.bf16.msra.mxu0 %v2592
        %2622 = vmatprep.subr.bf16.mxu0 %v2578
        %2623 = vmatpush1.bf16.msra.mxu0 %v2593
        %2624 = vmatprep.subr.bf16.mxu0 %v2582
        %2625 = vmatpush1.bf16.msra.mxu0 %v2594
        %2626 = vmatprep.subr.bf16.mxu0 %v2586
        %2627 = vmatpush1.bf16.msra.mxu0 %v2595
        %2628 = vmatprep.subr.bf16.mxu0 0
        %2629 = vmatpush1.bf16.msra.mxu0 0
        %2630 = vmatprep.subr.bf16.mxu0 0
        %2631 = vmatpush1.bf16.msra.mxu0 0
        %2632 = vmatprep.subr.bf16.mxu0 0
        %2633 = vmatpush1.bf16.msra.mxu0 0
        %2634 = vmatprep.subr.bf16.mxu0 0
        %2635 = vmatpush1.bf16.msra.mxu0 0
        %2636 = vmatprep.subr.bf16.mxu0 0
        %2637 = vmatpush1.bf16.msra.mxu0 0
        %2638 = vmatprep.subr.bf16.mxu0 0
        %2639 = vmatpush1.bf16.msra.mxu0 0
        %2640 = vmatprep.subr.bf16.mxu0 0
        %2641 = vmatpush1.bf16.msra.mxu0 0
        %2642 = vmatprep.subr.bf16.mxu0 0
        %2643 = vmatpush1.bf16.msra.mxu0 0
        %2644 = vmatprep.mubr.bf16.mxu0 0
        %2645 = vmatmul.mubr.bf16.gmra.mrb[0].mxu0 %v2539
        %v2646 = vpop.f32.mrb[0].mxu0
        %v2647 = vadd.f32 0.0, %v2646
        %v2648 = vpop.f32.mrb[0].mxu0
        %v2649 = vadd.f32 0.0, %v2648
        %v2650 = vpop.f32.mrb[0].mxu0
        %v2651 = vadd.f32 0.0, %v2650
        %v2652 = vpop.f32.mrb[0].mxu0
        %v2653 = vadd.f32 0.0, %v2652
        %2654 = vmatprep.mubr.bf16.mxu0 0
        %2655 = vmatmul.mubr.bf16.gmra.mrb[0].mxu0 %v2540
        %v2656 = vpop.f32.mrb[0].mxu0
        %v2657 = vadd.f32 0.0, %v2656
        %v2658 = vpop.f32.mrb[0].mxu0
        %v2659 = vadd.f32 0.0, %v2658
        %v2660 = vpop.f32.mrb[0].mxu0
        %v2661 = vadd.f32 0.0, %v2660
        %v2662 = vpop.f32.mrb[0].mxu0
        %v2663 = vadd.f32 0.0, %v2662
        %2664 = vmatprep.mubr.bf16.mxu0 0
        %2665 = vmatmul.mubr.bf16.gmra.mrb[0].mxu0 %v2541
        %v2666 = vpop.f32.mrb[0].mxu0
        %v2667 = vadd.f32 0.0, %v2666
        %v2668 = vpop.f32.mrb[0].mxu0
        %v2669 = vadd.f32 0.0, %v2668
        %v2670 = vpop.f32.mrb[0].mxu0
        %v2671 = vadd.f32 0.0, %v2670
        %v2672 = vpop.f32.mrb[0].mxu0
        %v2673 = vadd.f32 0.0, %v2672
        %2674 = vmatprep.mubr.bf16.mxu0 0
        %2675 = vmatmul.mubr.bf16.gmra.mrb[0].mxu0 %v2542
        %v2676 = vpop.f32.mrb[0].mxu0
        %v2677 = vadd.f32 0.0, %v2676
        %v2678 = vpop.f32.mrb[0].mxu0
        %v2679 = vadd.f32 0.0, %v2678
        %v2680 = vpop.f32.mrb[0].mxu0
        %v2681 = vadd.f32 0.0, %v2680
        %v2682 = vpop.f32.mrb[0].mxu0
        %v2683 = vadd.f32 0.0, %v2682
        %2684 = vmatprep.mubr.bf16.mxu0 0
        %2685 = vmatmul.mubr.bf16.gmra.mrb[0].mxu0 %v2543
        %v2686 = vpop.f32.mrb[0].mxu0
        %v2687 = vadd.f32 0.0, %v2686
        %v2688 = vpop.f32.mrb[0].mxu0
        %v2689 = vadd.f32 0.0, %v2688
        %v2690 = vpop.f32.mrb[0].mxu0
        %v2691 = vadd.f32 0.0, %v2690
        %v2692 = vpop.f32.mrb[0].mxu0
        %v2693 = vadd.f32 0.0, %v2692
        %2694 = vmatprep.mubr.bf16.mxu0 0
        %2695 = vmatmul.mubr.bf16.gmra.mrb[0].mxu0 %v2544
        %v2696 = vpop.f32.mrb[0].mxu0
        %v2697 = vadd.f32 0.0, %v2696
        %v2698 = vpop.f32.mrb[0].mxu0
        %v2699 = vadd.f32 0.0, %v2698
        %v2700 = vpop.f32.mrb[0].mxu0
        %v2701 = vadd.f32 0.0, %v2700
        %v2702 = vpop.f32.mrb[0].mxu0
        %v2703 = vadd.f32 0.0, %v2702
        %2704 = vmatprep.mubr.bf16.mxu0 0
        %2705 = vmatmul.mubr.bf16.gmra.mrb[0].mxu0 %v2545
        %v2706 = vpop.f32.mrb[0].mxu0
        %v2707 = vadd.f32 0.0, %v2706
        %v2708 = vpop.f32.mrb[0].mxu0
        %v2709 = vadd.f32 0.0, %v2708
        %v2710 = vpop.f32.mrb[0].mxu0
        %v2711 = vadd.f32 0.0, %v2710
        %v2712 = vpop.f32.mrb[0].mxu0
        %v2713 = vadd.f32 0.0, %v2712
        %2714 = vmatprep.mubr.bf16.mxu0 0
        %2715 = vmatmul.mubr.bf16.gmra.mrb[0].mxu0 %v2546
        %v2716 = vpop.f32.mrb[0].mxu0
        %v2717 = vadd.f32 0.0, %v2716
        %v2718 = vpop.f32.mrb[0].mxu0
        %v2719 = vadd.f32 0.0, %v2718
        %v2720 = vpop.f32.mrb[0].mxu0
        %v2721 = vadd.f32 0.0, %v2720
        %v2722 = vpop.f32.mrb[0].mxu0
        %v2723 = vadd.f32 0.0, %v2722
        %2724 = vdwg.mxu0
        %v2725 = vadd.f32 %v2456, %v2647
        %v2726 = vadd.f32 %v2457, %v2649
        %v2727 = vadd.f32 %v2458, %v2651
        %v2728 = vadd.f32 %v2459, %v2653
        %v2729 = vadd.f32 %v2460, %v2657
        %v2730 = vadd.f32 %v2461, %v2659
        %v2731 = vadd.f32 %v2462, %v2661
        %v2732 = vadd.f32 %v2463, %v2663
        %v2733 = vadd.f32 %v2464, %v2667
        %v2734 = vadd.f32 %v2465, %v2669
        %v2735 = vadd.f32 %v2466, %v2671
        %v2736 = vadd.f32 %v2467, %v2673
        %v2737 = vadd.f32 %v2468, %v2677
        %v2738 = vadd.f32 %v2469, %v2679
        %v2739 = vadd.f32 %v2470, %v2681
        %v2740 = vadd.f32 %v2471, %v2683
        %v2741 = vadd.f32 %v2472, %v2687
        %v2742 = vadd.f32 %v2473, %v2689
        %v2743 = vadd.f32 %v2474, %v2691
        %v2744 = vadd.f32 %v2475, %v2693
        %v2745 = vadd.f32 %v2476, %v2697
        %v2746 = vadd.f32 %v2477, %v2699
        %v2747 = vadd.f32 %v2478, %v2701
        %v2748 = vadd.f32 %v2479, %v2703
        %v2749 = vadd.f32 %v2480, %v2707
        %v2750 = vadd.f32 %v2481, %v2709
        %v2751 = vadd.f32 %v2482, %v2711
        %v2752 = vadd.f32 %v2483, %v2713
        %v2753 = vadd.f32 %v2484, %v2717
        %v2754 = vadd.f32 %v2485, %v2719
        %v2755 = vadd.f32 %v2486, %v2721
        %v2756 = vadd.f32 %v2487, %v2723
        %s2757 = sadd.s32 80, %s1396
        %s2758 = smul.addr %s2757, 4
        %s2759 = scalar_lea.vmem %s258, %s2758
        %v2760 = vld [vmem:[%s2759] sm:$0xf]
        %v2761 = vld [vmem:[%s2759 + $0x4] sm:$0xf]
        %v2762 = vld [vmem:[%s2759 + $0x8] sm:$0xf]
        %v2763 = vld [vmem:[%s2759 + $0xc] sm:$0xf]
        %v2764 = vld [vmem:[%s2759 + $0x10] sm:$0xf]
        %v2765 = vld [vmem:[%s2759 + $0x14] sm:$0xf]
        %v2766 = vld [vmem:[%s2759 + $0x18] sm:$0xf]
        %v2767 = vld [vmem:[%s2759 + $0x1c] sm:$0xf]
        %v2768 = vld [vmem:[%s2759 + $0x20] sm:$0xf]
        %v2769 = vld [vmem:[%s2759 + $0x24] sm:$0xf]
        %v2770 = vld [vmem:[%s2759 + $0x28] sm:$0xf]
        %v2771 = vld [vmem:[%s2759 + $0x2c] sm:$0xf]
        %v2772 = vld [vmem:[%s2759 + $0x30] sm:$0xf]
        %v2773 = vld [vmem:[%s2759 + $0x34] sm:$0xf]
        %v2774 = vld [vmem:[%s2759 + $0x38] sm:$0xf]
        %v2775 = vld [vmem:[%s2759 + $0x3c] sm:$0xf]
        %v2792 = vunpack.c.l.b16 %v2760
        %v2793 = vunpack.c.l.b16 %v2761
        %v2794 = vunpack.c.l.b16 %v2762
        %v2795 = vunpack.c.l.b16 %v2763
        %v2796 = vunpack.c.l.b16 %v2764
        %v2797 = vunpack.c.l.b16 %v2765
        %v2798 = vunpack.c.l.b16 %v2766
        %v2799 = vunpack.c.l.b16 %v2767
        %v2800 = vunpack.c.l.b16 %v2768
        %v2801 = vunpack.c.l.b16 %v2769
        %v2802 = vunpack.c.l.b16 %v2770
        %v2803 = vunpack.c.l.b16 %v2771
        %v2804 = vunpack.c.l.b16 %v2772
        %v2805 = vunpack.c.l.b16 %v2773
        %v2806 = vunpack.c.l.b16 %v2774
        %v2807 = vunpack.c.l.b16 %v2775
        %v2808 = vpack.c.b16 %v2793, %v2792
        %v2809 = vpack.c.b16 %v2795, %v2794
        %v2810 = vpack.c.b16 %v2797, %v2796
        %v2811 = vpack.c.b16 %v2799, %v2798
        %v2812 = vpack.c.b16 %v2801, %v2800
        %v2813 = vpack.c.b16 %v2803, %v2802
        %v2814 = vpack.c.b16 %v2805, %v2804
        %v2815 = vpack.c.b16 %v2807, %v2806
        %2824 = vrot.lane.b32.xlu0 %v1918, 111
        %v2825 = vpop.permute.xlu0 %2824
        %2826 = vrot.lane.b32.xlu0 %v1919, 111
        %v2827 = vpop.permute.xlu0 %2826
        %2828 = vrot.lane.b32.xlu0 %v1920, 111
        %v2829 = vpop.permute.xlu0 %2828
        %2830 = vrot.lane.b32.xlu0 %v1921, 111
        %v2831 = vpop.permute.xlu0 %2830
        %2832 = vrot.lane.b32.xlu0 %v1922, 111
        %v2833 = vpop.permute.xlu0 %2832
        %2834 = vrot.lane.b32.xlu0 %v1923, 111
        %v2835 = vpop.permute.xlu0 %2834
        %2836 = vrot.lane.b32.xlu0 %v1924, 111
        %v2837 = vpop.permute.xlu0 %2836
        %2838 = vrot.lane.b32.xlu0 %v1925, 111
        %v2839 = vpop.permute.xlu0 %2838
        %2840 = vrot.lane.b32.xlu0 %v1926, 111
        %v2841 = vpop.permute.xlu0 %2840
        %2842 = vrot.lane.b32.xlu0 %v1927, 111
        %v2843 = vpop.permute.xlu0 %2842
        %2844 = vrot.lane.b32.xlu0 %v1928, 111
        %v2845 = vpop.permute.xlu0 %2844
        %2846 = vrot.lane.b32.xlu0 %v1929, 111
        %v2847 = vpop.permute.xlu0 %2846
        %2848 = vrot.lane.b32.xlu0 %v1930, 111
        %v2849 = vpop.permute.xlu0 %2848
        %2850 = vrot.lane.b32.xlu0 %v1931, 111
        %v2851 = vpop.permute.xlu0 %2850
        %2852 = vrot.lane.b32.xlu0 %v1932, 111
        %v2853 = vpop.permute.xlu0 %2852
        %2854 = vrot.lane.b32.xlu0 %v1933, 111
        %v2855 = vpop.permute.xlu0 %2854
        %vm2856 = vcmask 908288
        %v2857 = vsel %vm2856, %v2825, %v2827
        %v2858 = vsel %vm2856, %v2829, %v2831
        %v2859 = vsel %vm2856, %v2833, %v2835
        %v2860 = vsel %vm2856, %v2837, %v2839
        %v2861 = vsel %vm2856, %v2841, %v2843
        %v2862 = vsel %vm2856, %v2845, %v2847
        %v2863 = vsel %vm2856, %v2849, %v2851
        %v2864 = vsel %vm2856, %v2853, %v2855
        %2881 = vmatprep.subr.bf16.mxu0 %v2827
        %2882 = vmatpush1.bf16.msra.mxu0 %v2857
        %2883 = vmatprep.subr.bf16.mxu0 %v2831
        %2884 = vmatpush1.bf16.msra.mxu0 %v2858
        %2885 = vmatprep.subr.bf16.mxu0 %v2835
        %2886 = vmatpush1.bf16.msra.mxu0 %v2859
        %2887 = vmatprep.subr.bf16.mxu0 %v2839
        %2888 = vmatpush1.bf16.msra.mxu0 %v2860
        %2889 = vmatprep.subr.bf16.mxu0 %v2843
        %2890 = vmatpush1.bf16.msra.mxu0 %v2861
        %2891 = vmatprep.subr.bf16.mxu0 %v2847
        %2892 = vmatpush1.bf16.msra.mxu0 %v2862
        %2893 = vmatprep.subr.bf16.mxu0 %v2851
        %2894 = vmatpush1.bf16.msra.mxu0 %v2863
        %2895 = vmatprep.subr.bf16.mxu0 %v2855
        %2896 = vmatpush1.bf16.msra.mxu0 %v2864
        %2897 = vmatprep.subr.bf16.mxu0 0
        %2898 = vmatpush1.bf16.msra.mxu0 0
        %2899 = vmatprep.subr.bf16.mxu0 0
        %2900 = vmatpush1.bf16.msra.mxu0 0
        %2901 = vmatprep.subr.bf16.mxu0 0
        %2902 = vmatpush1.bf16.msra.mxu0 0
        %2903 = vmatprep.subr.bf16.mxu0 0
        %2904 = vmatpush1.bf16.msra.mxu0 0
        %2905 = vmatprep.subr.bf16.mxu0 0
        %2906 = vmatpush1.bf16.msra.mxu0 0
        %2907 = vmatprep.subr.bf16.mxu0 0
        %2908 = vmatpush1.bf16.msra.mxu0 0
        %2909 = vmatprep.subr.bf16.mxu0 0
        %2910 = vmatpush1.bf16.msra.mxu0 0
        %2911 = vmatprep.subr.bf16.mxu0 0
        %2912 = vmatpush1.bf16.msra.mxu0 0
        %2913 = vmatprep.mubr.bf16.mxu0 0
        %2914 = vmatmul.mubr.bf16.gmra.mrb[0].mxu0 %v2808
        %v2915 = vpop.f32.mrb[0].mxu0
        %v2916 = vadd.f32 0.0, %v2915
        %v2917 = vpop.f32.mrb[0].mxu0
        %v2918 = vadd.f32 0.0, %v2917
        %v2919 = vpop.f32.mrb[0].mxu0
        %v2920 = vadd.f32 0.0, %v2919
        %v2921 = vpop.f32.mrb[0].mxu0
        %v2922 = vadd.f32 0.0, %v2921
        %2923 = vmatprep.mubr.bf16.mxu0 0
        %2924 = vmatmul.mubr.bf16.gmra.mrb[0].mxu0 %v2809
        %v2925 = vpop.f32.mrb[0].mxu0
        %v2926 = vadd.f32 0.0, %v2925
        %v2927 = vpop.f32.mrb[0].mxu0
        %v2928 = vadd.f32 0.0, %v2927
        %v2929 = vpop.f32.mrb[0].mxu0
        %v2930 = vadd.f32 0.0, %v2929
        %v2931 = vpop.f32.mrb[0].mxu0
        %v2932 = vadd.f32 0.0, %v2931
        %2933 = vmatprep.mubr.bf16.mxu0 0
        %2934 = vmatmul.mubr.bf16.gmra.mrb[0].mxu0 %v2810
        %v2935 = vpop.f32.mrb[0].mxu0
        %v2936 = vadd.f32 0.0, %v2935
        %v2937 = vpop.f32.mrb[0].mxu0
        %v2938 = vadd.f32 0.0, %v2937
        %v2939 = vpop.f32.mrb[0].mxu0
        %v2940 = vadd.f32 0.0, %v2939
        %v2941 = vpop.f32.mrb[0].mxu0
        %v2942 = vadd.f32 0.0, %v2941
        %2943 = vmatprep.mubr.bf16.mxu0 0
        %2944 = vmatmul.mubr.bf16.gmra.mrb[0].mxu0 %v2811
        %v2945 = vpop.f32.mrb[0].mxu0
        %v2946 = vadd.f32 0.0, %v2945
        %v2947 = vpop.f32.mrb[0].mxu0
        %v2948 = vadd.f32 0.0, %v2947
        %v2949 = vpop.f32.mrb[0].mxu0
        %v2950 = vadd.f32 0.0, %v2949
        %v2951 = vpop.f32.mrb[0].mxu0
        %v2952 = vadd.f32 0.0, %v2951
        %2953 = vmatprep.mubr.bf16.mxu0 0
        %2954 = vmatmul.mubr.bf16.gmra.mrb[0].mxu0 %v2812
        %v2955 = vpop.f32.mrb[0].mxu0
        %v2956 = vadd.f32 0.0, %v2955
        %v2957 = vpop.f32.mrb[0].mxu0
        %v2958 = vadd.f32 0.0, %v2957
        %v2959 = vpop.f32.mrb[0].mxu0
        %v2960 = vadd.f32 0.0, %v2959
        %v2961 = vpop.f32.mrb[0].mxu0
        %v2962 = vadd.f32 0.0, %v2961
        %2963 = vmatprep.mubr.bf16.mxu0 0
        %2964 = vmatmul.mubr.bf16.gmra.mrb[0].mxu0 %v2813
        %v2965 = vpop.f32.mrb[0].mxu0
        %v2966 = vadd.f32 0.0, %v2965
        %v2967 = vpop.f32.mrb[0].mxu0
        %v2968 = vadd.f32 0.0, %v2967
        %v2969 = vpop.f32.mrb[0].mxu0
        %v2970 = vadd.f32 0.0, %v2969
        %v2971 = vpop.f32.mrb[0].mxu0
        %v2972 = vadd.f32 0.0, %v2971
        %2973 = vmatprep.mubr.bf16.mxu0 0
        %2974 = vmatmul.mubr.bf16.gmra.mrb[0].mxu0 %v2814
        %v2975 = vpop.f32.mrb[0].mxu0
        %v2976 = vadd.f32 0.0, %v2975
        %v2977 = vpop.f32.mrb[0].mxu0
        %v2978 = vadd.f32 0.0, %v2977
        %v2979 = vpop.f32.mrb[0].mxu0
        %v2980 = vadd.f32 0.0, %v2979
        %v2981 = vpop.f32.mrb[0].mxu0
        %v2982 = vadd.f32 0.0, %v2981
        %2983 = vmatprep.mubr.bf16.mxu0 0
        %2984 = vmatmul.mubr.bf16.gmra.mrb[0].mxu0 %v2815
        %v2985 = vpop.f32.mrb[0].mxu0
        %v2986 = vadd.f32 0.0, %v2985
        %v2987 = vpop.f32.mrb[0].mxu0
        %v2988 = vadd.f32 0.0, %v2987
        %v2989 = vpop.f32.mrb[0].mxu0
        %v2990 = vadd.f32 0.0, %v2989
        %v2991 = vpop.f32.mrb[0].mxu0
        %v2992 = vadd.f32 0.0, %v2991
        %2993 = vdwg.mxu0
        %v2994 = vadd.f32 %v2725, %v2916
        %v2995 = vadd.f32 %v2726, %v2918
        %v2996 = vadd.f32 %v2727, %v2920
        %v2997 = vadd.f32 %v2728, %v2922
        %v2998 = vadd.f32 %v2729, %v2926
        %v2999 = vadd.f32 %v2730, %v2928
        %v3000 = vadd.f32 %v2731, %v2930
        %v3001 = vadd.f32 %v2732, %v2932
        %v3002 = vadd.f32 %v2733, %v2936
        %v3003 = vadd.f32 %v2734, %v2938
        %v3004 = vadd.f32 %v2735, %v2940
        %v3005 = vadd.f32 %v2736, %v2942
        %v3006 = vadd.f32 %v2737, %v2946
        %v3007 = vadd.f32 %v2738, %v2948
        %v3008 = vadd.f32 %v2739, %v2950
        %v3009 = vadd.f32 %v2740, %v2952
        %v3010 = vadd.f32 %v2741, %v2956
        %v3011 = vadd.f32 %v2742, %v2958
        %v3012 = vadd.f32 %v2743, %v2960
        %v3013 = vadd.f32 %v2744, %v2962
        %v3014 = vadd.f32 %v2745, %v2966
        %v3015 = vadd.f32 %v2746, %v2968
        %v3016 = vadd.f32 %v2747, %v2970
        %v3017 = vadd.f32 %v2748, %v2972
        %v3018 = vadd.f32 %v2749, %v2976
        %v3019 = vadd.f32 %v2750, %v2978
        %v3020 = vadd.f32 %v2751, %v2980
        %v3021 = vadd.f32 %v2752, %v2982
        %v3022 = vadd.f32 %v2753, %v2986
        %v3023 = vadd.f32 %v2754, %v2988
        %v3024 = vadd.f32 %v2755, %v2990
        %v3025 = vadd.f32 %v2756, %v2992
        %s3026 = sadd.s32 96, %s1396
        %s3027 = smul.addr %s3026, 4
        %s3028 = scalar_lea.vmem %s258, %s3027
        %v3029 = vld [vmem:[%s3028] sm:$0xf]
        %v3030 = vld [vmem:[%s3028 + $0x4] sm:$0xf]
        %v3031 = vld [vmem:[%s3028 + $0x8] sm:$0xf]
        %v3032 = vld [vmem:[%s3028 + $0xc] sm:$0xf]
        %v3033 = vld [vmem:[%s3028 + $0x10] sm:$0xf]
        %v3034 = vld [vmem:[%s3028 + $0x14] sm:$0xf]
        %v3035 = vld [vmem:[%s3028 + $0x18] sm:$0xf]
        %v3036 = vld [vmem:[%s3028 + $0x1c] sm:$0xf]
        %v3037 = vld [vmem:[%s3028 + $0x20] sm:$0xf]
        %v3038 = vld [vmem:[%s3028 + $0x24] sm:$0xf]
        %v3039 = vld [vmem:[%s3028 + $0x28] sm:$0xf]
        %v3040 = vld [vmem:[%s3028 + $0x2c] sm:$0xf]
        %v3041 = vld [vmem:[%s3028 + $0x30] sm:$0xf]
        %v3042 = vld [vmem:[%s3028 + $0x34] sm:$0xf]
        %v3043 = vld [vmem:[%s3028 + $0x38] sm:$0xf]
        %v3044 = vld [vmem:[%s3028 + $0x3c] sm:$0xf]
        %v3061 = vunpack.c.l.b16 %v3029
        %v3062 = vunpack.c.l.b16 %v3030
        %v3063 = vunpack.c.l.b16 %v3031
        %v3064 = vunpack.c.l.b16 %v3032
        %v3065 = vunpack.c.l.b16 %v3033
        %v3066 = vunpack.c.l.b16 %v3034
        %v3067 = vunpack.c.l.b16 %v3035
        %v3068 = vunpack.c.l.b16 %v3036
        %v3069 = vunpack.c.l.b16 %v3037
        %v3070 = vunpack.c.l.b16 %v3038
        %v3071 = vunpack.c.l.b16 %v3039
        %v3072 = vunpack.c.l.b16 %v3040
        %v3073 = vunpack.c.l.b16 %v3041
        %v3074 = vunpack.c.l.b16 %v3042
        %v3075 = vunpack.c.l.b16 %v3043
        %v3076 = vunpack.c.l.b16 %v3044
        %v3077 = vpack.c.b16 %v3062, %v3061
        %v3078 = vpack.c.b16 %v3064, %v3063
        %v3079 = vpack.c.b16 %v3066, %v3065
        %v3080 = vpack.c.b16 %v3068, %v3067
        %v3081 = vpack.c.b16 %v3070, %v3069
        %v3082 = vpack.c.b16 %v3072, %v3071
        %v3083 = vpack.c.b16 %v3074, %v3073
        %v3084 = vpack.c.b16 %v3076, %v3075
        %3093 = vrot.lane.b32.xlu0 %v1380, 99
        %v3094 = vpop.permute.xlu0 %3093
        %3095 = vrot.lane.b32.xlu0 %v1381, 99
        %v3096 = vpop.permute.xlu0 %3095
        %3097 = vrot.lane.b32.xlu0 %v1382, 99
        %v3098 = vpop.permute.xlu0 %3097
        %3099 = vrot.lane.b32.xlu0 %v1383, 99
        %v3100 = vpop.permute.xlu0 %3099
        %3101 = vrot.lane.b32.xlu0 %v1384, 99
        %v3102 = vpop.permute.xlu0 %3101
        %3103 = vrot.lane.b32.xlu0 %v1385, 99
        %v3104 = vpop.permute.xlu0 %3103
        %3105 = vrot.lane.b32.xlu0 %v1386, 99
        %v3106 = vpop.permute.xlu0 %3105
        %3107 = vrot.lane.b32.xlu0 %v1387, 99
        %v3108 = vpop.permute.xlu0 %3107
        %3109 = vrot.lane.b32.xlu0 %v1388, 99
        %v3110 = vpop.permute.xlu0 %3109
        %3111 = vrot.lane.b32.xlu0 %v1389, 99
        %v3112 = vpop.permute.xlu0 %3111
        %3113 = vrot.lane.b32.xlu0 %v1390, 99
        %v3114 = vpop.permute.xlu0 %3113
        %3115 = vrot.lane.b32.xlu0 %v1391, 99
        %v3116 = vpop.permute.xlu0 %3115
        %3117 = vrot.lane.b32.xlu0 %v1392, 99
        %v3118 = vpop.permute.xlu0 %3117
        %3119 = vrot.lane.b32.xlu0 %v1393, 99
        %v3120 = vpop.permute.xlu0 %3119
        %3121 = vrot.lane.b32.xlu0 %v1394, 99
        %v3122 = vpop.permute.xlu0 %3121
        %3123 = vrot.lane.b32.xlu0 %v1395, 99
        %v3124 = vpop.permute.xlu0 %3123
        %vm3125 = vcmask 809984
        %v3126 = vsel %vm3125, %v3094, %v3096
        %v3127 = vsel %vm3125, %v3098, %v3100
        %v3128 = vsel %vm3125, %v3102, %v3104
        %v3129 = vsel %vm3125, %v3106, %v3108
        %v3130 = vsel %vm3125, %v3110, %v3112
        %v3131 = vsel %vm3125, %v3114, %v3116
        %v3132 = vsel %vm3125, %v3118, %v3120
        %v3133 = vsel %vm3125, %v3122, %v3124
        %3150 = vmatprep.subr.bf16.mxu0 %v3096
        %3151 = vmatpush1.bf16.msra.mxu0 %v3126
        %3152 = vmatprep.subr.bf16.mxu0 %v3100
        %3153 = vmatpush1.bf16.msra.mxu0 %v3127
        %3154 = vmatprep.subr.bf16.mxu0 %v3104
        %3155 = vmatpush1.bf16.msra.mxu0 %v3128
        %3156 = vmatprep.subr.bf16.mxu0 %v3108
        %3157 = vmatpush1.bf16.msra.mxu0 %v3129
        %3158 = vmatprep.subr.bf16.mxu0 %v3112
        %3159 = vmatpush1.bf16.msra.mxu0 %v3130
        %3160 = vmatprep.subr.bf16.mxu0 %v3116
        %3161 = vmatpush1.bf16.msra.mxu0 %v3131
        %3162 = vmatprep.subr.bf16.mxu0 %v3120
        %3163 = vmatpush1.bf16.msra.mxu0 %v3132
        %3164 = vmatprep.subr.bf16.mxu0 %v3124
        %3165 = vmatpush1.bf16.msra.mxu0 %v3133
        %3166 = vmatprep.subr.bf16.mxu0 0
        %3167 = vmatpush1.bf16.msra.mxu0 0
        %3168 = vmatprep.subr.bf16.mxu0 0
        %3169 = vmatpush1.bf16.msra.mxu0 0
        %3170 = vmatprep.subr.bf16.mxu0 0
        %3171 = vmatpush1.bf16.msra.mxu0 0
        %3172 = vmatprep.subr.bf16.mxu0 0
        %3173 = vmatpush1.bf16.msra.mxu0 0
        %3174 = vmatprep.subr.bf16.mxu0 0
        %3175 = vmatpush1.bf16.msra.mxu0 0
        %3176 = vmatprep.subr.bf16.mxu0 0
        %3177 = vmatpush1.bf16.msra.mxu0 0
        %3178 = vmatprep.subr.bf16.mxu0 0
        %3179 = vmatpush1.bf16.msra.mxu0 0
        %3180 = vmatprep.subr.bf16.mxu0 0
        %3181 = vmatpush1.bf16.msra.mxu0 0
        %3182 = vmatprep.mubr.bf16.mxu0 0
        %3183 = vmatmul.mubr.bf16.gmra.mrb[0].mxu0 %v3077
        %v3184 = vpop.f32.mrb[0].mxu0
        %v3185 = vadd.f32 0.0, %v3184
        %v3186 = vpop.f32.mrb[0].mxu0
        %v3187 = vadd.f32 0.0, %v3186
        %v3188 = vpop.f32.mrb[0].mxu0
        %v3189 = vadd.f32 0.0, %v3188
        %v3190 = vpop.f32.mrb[0].mxu0
        %v3191 = vadd.f32 0.0, %v3190
        %3192 = vmatprep.mubr.bf16.mxu0 0
        %3193 = vmatmul.mubr.bf16.gmra.mrb[0].mxu0 %v3078
        %v3194 = vpop.f32.mrb[0].mxu0
        %v3195 = vadd.f32 0.0, %v3194
        %v3196 = vpop.f32.mrb[0].mxu0
        %v3197 = vadd.f32 0.0, %v3196
        %v3198 = vpop.f32.mrb[0].mxu0
        %v3199 = vadd.f32 0.0, %v3198
        %v3200 = vpop.f32.mrb[0].mxu0
        %v3201 = vadd.f32 0.0, %v3200
        %3202 = vmatprep.mubr.bf16.mxu0 0
        %3203 = vmatmul.mubr.bf16.gmra.mrb[0].mxu0 %v3079
        %v3204 = vpop.f32.mrb[0].mxu0
        %v3205 = vadd.f32 0.0, %v3204
        %v3206 = vpop.f32.mrb[0].mxu0
        %v3207 = vadd.f32 0.0, %v3206
        %v3208 = vpop.f32.mrb[0].mxu0
        %v3209 = vadd.f32 0.0, %v3208
        %v3210 = vpop.f32.mrb[0].mxu0
        %v3211 = vadd.f32 0.0, %v3210
        %3212 = vmatprep.mubr.bf16.mxu0 0
        %3213 = vmatmul.mubr.bf16.gmra.mrb[0].mxu0 %v3080
        %v3214 = vpop.f32.mrb[0].mxu0
        %v3215 = vadd.f32 0.0, %v3214
        %v3216 = vpop.f32.mrb[0].mxu0
        %v3217 = vadd.f32 0.0, %v3216
        %v3218 = vpop.f32.mrb[0].mxu0
        %v3219 = vadd.f32 0.0, %v3218
        %v3220 = vpop.f32.mrb[0].mxu0
        %v3221 = vadd.f32 0.0, %v3220
        %3222 = vmatprep.mubr.bf16.mxu0 0
        %3223 = vmatmul.mubr.bf16.gmra.mrb[0].mxu0 %v3081
        %v3224 = vpop.f32.mrb[0].mxu0
        %v3225 = vadd.f32 0.0, %v3224
        %v3226 = vpop.f32.mrb[0].mxu0
        %v3227 = vadd.f32 0.0, %v3226
        %v3228 = vpop.f32.mrb[0].mxu0
        %v3229 = vadd.f32 0.0, %v3228
        %v3230 = vpop.f32.mrb[0].mxu0
        %v3231 = vadd.f32 0.0, %v3230
        %3232 = vmatprep.mubr.bf16.mxu0 0
        %3233 = vmatmul.mubr.bf16.gmra.mrb[0].mxu0 %v3082
        %v3234 = vpop.f32.mrb[0].mxu0
        %v3235 = vadd.f32 0.0, %v3234
        %v3236 = vpop.f32.mrb[0].mxu0
        %v3237 = vadd.f32 0.0, %v3236
        %v3238 = vpop.f32.mrb[0].mxu0
        %v3239 = vadd.f32 0.0, %v3238
        %v3240 = vpop.f32.mrb[0].mxu0
        %v3241 = vadd.f32 0.0, %v3240
        %3242 = vmatprep.mubr.bf16.mxu0 0
        %3243 = vmatmul.mubr.bf16.gmra.mrb[0].mxu0 %v3083
        %v3244 = vpop.f32.mrb[0].mxu0
        %v3245 = vadd.f32 0.0, %v3244
        %v3246 = vpop.f32.mrb[0].mxu0
        %v3247 = vadd.f32 0.0, %v3246
        %v3248 = vpop.f32.mrb[0].mxu0
        %v3249 = vadd.f32 0.0, %v3248
        %v3250 = vpop.f32.mrb[0].mxu0
        %v3251 = vadd.f32 0.0, %v3250
        %3252 = vmatprep.mubr.bf16.mxu0 0
        %3253 = vmatmul.mubr.bf16.gmra.mrb[0].mxu0 %v3084
        %v3254 = vpop.f32.mrb[0].mxu0
        %v3255 = vadd.f32 0.0, %v3254
        %v3256 = vpop.f32.mrb[0].mxu0
        %v3257 = vadd.f32 0.0, %v3256
        %v3258 = vpop.f32.mrb[0].mxu0
        %v3259 = vadd.f32 0.0, %v3258
        %v3260 = vpop.f32.mrb[0].mxu0
        %v3261 = vadd.f32 0.0, %v3260
        %3262 = vdwg.mxu0
        %v3263 = vadd.f32 %v2994, %v3185
        %v3264 = vadd.f32 %v2995, %v3187
        %v3265 = vadd.f32 %v2996, %v3189
        %v3266 = vadd.f32 %v2997, %v3191
        %v3267 = vadd.f32 %v2998, %v3195
        %v3268 = vadd.f32 %v2999, %v3197
        %v3269 = vadd.f32 %v3000, %v3199
        %v3270 = vadd.f32 %v3001, %v3201
        %v3271 = vadd.f32 %v3002, %v3205
        %v3272 = vadd.f32 %v3003, %v3207
        %v3273 = vadd.f32 %v3004, %v3209
        %v3274 = vadd.f32 %v3005, %v3211
        %v3275 = vadd.f32 %v3006, %v3215
        %v3276 = vadd.f32 %v3007, %v3217
        %v3277 = vadd.f32 %v3008, %v3219
        %v3278 = vadd.f32 %v3009, %v3221
        %v3279 = vadd.f32 %v3010, %v3225
        %v3280 = vadd.f32 %v3011, %v3227
        %v3281 = vadd.f32 %v3012, %v3229
        %v3282 = vadd.f32 %v3013, %v3231
        %v3283 = vadd.f32 %v3014, %v3235
        %v3284 = vadd.f32 %v3015, %v3237
        %v3285 = vadd.f32 %v3016, %v3239
        %v3286 = vadd.f32 %v3017, %v3241
        %v3287 = vadd.f32 %v3018, %v3245
        %v3288 = vadd.f32 %v3019, %v3247
        %v3289 = vadd.f32 %v3020, %v3249
        %v3290 = vadd.f32 %v3021, %v3251
        %v3291 = vadd.f32 %v3022, %v3255
        %v3292 = vadd.f32 %v3023, %v3257
        %v3293 = vadd.f32 %v3024, %v3259
        %v3294 = vadd.f32 %v3025, %v3261
        %s3295 = sadd.s32 112, %s1396
        %s3296 = smul.addr %s3295, 4
        %s3297 = scalar_lea.vmem %s258, %s3296
        %v3298 = vld [vmem:[%s3297] sm:$0xf]
        %v3299 = vld [vmem:[%s3297 + $0x4] sm:$0xf]
        %v3300 = vld [vmem:[%s3297 + $0x8] sm:$0xf]
        %v3301 = vld [vmem:[%s3297 + $0xc] sm:$0xf]
        %v3302 = vld [vmem:[%s3297 + $0x10] sm:$0xf]
        %v3303 = vld [vmem:[%s3297 + $0x14] sm:$0xf]
        %v3304 = vld [vmem:[%s3297 + $0x18] sm:$0xf]
        %v3305 = vld [vmem:[%s3297 + $0x1c] sm:$0xf]
        %v3306 = vld [vmem:[%s3297 + $0x20] sm:$0xf]
        %v3307 = vld [vmem:[%s3297 + $0x24] sm:$0xf]
        %v3308 = vld [vmem:[%s3297 + $0x28] sm:$0xf]
        %v3309 = vld [vmem:[%s3297 + $0x2c] sm:$0xf]
        %v3310 = vld [vmem:[%s3297 + $0x30] sm:$0xf]
        %v3311 = vld [vmem:[%s3297 + $0x34] sm:$0xf]
        %v3312 = vld [vmem:[%s3297 + $0x38] sm:$0xf]
        %v3313 = vld [vmem:[%s3297 + $0x3c] sm:$0xf]
        %v3330 = vunpack.c.l.b16 %v3298
        %v3331 = vunpack.c.l.b16 %v3299
        %v3332 = vunpack.c.l.b16 %v3300
        %v3333 = vunpack.c.l.b16 %v3301
        %v3334 = vunpack.c.l.b16 %v3302
        %v3335 = vunpack.c.l.b16 %v3303
        %v3336 = vunpack.c.l.b16 %v3304
        %v3337 = vunpack.c.l.b16 %v3305
        %v3338 = vunpack.c.l.b16 %v3306
        %v3339 = vunpack.c.l.b16 %v3307
        %v3340 = vunpack.c.l.b16 %v3308
        %v3341 = vunpack.c.l.b16 %v3309
        %v3342 = vunpack.c.l.b16 %v3310
        %v3343 = vunpack.c.l.b16 %v3311
        %v3344 = vunpack.c.l.b16 %v3312
        %v3345 = vunpack.c.l.b16 %v3313
        %v3346 = vpack.c.b16 %v3331, %v3330
        %v3347 = vpack.c.b16 %v3333, %v3332
        %v3348 = vpack.c.b16 %v3335, %v3334
        %v3349 = vpack.c.b16 %v3337, %v3336
        %v3350 = vpack.c.b16 %v3339, %v3338
        %v3351 = vpack.c.b16 %v3341, %v3340
        %v3352 = vpack.c.b16 %v3343, %v3342
        %v3353 = vpack.c.b16 %v3345, %v3344
        %3362 = vrot.lane.b32.xlu0 %v1415, 98
        %v3363 = vpop.permute.xlu0 %3362
        %3364 = vrot.lane.b32.xlu0 %v1416, 98
        %v3365 = vpop.permute.xlu0 %3364
        %3366 = vrot.lane.b32.xlu0 %v1417, 98
        %v3367 = vpop.permute.xlu0 %3366
        %3368 = vrot.lane.b32.xlu0 %v1418, 98
        %v3369 = vpop.permute.xlu0 %3368
        %3370 = vrot.lane.b32.xlu0 %v1419, 98
        %v3371 = vpop.permute.xlu0 %3370
        %3372 = vrot.lane.b32.xlu0 %v1420, 98
        %v3373 = vpop.permute.xlu0 %3372
        %3374 = vrot.lane.b32.xlu0 %v1421, 98
        %v3375 = vpop.permute.xlu0 %3374
        %3376 = vrot.lane.b32.xlu0 %v1422, 98
        %v3377 = vpop.permute.xlu0 %3376
        %3378 = vrot.lane.b32.xlu0 %v1423, 98
        %v3379 = vpop.permute.xlu0 %3378
        %3380 = vrot.lane.b32.xlu0 %v1424, 98
        %v3381 = vpop.permute.xlu0 %3380
        %3382 = vrot.lane.b32.xlu0 %v1425, 98
        %v3383 = vpop.permute.xlu0 %3382
        %3384 = vrot.lane.b32.xlu0 %v1426, 98
        %v3385 = vpop.permute.xlu0 %3384
        %3386 = vrot.lane.b32.xlu0 %v1427, 98
        %v3387 = vpop.permute.xlu0 %3386
        %3388 = vrot.lane.b32.xlu0 %v1428, 98
        %v3389 = vpop.permute.xlu0 %3388
        %3390 = vrot.lane.b32.xlu0 %v1429, 98
        %v3391 = vpop.permute.xlu0 %3390
        %3392 = vrot.lane.b32.xlu0 %v1430, 98
        %v3393 = vpop.permute.xlu0 %3392
        %vm3394 = vcmask 801792
        %v3395 = vsel %vm3394, %v3363, %v3365
        %v3396 = vsel %vm3394, %v3367, %v3369
        %v3397 = vsel %vm3394, %v3371, %v3373
        %v3398 = vsel %vm3394, %v3375, %v3377
        %v3399 = vsel %vm3394, %v3379, %v3381
        %v3400 = vsel %vm3394, %v3383, %v3385
        %v3401 = vsel %vm3394, %v3387, %v3389
        %v3402 = vsel %vm3394, %v3391, %v3393
        %3419 = vmatprep.subr.bf16.mxu0 %v3365
        %3420 = vmatpush1.bf16.msra.mxu0 %v3395
        %3421 = vmatprep.subr.bf16.mxu0 %v3369
        %3422 = vmatpush1.bf16.msra.mxu0 %v3396
        %3423 = vmatprep.subr.bf16.mxu0 %v3373
        %3424 = vmatpush1.bf16.msra.mxu0 %v3397
        %3425 = vmatprep.subr.bf16.mxu0 %v3377
        %3426 = vmatpush1.bf16.msra.mxu0 %v3398
        %3427 = vmatprep.subr.bf16.mxu0 %v3381
        %3428 = vmatpush1.bf16.msra.mxu0 %v3399
        %3429 = vmatprep.subr.bf16.mxu0 %v3385
        %3430 = vmatpush1.bf16.msra.mxu0 %v3400
        %3431 = vmatprep.subr.bf16.mxu0 %v3389
        %3432 = vmatpush1.bf16.msra.mxu0 %v3401
        %3433 = vmatprep.subr.bf16.mxu0 %v3393
        %3434 = vmatpush1.bf16.msra.mxu0 %v3402
        %3435 = vmatprep.subr.bf16.mxu0 0
        %3436 = vmatpush1.bf16.msra.mxu0 0
        %3437 = vmatprep.subr.bf16.mxu0 0
        %3438 = vmatpush1.bf16.msra.mxu0 0
        %3439 = vmatprep.subr.bf16.mxu0 0
        %3440 = vmatpush1.bf16.msra.mxu0 0
        %3441 = vmatprep.subr.bf16.mxu0 0
        %3442 = vmatpush1.bf16.msra.mxu0 0
        %3443 = vmatprep.subr.bf16.mxu0 0
        %3444 = vmatpush1.bf16.msra.mxu0 0
        %3445 = vmatprep.subr.bf16.mxu0 0
        %3446 = vmatpush1.bf16.msra.mxu0 0
        %3447 = vmatprep.subr.bf16.mxu0 0
        %3448 = vmatpush1.bf16.msra.mxu0 0
        %3449 = vmatprep.subr.bf16.mxu0 0
        %3450 = vmatpush1.bf16.msra.mxu0 0
        %3451 = vmatprep.mubr.bf16.mxu0 0
        %3452 = vmatmul.mubr.bf16.gmra.mrb[0].mxu0 %v3346
        %v3453 = vpop.f32.mrb[0].mxu0
        %v3454 = vadd.f32 0.0, %v3453
        %v3455 = vpop.f32.mrb[0].mxu0
        %v3456 = vadd.f32 0.0, %v3455
        %v3457 = vpop.f32.mrb[0].mxu0
        %v3458 = vadd.f32 0.0, %v3457
        %v3459 = vpop.f32.mrb[0].mxu0
        %v3460 = vadd.f32 0.0, %v3459
        %3461 = vmatprep.mubr.bf16.mxu0 0
        %3462 = vmatmul.mubr.bf16.gmra.mrb[0].mxu0 %v3347
        %v3463 = vpop.f32.mrb[0].mxu0
        %v3464 = vadd.f32 0.0, %v3463
        %v3465 = vpop.f32.mrb[0].mxu0
        %v3466 = vadd.f32 0.0, %v3465
        %v3467 = vpop.f32.mrb[0].mxu0
        %v3468 = vadd.f32 0.0, %v3467
        %v3469 = vpop.f32.mrb[0].mxu0
        %v3470 = vadd.f32 0.0, %v3469
        %3471 = vmatprep.mubr.bf16.mxu0 0
        %3472 = vmatmul.mubr.bf16.gmra.mrb[0].mxu0 %v3348
        %v3473 = vpop.f32.mrb[0].mxu0
        %v3474 = vadd.f32 0.0, %v3473
        %v3475 = vpop.f32.mrb[0].mxu0
        %v3476 = vadd.f32 0.0, %v3475
        %v3477 = vpop.f32.mrb[0].mxu0
        %v3478 = vadd.f32 0.0, %v3477
        %v3479 = vpop.f32.mrb[0].mxu0
        %v3480 = vadd.f32 0.0, %v3479
        %3481 = vmatprep.mubr.bf16.mxu0 0
        %3482 = vmatmul.mubr.bf16.gmra.mrb[0].mxu0 %v3349
        %v3483 = vpop.f32.mrb[0].mxu0
        %v3484 = vadd.f32 0.0, %v3483
        %v3485 = vpop.f32.mrb[0].mxu0
        %v3486 = vadd.f32 0.0, %v3485
        %v3487 = vpop.f32.mrb[0].mxu0
        %v3488 = vadd.f32 0.0, %v3487
        %v3489 = vpop.f32.mrb[0].mxu0
        %v3490 = vadd.f32 0.0, %v3489
        %3491 = vmatprep.mubr.bf16.mxu0 0
        %3492 = vmatmul.mubr.bf16.gmra.mrb[0].mxu0 %v3350
        %v3493 = vpop.f32.mrb[0].mxu0
        %v3494 = vadd.f32 0.0, %v3493
        %v3495 = vpop.f32.mrb[0].mxu0
        %v3496 = vadd.f32 0.0, %v3495
        %v3497 = vpop.f32.mrb[0].mxu0
        %v3498 = vadd.f32 0.0, %v3497
        %v3499 = vpop.f32.mrb[0].mxu0
        %v3500 = vadd.f32 0.0, %v3499
        %3501 = vmatprep.mubr.bf16.mxu0 0
        %3502 = vmatmul.mubr.bf16.gmra.mrb[0].mxu0 %v3351
        %v3503 = vpop.f32.mrb[0].mxu0
        %v3504 = vadd.f32 0.0, %v3503
        %v3505 = vpop.f32.mrb[0].mxu0
        %v3506 = vadd.f32 0.0, %v3505
        %v3507 = vpop.f32.mrb[0].mxu0
        %v3508 = vadd.f32 0.0, %v3507
        %v3509 = vpop.f32.mrb[0].mxu0
        %v3510 = vadd.f32 0.0, %v3509
        %3511 = vmatprep.mubr.bf16.mxu0 0
        %3512 = vmatmul.mubr.bf16.gmra.mrb[0].mxu0 %v3352
        %v3513 = vpop.f32.mrb[0].mxu0
        %v3514 = vadd.f32 0.0, %v3513
        %v3515 = vpop.f32.mrb[0].mxu0
        %v3516 = vadd.f32 0.0, %v3515
        %v3517 = vpop.f32.mrb[0].mxu0
        %v3518 = vadd.f32 0.0, %v3517
        %v3519 = vpop.f32.mrb[0].mxu0
        %v3520 = vadd.f32 0.0, %v3519
        %3521 = vmatprep.mubr.bf16.mxu0 0
        %3522 = vmatmul.mubr.bf16.gmra.mrb[0].mxu0 %v3353
        %v3523 = vpop.f32.mrb[0].mxu0
        %v3524 = vadd.f32 0.0, %v3523
        %v3525 = vpop.f32.mrb[0].mxu0
        %v3526 = vadd.f32 0.0, %v3525
        %v3527 = vpop.f32.mrb[0].mxu0
        %v3528 = vadd.f32 0.0, %v3527
        %v3529 = vpop.f32.mrb[0].mxu0
        %v3530 = vadd.f32 0.0, %v3529
        %3531 = vdwg.mxu0
        %v3532 = vadd.f32 %v3263, %v3454
        %v3533 = vadd.f32 %v3264, %v3456
        %v3534 = vadd.f32 %v3265, %v3458
        %v3535 = vadd.f32 %v3266, %v3460
        %v3536 = vadd.f32 %v3267, %v3464
        %v3537 = vadd.f32 %v3268, %v3466
        %v3538 = vadd.f32 %v3269, %v3468
        %v3539 = vadd.f32 %v3270, %v3470
        %v3540 = vadd.f32 %v3271, %v3474
        %v3541 = vadd.f32 %v3272, %v3476
        %v3542 = vadd.f32 %v3273, %v3478
        %v3543 = vadd.f32 %v3274, %v3480
        %v3544 = vadd.f32 %v3275, %v3484
        %v3545 = vadd.f32 %v3276, %v3486
        %v3546 = vadd.f32 %v3277, %v3488
        %v3547 = vadd.f32 %v3278, %v3490
        %v3548 = vadd.f32 %v3279, %v3494
        %v3549 = vadd.f32 %v3280, %v3496
        %v3550 = vadd.f32 %v3281, %v3498
        %v3551 = vadd.f32 %v3282, %v3500
        %v3552 = vadd.f32 %v3283, %v3504
        %v3553 = vadd.f32 %v3284, %v3506
        %v3554 = vadd.f32 %v3285, %v3508
        %v3555 = vadd.f32 %v3286, %v3510
        %v3556 = vadd.f32 %v3287, %v3514
        %v3557 = vadd.f32 %v3288, %v3516
        %v3558 = vadd.f32 %v3289, %v3518
        %v3559 = vadd.f32 %v3290, %v3520
        %v3560 = vadd.f32 %v3291, %v3524
        %v3561 = vadd.f32 %v3292, %v3526
        %v3562 = vadd.f32 %v3293, %v3528
        %v3563 = vadd.f32 %v3294, %v3530
        %s3564 = sadd.s32 128, %s1396
        %s3565 = smul.addr %s3564, 4
        %s3566 = scalar_lea.vmem %s258, %s3565
        %v3567 = vld [vmem:[%s3566] sm:$0xf]
        %v3568 = vld [vmem:[%s3566 + $0x4] sm:$0xf]
        %v3569 = vld [vmem:[%s3566 + $0x8] sm:$0xf]
        %v3570 = vld [vmem:[%s3566 + $0xc] sm:$0xf]
        %v3571 = vld [vmem:[%s3566 + $0x10] sm:$0xf]
        %v3572 = vld [vmem:[%s3566 + $0x14] sm:$0xf]
        %v3573 = vld [vmem:[%s3566 + $0x18] sm:$0xf]
        %v3574 = vld [vmem:[%s3566 + $0x1c] sm:$0xf]
        %v3575 = vld [vmem:[%s3566 + $0x20] sm:$0xf]
        %v3576 = vld [vmem:[%s3566 + $0x24] sm:$0xf]
        %v3577 = vld [vmem:[%s3566 + $0x28] sm:$0xf]
        %v3578 = vld [vmem:[%s3566 + $0x2c] sm:$0xf]
        %v3579 = vld [vmem:[%s3566 + $0x30] sm:$0xf]
        %v3580 = vld [vmem:[%s3566 + $0x34] sm:$0xf]
        %v3581 = vld [vmem:[%s3566 + $0x38] sm:$0xf]
        %v3582 = vld [vmem:[%s3566 + $0x3c] sm:$0xf]
        %v3599 = vunpack.c.l.b16 %v3567
        %v3600 = vunpack.c.l.b16 %v3568
        %v3601 = vunpack.c.l.b16 %v3569
        %v3602 = vunpack.c.l.b16 %v3570
        %v3603 = vunpack.c.l.b16 %v3571
        %v3604 = vunpack.c.l.b16 %v3572
        %v3605 = vunpack.c.l.b16 %v3573
        %v3606 = vunpack.c.l.b16 %v3574
        %v3607 = vunpack.c.l.b16 %v3575
        %v3608 = vunpack.c.l.b16 %v3576
        %v3609 = vunpack.c.l.b16 %v3577
        %v3610 = vunpack.c.l.b16 %v3578
        %v3611 = vunpack.c.l.b16 %v3579
        %v3612 = vunpack.c.l.b16 %v3580
        %v3613 = vunpack.c.l.b16 %v3581
        %v3614 = vunpack.c.l.b16 %v3582
        %v3615 = vpack.c.b16 %v3600, %v3599
        %v3616 = vpack.c.b16 %v3602, %v3601
        %v3617 = vpack.c.b16 %v3604, %v3603
        %v3618 = vpack.c.b16 %v3606, %v3605
        %v3619 = vpack.c.b16 %v3608, %v3607
        %v3620 = vpack.c.b16 %v3610, %v3609
        %v3621 = vpack.c.b16 %v3612, %v3611
        %v3622 = vpack.c.b16 %v3614, %v3613
        %3631 = vrot.lane.b32.xlu0 %v1918, 97
        %v3632 = vpop.permute.xlu0 %3631
        %3633 = vrot.lane.b32.xlu0 %v1919, 97
        %v3634 = vpop.permute.xlu0 %3633
        %3635 = vrot.lane.b32.xlu0 %v1920, 97
        %v3636 = vpop.permute.xlu0 %3635
        %3637 = vrot.lane.b32.xlu0 %v1921, 97
        %v3638 = vpop.permute.xlu0 %3637
        %3639 = vrot.lane.b32.xlu0 %v1922, 97
        %v3640 = vpop.permute.xlu0 %3639
        %3641 = vrot.lane.b32.xlu0 %v1923, 97
        %v3642 = vpop.permute.xlu0 %3641
        %3643 = vrot.lane.b32.xlu0 %v1924, 97
        %v3644 = vpop.permute.xlu0 %3643
        %3645 = vrot.lane.b32.xlu0 %v1925, 97
        %v3646 = vpop.permute.xlu0 %3645
        %3647 = vrot.lane.b32.xlu0 %v1926, 97
        %v3648 = vpop.permute.xlu0 %3647
        %3649 = vrot.lane.b32.xlu0 %v1927, 97
        %v3650 = vpop.permute.xlu0 %3649
        %3651 = vrot.lane.b32.xlu0 %v1928, 97
        %v3652 = vpop.permute.xlu0 %3651
        %3653 = vrot.lane.b32.xlu0 %v1929, 97
        %v3654 = vpop.permute.xlu0 %3653
        %3655 = vrot.lane.b32.xlu0 %v1930, 97
        %v3656 = vpop.permute.xlu0 %3655
        %3657 = vrot.lane.b32.xlu0 %v1931, 97
        %v3658 = vpop.permute.xlu0 %3657
        %3659 = vrot.lane.b32.xlu0 %v1932, 97
        %v3660 = vpop.permute.xlu0 %3659
        %3661 = vrot.lane.b32.xlu0 %v1933, 97
        %v3662 = vpop.permute.xlu0 %3661
        %vm3663 = vcmask 793600
        %v3664 = vsel %vm3663, %v3632, %v3634
        %v3665 = vsel %vm3663, %v3636, %v3638
        %v3666 = vsel %vm3663, %v3640, %v3642
        %v3667 = vsel %vm3663, %v3644, %v3646
        %v3668 = vsel %vm3663, %v3648, %v3650
        %v3669 = vsel %vm3663, %v3652, %v3654
        %v3670 = vsel %vm3663, %v3656, %v3658
        %v3671 = vsel %vm3663, %v3660, %v3662
        %3688 = vmatprep.subr.bf16.mxu0 %v3634
        %3689 = vmatpush1.bf16.msra.mxu0 %v3664
        %3690 = vmatprep.subr.bf16.mxu0 %v3638
        %3691 = vmatpush1.bf16.msra.mxu0 %v3665
        %3692 = vmatprep.subr.bf16.mxu0 %v3642
        %3693 = vmatpush1.bf16.msra.mxu0 %v3666
        %3694 = vmatprep.subr.bf16.mxu0 %v3646
        %3695 = vmatpush1.bf16.msra.mxu0 %v3667
        %3696 = vmatprep.subr.bf16.mxu0 %v3650
        %3697 = vmatpush1.bf16.msra.mxu0 %v3668
        %3698 = vmatprep.subr.bf16.mxu0 %v3654
        %3699 = vmatpush1.bf16.msra.mxu0 %v3669
        %3700 = vmatprep.subr.bf16.mxu0 %v3658
        %3701 = vmatpush1.bf16.msra.mxu0 %v3670
        %3702 = vmatprep.subr.bf16.mxu0 %v3662
        %3703 = vmatpush1.bf16.msra.mxu0 %v3671
        %3704 = vmatprep.subr.bf16.mxu0 0
        %3705 = vmatpush1.bf16.msra.mxu0 0
        %3706 = vmatprep.subr.bf16.mxu0 0
        %3707 = vmatpush1.bf16.msra.mxu0 0
        %3708 = vmatprep.subr.bf16.mxu0 0
        %3709 = vmatpush1.bf16.msra.mxu0 0
        %3710 = vmatprep.subr.bf16.mxu0 0
        %3711 = vmatpush1.bf16.msra.mxu0 0
        %3712 = vmatprep.subr.bf16.mxu0 0
        %3713 = vmatpush1.bf16.msra.mxu0 0
        %3714 = vmatprep.subr.bf16.mxu0 0
        %3715 = vmatpush1.bf16.msra.mxu0 0
        %3716 = vmatprep.subr.bf16.mxu0 0
        %3717 = vmatpush1.bf16.msra.mxu0 0
        %3718 = vmatprep.subr.bf16.mxu0 0
        %3719 = vmatpush1.bf16.msra.mxu0 0
        %3720 = vmatprep.mubr.bf16.mxu0 0
        %3721 = vmatmul.mubr.bf16.gmra.mrb[0].mxu0 %v3615
        %v3722 = vpop.f32.mrb[0].mxu0
        %v3723 = vadd.f32 0.0, %v3722
        %v3724 = vpop.f32.mrb[0].mxu0
        %v3725 = vadd.f32 0.0, %v3724
        %v3726 = vpop.f32.mrb[0].mxu0
        %v3727 = vadd.f32 0.0, %v3726
        %v3728 = vpop.f32.mrb[0].mxu0
        %v3729 = vadd.f32 0.0, %v3728
        %3730 = vmatprep.mubr.bf16.mxu0 0
        %3731 = vmatmul.mubr.bf16.gmra.mrb[0].mxu0 %v3616
        %v3732 = vpop.f32.mrb[0].mxu0
        %v3733 = vadd.f32 0.0, %v3732
        %v3734 = vpop.f32.mrb[0].mxu0
        %v3735 = vadd.f32 0.0, %v3734
        %v3736 = vpop.f32.mrb[0].mxu0
        %v3737 = vadd.f32 0.0, %v3736
        %v3738 = vpop.f32.mrb[0].mxu0
        %v3739 = vadd.f32 0.0, %v3738
        %3740 = vmatprep.mubr.bf16.mxu0 0
        %3741 = vmatmul.mubr.bf16.gmra.mrb[0].mxu0 %v3617
        %v3742 = vpop.f32.mrb[0].mxu0
        %v3743 = vadd.f32 0.0, %v3742
        %v3744 = vpop.f32.mrb[0].mxu0
        %v3745 = vadd.f32 0.0, %v3744
        %v3746 = vpop.f32.mrb[0].mxu0
        %v3747 = vadd.f32 0.0, %v3746
        %v3748 = vpop.f32.mrb[0].mxu0
        %v3749 = vadd.f32 0.0, %v3748
        %3750 = vmatprep.mubr.bf16.mxu0 0
        %3751 = vmatmul.mubr.bf16.gmra.mrb[0].mxu0 %v3618
        %v3752 = vpop.f32.mrb[0].mxu0
        %v3753 = vadd.f32 0.0, %v3752
        %v3754 = vpop.f32.mrb[0].mxu0
        %v3755 = vadd.f32 0.0, %v3754
        %v3756 = vpop.f32.mrb[0].mxu0
        %v3757 = vadd.f32 0.0, %v3756
        %v3758 = vpop.f32.mrb[0].mxu0
        %v3759 = vadd.f32 0.0, %v3758
        %3760 = vmatprep.mubr.bf16.mxu0 0
        %3761 = vmatmul.mubr.bf16.gmra.mrb[0].mxu0 %v3619
        %v3762 = vpop.f32.mrb[0].mxu0
        %v3763 = vadd.f32 0.0, %v3762
        %v3764 = vpop.f32.mrb[0].mxu0
        %v3765 = vadd.f32 0.0, %v3764
        %v3766 = vpop.f32.mrb[0].mxu0
        %v3767 = vadd.f32 0.0, %v3766
        %v3768 = vpop.f32.mrb[0].mxu0
        %v3769 = vadd.f32 0.0, %v3768
        %3770 = vmatprep.mubr.bf16.mxu0 0
        %3771 = vmatmul.mubr.bf16.gmra.mrb[0].mxu0 %v3620
        %v3772 = vpop.f32.mrb[0].mxu0
        %v3773 = vadd.f32 0.0, %v3772
        %v3774 = vpop.f32.mrb[0].mxu0
        %v3775 = vadd.f32 0.0, %v3774
        %v3776 = vpop.f32.mrb[0].mxu0
        %v3777 = vadd.f32 0.0, %v3776
        %v3778 = vpop.f32.mrb[0].mxu0
        %v3779 = vadd.f32 0.0, %v3778
        %3780 = vmatprep.mubr.bf16.mxu0 0
        %3781 = vmatmul.mubr.bf16.gmra.mrb[0].mxu0 %v3621
        %v3782 = vpop.f32.mrb[0].mxu0
        %v3783 = vadd.f32 0.0, %v3782
        %v3784 = vpop.f32.mrb[0].mxu0
        %v3785 = vadd.f32 0.0, %v3784
        %v3786 = vpop.f32.mrb[0].mxu0
        %v3787 = vadd.f32 0.0, %v3786
        %v3788 = vpop.f32.mrb[0].mxu0
        %v3789 = vadd.f32 0.0, %v3788
        %3790 = vmatprep.mubr.bf16.mxu0 0
        %3791 = vmatmul.mubr.bf16.gmra.mrb[0].mxu0 %v3622
        %v3792 = vpop.f32.mrb[0].mxu0
        %v3793 = vadd.f32 0.0, %v3792
        %v3794 = vpop.f32.mrb[0].mxu0
        %v3795 = vadd.f32 0.0, %v3794
        %v3796 = vpop.f32.mrb[0].mxu0
        %v3797 = vadd.f32 0.0, %v3796
        %v3798 = vpop.f32.mrb[0].mxu0
        %v3799 = vadd.f32 0.0, %v3798
        %3800 = vdwg.mxu0
        %v3801 = vadd.f32 %v3532, %v3723
        %v3802 = vadd.f32 %v3533, %v3725
        %v3803 = vadd.f32 %v3534, %v3727
        %v3804 = vadd.f32 %v3535, %v3729
        %v3805 = vadd.f32 %v3536, %v3733
        %v3806 = vadd.f32 %v3537, %v3735
        %v3807 = vadd.f32 %v3538, %v3737
        %v3808 = vadd.f32 %v3539, %v3739
        %v3809 = vadd.f32 %v3540, %v3743
        %v3810 = vadd.f32 %v3541, %v3745
        %v3811 = vadd.f32 %v3542, %v3747
        %v3812 = vadd.f32 %v3543, %v3749
        %v3813 = vadd.f32 %v3544, %v3753
        %v3814 = vadd.f32 %v3545, %v3755
        %v3815 = vadd.f32 %v3546, %v3757
        %v3816 = vadd.f32 %v3547, %v3759
        %v3817 = vadd.f32 %v3548, %v3763
        %v3818 = vadd.f32 %v3549, %v3765
        %v3819 = vadd.f32 %v3550, %v3767
        %v3820 = vadd.f32 %v3551, %v3769
        %v3821 = vadd.f32 %v3552, %v3773
        %v3822 = vadd.f32 %v3553, %v3775
        %v3823 = vadd.f32 %v3554, %v3777
        %v3824 = vadd.f32 %v3555, %v3779
        %v3825 = vadd.f32 %v3556, %v3783
        %v3826 = vadd.f32 %v3557, %v3785
        %v3827 = vadd.f32 %v3558, %v3787
        %v3828 = vadd.f32 %v3559, %v3789
        %v3829 = vadd.f32 %v3560, %v3793
        %v3830 = vadd.f32 %v3561, %v3795
        %v3831 = vadd.f32 %v3562, %v3797
        %v3832 = vadd.f32 %v3563, %v3799
        %s3833 = smul.addr %s384, 8
        %s3834 = scalar_lea.vmem %s279, %s3833
        %3835 = vst [vmem:[%s3834] sm:$0xff] %v3801
        %3836 = vst.msk [vmem:[%s3834 + $0x8] sm:$0xff] %vm419, %v3802
        %3837 = vst [vmem:[%s3834 + $0x10] sm:$0xff] %v3803
        %3838 = vst.msk [vmem:[%s3834 + $0x18] sm:$0xff] %vm419, %v3804
        %3839 = vst [vmem:[%s3834 + $0x20] sm:$0xff] %v3805
        %3840 = vst.msk [vmem:[%s3834 + $0x28] sm:$0xff] %vm419, %v3806
        %3841 = vst [vmem:[%s3834 + $0x30] sm:$0xff] %v3807
        %3842 = vst.msk [vmem:[%s3834 + $0x38] sm:$0xff] %vm419, %v3808
        %3843 = vst [vmem:[%s3834 + $0x40] sm:$0xff] %v3809
        %3844 = vst.msk [vmem:[%s3834 + $0x48] sm:$0xff] %vm419, %v3810
        %3845 = vst [vmem:[%s3834 + $0x50] sm:$0xff] %v3811
        %3846 = vst.msk [vmem:[%s3834 + $0x58] sm:$0xff] %vm419, %v3812
        %3847 = vst [vmem:[%s3834 + $0x60] sm:$0xff] %v3813
        %3848 = vst.msk [vmem:[%s3834 + $0x68] sm:$0xff] %vm419, %v3814
        %3849 = vst [vmem:[%s3834 + $0x70] sm:$0xff] %v3815
        %3850 = vst.msk [vmem:[%s3834 + $0x78] sm:$0xff] %vm419, %v3816
        %3851 = vst [vmem:[%s3834 + $0x80] sm:$0xff] %v3817
        %3852 = vst.msk [vmem:[%s3834 + $0x88] sm:$0xff] %vm419, %v3818
        %3853 = vst [vmem:[%s3834 + $0x90] sm:$0xff] %v3819
        %3854 = vst.msk [vmem:[%s3834 + $0x98] sm:$0xff] %vm419, %v3820
        %3855 = vst [vmem:[%s3834 + $0xa0] sm:$0xff] %v3821
        %3856 = vst.msk [vmem:[%s3834 + $0xa8] sm:$0xff] %vm419, %v3822
        %3857 = vst [vmem:[%s3834 + $0xb0] sm:$0xff] %v3823
        %3858 = vst.msk [vmem:[%s3834 + $0xb8] sm:$0xff] %vm419, %v3824
        %3859 = vst [vmem:[%s3834 + $0xc0] sm:$0xff] %v3825
        %3860 = vst.msk [vmem:[%s3834 + $0xc8] sm:$0xff] %vm419, %v3826
        %3861 = vst [vmem:[%s3834 + $0xd0] sm:$0xff] %v3827
        %3862 = vst.msk [vmem:[%s3834 + $0xd8] sm:$0xff] %vm419, %v3828
        %3863 = vst [vmem:[%s3834 + $0xe0] sm:$0xff] %v3829
        %3864 = vst.msk [vmem:[%s3834 + $0xe8] sm:$0xff] %vm419, %v3830
        %3865 = vst [vmem:[%s3834 + $0xf0] sm:$0xff] %v3831
        %3866 = vst.msk [vmem:[%s3834 + $0xf8] sm:$0xff] %vm419, %v3832
      $region41: #{bn_relu_groupconv.1} parent=35 // loop_footer
        %s383 = sadd.s32 1, %s379
      $region42: #{bn_relu_groupconv.1} parent=35 // loop_footer_branch
        %378 = sbr.rel target = $region38
      $region43: #{bn_relu_groupconv.1} parent=35 // loop_exit
        _
      %s3867 = smul.u32 4, %s15
      %p3868 = scmp.lt.s32.totalorder %s3867, 7
      %s3869 = scalar_select %p3868, %s3867, 7
      %s3870 = smul.addr %s3869, 32
      %s3871 = smul.addr %s3870, 8
      %s3872 = scalar_lea.vmem %s4, %s3871
      // Predicated region
      $region44: #{bn_relu_groupconv.1} parent=35 // pred_check
        %p3873 = pneg %p137
      $region45: #{bn_relu_groupconv.1} parent=35 // pred_check_branch
        %3875 = sbr.rel (%p3873) target = $region47
      $region46: #{bn_relu_groupconv.1} parent=35 // pred_region
        %s3876 = smul.u32 4, %s15
      $region47: #{bn_relu_groupconv.1} parent=35 // pred_fallthru
        _
    $region36: #{bn_relu_groupconv.1} parent=5 // pred_fallthru
      _
    %p3877 = scmp.le.s32.totalorder 2, %s10
    // Predicated region
    $region48: #{bn_relu_groupconv.1} parent=5 // pred_check
      %p3878 = pneg %p3877
    $region49: #{bn_relu_groupconv.1} parent=5 // pred_check_branch
      %3880 = sbr.rel (%p3878) target = $region51
    $region50: #{bn_relu_groupconv.1} parent=5 // pred_region
      %s3881 = ssub.s32 %s10, 2
      // Predicated region
      $region52: #{bn_relu_groupconv.1} parent=50 // pred_check
        %p3882 = pneg %p143
      $region53: #{bn_relu_groupconv.1} parent=50 // pred_check_branch
        %3884 = sbr.rel (%p3882) target = $region55
      $region54: #{bn_relu_groupconv.1} parent=50 // pred_region
        %s3885 = smul.u32 4, %s16
        %p3886 = scmp.lt.s32.totalorder %s3885, 7
        %s3887 = scalar_select %p3886, %s3885, 7
        %s3888 = smul.addr %s3887, 32
        %s3889 = smul.addr %s3888, 8
        %s3890 = scalar_lea.vmem %s4, %s3889
      $region55: #{bn_relu_groupconv.1} parent=50 // pred_fallthru
        _
    $region51: #{bn_relu_groupconv.1} parent=5 // pred_fallthru
      _
  $region6: #{bn_relu_groupconv.1} parent=0 // loop_footer
    %s14 = sadd.s32 1, %s10
  $region7: #{bn_relu_groupconv.1} parent=0 // loop_footer_branch
    %9 = sbr.rel target = $region3
  $region8: #{bn_relu_groupconv.1} parent=0 // loop_exit
    _

</llo_original>
